<compile_context>
chip_gen: v6e
topology: v6e:2x2x1
jax: 0.10.0
libtpu: 0.0.40
codegen_flags: <defaults>
</compile_context>

<pallas_src>
import math

import numpy as np
import jax
import jax.numpy as jnp
from jax import lax
from jax.experimental import pallas as pl
from jax.experimental.pallas import tpu as pltpu

# ----------------------------- configuration -------------------------------
NC = 1            # input channels (nc)
NGF = 8           # feature maps (opt.ngf)
NZ = 16           # latent size (opt.nz)
IMAGE_SIZE = 16   # power of 2, >= 8  (this script is specialized to 16)
BATCH = 2

LEAKY_SLOPE = 0.2
BN_EPS = 1e-5
ENC_COLS = 128    # lane-dense padded width of the [mu | logvar] output slab (2*NZ <= 128)


# -------------------- conv -> dense-matrix packing (host, one-time) ---------------------
def _conv_as_matrix(w_oihw, h_in, w_in, stride, pad):
    """Dense M s.t. NHWC-flat Conv2d(no bias): y[n,(i,j,co)] = x[n,(h,w,c)] @ M."""
    w = np.asarray(w_oihw, dtype=np.float32)
    cout, cin, kh, kw = w.shape
    h_out = (h_in + 2 * pad - kh) // stride + 1
    w_out = (w_in + 2 * pad - kw) // stride + 1
    h = np.arange(h_in)[:, None, None, None, None, None]
    ww = np.arange(w_in)[None, :, None, None, None, None]
    i = np.arange(h_out)[None, None, :, None, None, None]
    j = np.arange(w_out)[None, None, None, :, None, None]
    a = np.arange(kh)[None, None, None, None, :, None]
    b = np.arange(kw)[None, None, None, None, None, :]
    sel = ((h == stride * i + a - pad) & (ww == stride * j + b - pad)).astype(np.float32)
    m = np.einsum("hwijab,ocab->hwcijo", sel, w, optimize=True)
    return m.reshape(h_in * w_in * cin, h_out * w_out * cout), h_out, w_out


def _convT_as_matrix(w_iohw, h_in, w_in, stride, pad):
    """Dense M s.t. NHWC-flat ConvTranspose2d(no bias): y[n,(y,x,co)] = x[n,(h,w,c)] @ M."""
    w = np.asarray(w_iohw, dtype=np.float32)
    cin, cout, kh, kw = w.shape
    h_out = stride * (h_in - 1) + kh - 2 * pad
    w_out = stride * (w_in - 1) + kw - 2 * pad
    h = np.arange(h_in)[:, None, None, None, None, None]
    ww = np.arange(w_in)[None, :, None, None, None, None]
    y = np.arange(h_out)[None, None, :, None, None, None]
    x = np.arange(w_out)[None, None, None, :, None, None]
    a = np.arange(kh)[None, None, None, None, :, None]
    b = np.arange(kw)[None, None, None, None, None, :]
    sel = ((y == stride * h + a - pad) & (x == stride * ww + b - pad)).astype(np.float32)
    m = np.einsum("hwyxab,ioab->hwiyxo", sel, w, optimize=True)
    return m.reshape(h_in * w_in * cin, h_out * w_out * cout), h_out, w_out


# ------------------------------ the fused Pallas kernel ------------------------------
def _make_netg_kernel(n_real):
    """Build the fused kernel, closed over the number of *real* (unpadded) batch rows."""

    def kernel(x_ref, eps_ref, m1_ref, m2_ref, m3_ref,
               md1_ref, md2_hbm, md3_hbm,
               a16_ref, at16_ref, a8_ref, at8_ref, aff_ref,
               img_ref, enc_ref,
               md2_vmem, md3_vmem, dma_sem):
        f32 = jnp.float32
        cdt = m1_ref.dtype          # MXU operand dtype (bf16 in production, f32 for verify)

        # Kick off the two big decoder-weight DMAs before any compute; they are hidden
        # behind the encoder + sampler + first decoder stage.
        cp2 = pltpu.make_async_copy(md2_hbm, md2_vmem, dma_sem.at[0])
        cp3 = pltpu.make_async_copy(md3_hbm, md3_vmem, dma_sem.at[1])
        cp2.start()
        cp3.start()

        def leaky(v):
            return jnp.where(v >= 0, v, LEAKY_SLOPE * v)

        def bn_leaky(h, fold, unfold, gamma, beta):
            # Training-mode BatchNorm2d: biased batch stats over the REAL rows (N_real*H*W),
            # eps=1e-5.  Exactly 2 MXU matmuls: fold the stacked [sum(h); sum(h*h)] (2,HWC)
            # into per-channel stats, and unfold the stacked [scale; shift] (2,C) back to
            # the NHWC-flat layout.  Variance = E[x^2] - mean^2, clamped >= 0.
            hwc, c = fold.shape
            inv = 1.0 / float(n_real * (hwc // c))
            hr = h[:n_real]                                  # exclude padded batch rows
            s = jnp.concatenate([jnp.sum(hr, axis=0, keepdims=True),
                                 jnp.sum(hr * hr, axis=0, keepdims=True)], axis=0)
            stats = jnp.dot(s.astype(cdt), fold, preferred_element_type=f32) * inv
            mean_c = stats[0:1, :]
            var_c = jnp.maximum(stats[1:2, :] - mean_c * mean_c, 0.0)
            scale_c = gamma * lax.rsqrt(var_c + BN_EPS)
            shift_c = beta - mean_c * scale_c
            ss = jnp.concatenate([scale_c, shift_c], axis=0)              # (2, C)
            sb = jnp.dot(ss.astype(cdt), unfold, preferred_element_type=f32)  # (2, HWC)
            return leaky(h * sb[0:1, :] + sb[1:2, :])

        a16, at16 = a16_ref[...], at16_ref[...]
        a8, at8 = a8_ref[...], at8_ref[...]
        c16 = a16.shape[1]
        c8 = a8.shape[1]

        # ---- encoder: conv -> lrelu -> conv -> BN -> lrelu -> [conv1 | conv2] ----------
        h = jnp.dot(x_ref[...], m1_ref[...], preferred_element_type=f32)     # (Np, 8*8*ngf)
        h = leaky(h)
        h = jnp.dot(h.astype(cdt), m2_ref[...], preferred_element_type=f32)  # (Np, 4*4*2ngf)
        h = bn_leaky(h, a16, at16, aff_ref[0:1, 0:c16], aff_ref[1:2, 0:c16])
        enc = (jnp.dot(h.astype(cdt), m3_ref[...], preferred_element_type=f32)
               + aff_ref[2:3, :])                                             # (Np, 128)
        enc_ref[...] = enc                                                    # lane-dense store

        # ---- sampler: z = mu + eps * exp(0.5 * logvar) ----------------------------------
        mu = enc[:, 0:NZ]
        logvar = enc[:, NZ:2 * NZ]
        z = mu + eps_ref[...] * jnp.exp(0.5 * logvar)

        # ---- decoder: convT -> BN -> lrelu, convT -> BN -> lrelu, convT -> tanh ---------
        d = jnp.dot(z.astype(cdt), md1_ref[...], preferred_element_type=f32)  # (Np, 4*4*2ngf)
        d = bn_leaky(d, a16, at16, aff_ref[3:4, 0:c16], aff_ref[4:5, 0:c16])
        cp2.wait()                                                             # md2 now in VMEM
        d = jnp.dot(d.astype(cdt), md2_vmem[...], preferred_element_type=f32)  # (Np, 8*8*ngf)
        d = bn_leaky(d, a8, at8, aff_ref[5:6, 0:c8], aff_ref[6:7, 0:c8])
        cp3.wait()                                                             # md3 now in VMEM
        d = jnp.dot(d.astype(cdt), md3_vmem[...], preferred_element_type=f32)  # (Np, 16*16*nc)
        img_ref[...] = jnp.tanh(d)

    return kernel


# --------------------------- parameter construction / packing ---------------------------
def init_netg_params(key, image_size=IMAGE_SIZE):
    n = math.log2(image_size)
    assert n == round(n), "imageSize must be a power of 2"
    assert n >= 3, "imageSize must be at least 8"
    n = int(n)

    keys = iter(jax.random.split(key, 32))

    def nrm(shape, s=0.05):
        return s * jax.random.normal(next(keys), shape, jnp.float32)

    c_top = NGF * 2 ** (n - 3)
    params = {
        # encoder
        "enc0_w": nrm((NGF, NC, 4, 4)),                       # Conv2d(nc, ngf, 4, 2, 1, bias=False)
        "enc_pyramid": [],
        "conv1_w": nrm((NZ, c_top, 4, 4)), "conv1_b": nrm((NZ,), 0.01),
        "conv2_w": nrm((NZ, c_top, 4, 4)), "conv2_b": nrm((NZ,), 0.01),
        # decoder (ConvTranspose2d weights: (in, out, kh, kw))
        "dec0_w": nrm((NZ, c_top, 4, 4)),                     # ConvTranspose2d(nz, c_top, 4, 1, 0)
        "dec0_gamma": jnp.ones((c_top,), jnp.float32),
        "dec0_beta": jnp.zeros((c_top,), jnp.float32),
        "dec_pyramid": [],
        "dec_out_w": nrm((NGF, NC, 4, 4)),                    # ConvTranspose2d(ngf, nc, 4, 2, 1)
    }
    for i in range(n - 3):
        cin, cout = NGF * 2 ** i, NGF * 2 ** (i + 1)
        params["enc_pyramid"].append({
            "w": nrm((cout, cin, 4, 4)),
            "gamma": jnp.ones((cout,), jnp.float32),
            "beta": jnp.zeros((cout,), jnp.float32)})
    for i in range(n - 3, 0, -1):
        cin, cout = NGF * 2 ** i, NGF * 2 ** (i - 1)
        params["dec_pyramid"].append({
            "w": nrm((cin, cout, 4, 4)),
            "gamma": jnp.ones((cout,), jnp.float32),
            "beta": jnp.zeros((cout,), jnp.float32)})
    return params


def pack_params(params, mxu_dtype=jnp.bfloat16):
    """One-time host-side pre-packing of weights into dense conv matrices + selector/affine slabs.

    `mxu_dtype` is explicit (no device sniffing): bf16 in production on all TPU
    generations (v5e MXU is bf16-native); pass jnp.float32 for an exact verification run.
    """
    assert len(params["enc_pyramid"]) == 1 and len(params["dec_pyramid"]) == 1, \
        "fused kernel is specialized to imageSize=16 (one pyramid stage each way)"
    img = IMAGE_SIZE

    # encoder
    m1, h1, w1 = _conv_as_matrix(params["enc0_w"], img, img, 2, 1)
    est = params["enc_pyramid"][0]
    m2, h2, w2 = _conv_as_matrix(est["w"], h1, w1, 2, 1)
    c2 = est["w"].shape[0]
    m3a, _, _ = _conv_as_matrix(params["conv1_w"], h2, w2, 1, 0)
    m3b, _, _ = _conv_as_matrix(params["conv2_w"], h2, w2, 1, 0)
    nz = params["conv1_w"].shape[0]
    assert 2 * nz <= ENC_COLS
    m3 = np.concatenate([m3a, m3b], axis=1)                  # conv1|conv2 fused -> (256, 2*nz)
    m3 = np.pad(m3, ((0, 0), (0, ENC_COLS - 2 * nz)))        # lane-dense enc output (256, 128)

    # decoder
    md1, hd1, wd1 = _convT_as_matrix(params["dec0_w"], 1, 1, 1, 0)
    dst = params["dec_pyramid"][0]
    md2, hd2, wd2 = _convT_as_matrix(dst["w"], hd1, wd1, 2, 1)
    md3, hd3, wd3 = _convT_as_matrix(params["dec_out_w"], hd2, wd2, 2, 1)
    c_d1 = params["dec0_w"].shape[1]
    c_d2 = dst["w"].shape[1]
    assert (hd3, wd3) == (img, img)
    assert c_d1 == c2 and (hd1, wd1) == (h2, w2)      # decoder stage 1 reuses the 16-ch selector

    # BatchNorm channel fold / broadcast selectors (0/1 constants; exact in bf16)
    a16 = np.tile(np.eye(c2, dtype=np.float32), (h2 * w2, 1))       # (4*4*16, 16)
    a8 = np.tile(np.eye(c_d2, dtype=np.float32), (hd2 * wd2, 1))    # (8*8*8, 8)

    # affine / bias slab (one DMA, stays f32):
    #   rows = [enc_g, enc_b, enc_bias(128-wide), d0_g, d0_b, d1_g, d1_b]
    aff = np.zeros((8, 128), np.float32)
    aff[0, :c2] = np.asarray(est["gamma"])
    aff[1, :c2] = np.asarray(est["beta"])
    aff[2, :2 * nz] = np.concatenate([np.asarray(params["conv1_b"]),
                                      np.asarray(params["conv2_b"])])
    aff[3, :c_d1] = np.asarray(params["dec0_gamma"])
    aff[4, :c_d1] = np.asarray(params["dec0_beta"])
    aff[5, :c_d2] = np.asarray(dst["gamma"])
    aff[6, :c_d2] = np.asarray(dst["beta"])

    cast = lambda m: jnp.asarray(m, dtype=mxu_dtype)
    return {
        "m1": cast(m1), "m2": cast(m2), "m3": cast(m3),
        "md1": cast(md1), "md2": cast(md2), "md3": cast(md3),
        "a16": cast(a16), "at16": cast(a16.T),
        "a8": cast(a8), "at8": cast(a8.T),
        "aff": jnp.asarray(aff, jnp.float32),
    }


# ------------------------------------- forward -------------------------------------
def netg_forward(packed, x_nchw, eps):
    """x: (N, nc, 16, 16) f32, eps: (N, nz) f32 -> (image (N,nc,16,16), [mu, logvar])."""
    n = x_nchw.shape[0]
    cdt = packed["m1"].dtype
    # pad the batch to a full sublane group (16 rows bf16 / 8 rows f32); padded rows are
    # excluded from the BatchNorm statistics inside the kernel and dropped at the end.
    sub = 16 if cdt == jnp.bfloat16 else 8
    n_pad = ((n + sub - 1) // sub) * sub

    # only layout plumbing at the API boundary: NCHW -> NHWC-flat (+ batch pad)
    x_flat = jnp.transpose(x_nchw, (0, 2, 3, 1)).reshape(n, -1).astype(cdt)
    x_flat = jnp.pad(x_flat, ((0, n_pad - n), (0, 0)))
    eps_p = jnp.pad(eps.astype(jnp.float32), ((0, n_pad - n), (0, 0)))

    img_cols = packed["md3"].shape[1]     # 16*16*nc

    vmem = pl.BlockSpec(memory_space=pltpu.MemorySpace.VMEM)
    hbm = pl.BlockSpec(memory_space=pl.ANY)   # md2/md3: copied in manually, overlapped

    img_flat, enc = pl.pallas_call(
        _make_netg_kernel(n),
        out_shape=(jax.ShapeDtypeStruct((n_pad, img_cols), jnp.float32),
                   jax.ShapeDtypeStruct((n_pad, ENC_COLS), jnp.float32)),
        in_specs=[vmem, vmem,                      # x, eps
                  vmem, vmem, vmem,                # m1, m2, m3
                  vmem, hbm, hbm,                  # md1, md2 (HBM), md3 (HBM)
                  vmem, vmem, vmem, vmem, vmem],   # a16, at16, a8, at8, aff
        out_specs=(vmem, vmem),
        scratch_shapes=[pltpu.VMEM(packed["md2"].shape, cdt),
                        pltpu.VMEM(packed["md3"].shape, cdt),
                        pltpu.SemaphoreType.DMA((2,))],
    )(x_flat, eps_p,
      packed["m1"], packed["m2"], packed["m3"],
      packed["md1"], packed["md2"], packed["md3"],
      packed["a16"], packed["at16"], packed["a8"], packed["at8"], packed["aff"])

    mu = enc[:n, 0:NZ].reshape(n, NZ, 1, 1)
    logvar = enc[:n, NZ:2 * NZ].reshape(n, NZ, 1, 1)
    img = img_flat[:n].reshape(n, IMAGE_SIZE, IMAGE_SIZE, NC).transpose(0, 3, 1, 2)
    return img, [mu, logvar]


# ------------------------------ plain-JAX reference (spec) ------------------------------
def netg_reference(params, x, eps):
    dn = ("NCHW", "OIHW", "NCHW")
    hp = lax.Precision.HIGHEST

    def conv(v, w, stride, pad):
        return lax.conv_general_dilated(v, w, (stride, stride), [(pad, pad)] * 2,
                                        dimension_numbers=dn, precision=hp)

    def convT(v, w_iohw, stride, pad):
        k = w_iohw.shape[2]
        w_flip = jnp.flip(w_iohw, (2, 3)).transpose(1, 0, 2, 3)
        return lax.conv_general_dilated(v, w_flip, (1, 1),
                                        [(k - 1 - pad, k - 1 - pad)] * 2,
                                        lhs_dilation=(stride, stride),
                                        dimension_numbers=dn, precision=hp)

    def leaky(v):
        return jnp.where(v >= 0, v, LEAKY_SLOPE * v)

    def bn_leaky(v, gamma, beta):
        mean = jnp.mean(v, axis=(0, 2, 3), keepdims=True)
        var = jnp.mean(jnp.square(v - mean), axis=(0, 2, 3), keepdims=True)
        v = (v - mean) * lax.rsqrt(var + BN_EPS)
        v = v * gamma.reshape(1, -1, 1, 1) + beta.reshape(1, -1, 1, 1)
        return leaky(v)

    h = leaky(conv(x, params["enc0_w"], 2, 1))
    for st in params["enc_pyramid"]:
        h = bn_leaky(conv(h, st["w"], 2, 1), st["gamma"], st["beta"])
    mu = conv(h, params["conv1_w"], 1, 0) + params["conv1_b"].reshape(1, -1, 1, 1)
    logvar = conv(h, params["conv2_w"], 1, 0) + params["conv2_b"].reshape(1, -1, 1, 1)

    z = mu + eps.reshape(mu.shape) * jnp.exp(0.5 * logvar)

    d = bn_leaky(convT(z, params["dec0_w"], 1, 0), params["dec0_gamma"], params["dec0_beta"])
    for st in params["dec_pyramid"]:
        d = bn_leaky(convT(d, st["w"], 2, 1), st["gamma"], st["beta"])
    img = jnp.tanh(convT(d, params["dec_out_w"], 2, 1))
    return img, [mu, logvar]


# ---------------------------------------- main ----------------------------------------
if __name__ == "__main__":
    key = jax.random.PRNGKey(0)
    k_x, k_p, k_e = jax.random.split(key, 3)

    x = jax.random.normal(k_x, (BATCH, NC, IMAGE_SIZE, IMAGE_SIZE), jnp.float32)
    eps = jax.random.normal(k_e, (BATCH, NZ), jnp.float32)   # sampler noise (torch: eps.normal_())

    params = init_netg_params(k_p, IMAGE_SIZE)

    fwd = jax.jit(netg_forward)

    # production path: bf16 MXU operands on every generation (halves weight DMA on v5e,
    # single-pass MXU matmuls); accumulation and all BN/elementwise math stay f32.
    packed_bf16 = pack_params(params, jnp.bfloat16)
    img, (mu, logvar) = jax.block_until_ready(fwd(packed_bf16, x, eps))

    assert img.shape == (BATCH, NC, IMAGE_SIZE, IMAGE_SIZE), img.shape
    assert mu.shape == (BATCH, NZ, 1, 1), mu.shape
    assert logvar.shape == (BATCH, NZ, 1, 1), logvar.shape
    for t in (img, mu, logvar):
        assert bool(jnp.all(jnp.isfinite(t)))

    r_img, (r_mu, r_logvar) = netg_reference(params, x, eps)

    # exact-math verification path (f32 MXU operands): tight bound, catches any
    # layout/indexing regression that loose bf16 tolerances could hide.
    packed_f32 = pack_params(params, jnp.float32)
    v_img, (v_mu, v_logvar) = jax.block_until_ready(fwd(packed_f32, x, eps))
    for got, ref in ((v_img, r_img), (v_mu, r_mu), (v_logvar, r_logvar)):
        assert bool(jnp.allclose(got, ref, atol=5e-2, rtol=5e-2))

    # bf16 production path: looser bound (6 chained bf16 matmuls + 3 BNs compound),
    # still far below the O(1) mismatch a layout/index bug would produce.
    for got, ref in ((img, r_img), (mu, r_mu), (logvar, r_logvar)):
        assert bool(jnp.allclose(got, ref, atol=0.3, rtol=0.3))

    print("KERNEL_OK")
</pallas_src>

<mosaic_0001>
module attributes {stable_mosaic.version = 11 : i64} {
  func.func @kernel(%arg0: memref<16x256xbf16, #tpu.memory_space<vmem>>, %arg1: memref<16x16xf32, #tpu.memory_space<vmem>>, %arg2: memref<256x512xbf16, #tpu.memory_space<vmem>>, %arg3: memref<512x256xbf16, #tpu.memory_space<vmem>>, %arg4: memref<256x128xbf16, #tpu.memory_space<vmem>>, %arg5: memref<16x256xbf16, #tpu.memory_space<vmem>>, %arg6: memref<256x512xbf16, #tpu.memory_space<any>>, %arg7: memref<512x256xbf16, #tpu.memory_space<any>>, %arg8: memref<256x16xbf16, #tpu.memory_space<vmem>>, %arg9: memref<16x256xbf16, #tpu.memory_space<vmem>>, %arg10: memref<512x8xbf16, #tpu.memory_space<vmem>>, %arg11: memref<8x512xbf16, #tpu.memory_space<vmem>>, %arg12: memref<8x128xf32, #tpu.memory_space<vmem>>, %arg13: memref<16x256xf32, #tpu.memory_space<vmem>>, %arg14: memref<16x128xf32, #tpu.memory_space<vmem>>, %arg15: memref<256x512xbf16, #tpu.memory_space<vmem>>, %arg16: memref<512x256xbf16, #tpu.memory_space<vmem>>, %arg17: memref<2x!tpu.dma_semaphore, #tpu.memory_space<semaphore_mem>>) attributes {dimension_semantics = [], scalar_prefetch = 0 : i64, scratch_operands = 3 : i64, tpu.core_type = #tpu.core_type<tc>} {
    %c0_i32 = arith.constant 0 : i32
    %0 = tpu.memref_slice %arg17[%c0_i32] : memref<2x!tpu.dma_semaphore, #tpu.memory_space<semaphore_mem>> -> memref<1x!tpu.dma_semaphore, #tpu.memory_space<semaphore_mem>>
    %1 = tpu.memref_squeeze %0 : memref<1x!tpu.dma_semaphore, #tpu.memory_space<semaphore_mem>> -> memref<!tpu.dma_semaphore, #tpu.memory_space<semaphore_mem>>
    tpu.enqueue_dma source(%arg6 : memref<256x512xbf16, #tpu.memory_space<any>>) target(%arg15 : memref<256x512xbf16, #tpu.memory_space<vmem>>) target_semaphore(%1 : memref<!tpu.dma_semaphore, #tpu.memory_space<semaphore_mem>>)
    %c1_i32 = arith.constant 1 : i32
    %2 = tpu.memref_slice %arg17[%c1_i32] : memref<2x!tpu.dma_semaphore, #tpu.memory_space<semaphore_mem>> -> memref<1x!tpu.dma_semaphore, #tpu.memory_space<semaphore_mem>>
    %3 = tpu.memref_squeeze %2 : memref<1x!tpu.dma_semaphore, #tpu.memory_space<semaphore_mem>> -> memref<!tpu.dma_semaphore, #tpu.memory_space<semaphore_mem>>
    tpu.enqueue_dma source(%arg7 : memref<512x256xbf16, #tpu.memory_space<any>>) target(%arg16 : memref<512x256xbf16, #tpu.memory_space<vmem>>) target_semaphore(%3 : memref<!tpu.dma_semaphore, #tpu.memory_space<semaphore_mem>>)
    %c0 = arith.constant 0 : index
    %c0_0 = arith.constant 0 : index
    %4 = vector.load %arg8[%c0, %c0_0] : memref<256x16xbf16, #tpu.memory_space<vmem>>, vector<256x16xbf16>
    %c0_1 = arith.constant 0 : index
    %c0_2 = arith.constant 0 : index
    %5 = vector.load %arg9[%c0_1, %c0_2] : memref<16x256xbf16, #tpu.memory_space<vmem>>, vector<16x256xbf16>
    %c0_3 = arith.constant 0 : index
    %c0_4 = arith.constant 0 : index
    %6 = vector.load %arg10[%c0_3, %c0_4] : memref<512x8xbf16, #tpu.memory_space<vmem>>, vector<512x8xbf16>
    %c0_5 = arith.constant 0 : index
    %c0_6 = arith.constant 0 : index
    %7 = vector.load %arg11[%c0_5, %c0_6] : memref<8x512xbf16, #tpu.memory_space<vmem>>, vector<8x512xbf16>
    %c0_7 = arith.constant 0 : index
    %c0_8 = arith.constant 0 : index
    %8 = vector.load %arg0[%c0_7, %c0_8] : memref<16x256xbf16, #tpu.memory_space<vmem>>, vector<16x256xbf16>
    %c0_9 = arith.constant 0 : index
    %c0_10 = arith.constant 0 : index
    %9 = vector.load %arg2[%c0_9, %c0_10] : memref<256x512xbf16, #tpu.memory_space<vmem>>, vector<256x512xbf16>
    %cst = arith.constant dense<0.000000e+00> : vector<16x512xf32>
    %10 = tpu.matmul %8, %9, %cst {dimension_numbers = #tpu.dot_dimension_numbers<[1], [0], [0], [1], [0, 0, 1, 1], [], []>} : vector<16x256xbf16>, vector<256x512xbf16>, vector<16x512xf32> -> vector<16x512xf32>
    %cst_11 = arith.constant 0.000000e+00 : f32
    %11 = vector.broadcast %cst_11 : f32 to vector<16x512xf32>
    %12 = arith.cmpf oge, %10, %11 : vector<16x512xf32>
    %cst_12 = arith.constant 2.000000e-01 : f32
    %13 = vector.broadcast %cst_12 : f32 to vector<16x512xf32>
    %14 = arith.mulf %13, %10 : vector<16x512xf32>
    %15 = arith.select %12, %10, %14 : vector<16x512xi1>, vector<16x512xf32>
    %16 = arith.truncf %15 : vector<16x512xf32> to vector<16x512xbf16>
    %c0_13 = arith.constant 0 : index
    %c0_14 = arith.constant 0 : index
    %17 = vector.load %arg3[%c0_13, %c0_14] : memref<512x256xbf16, #tpu.memory_space<vmem>>, vector<512x256xbf16>
    %cst_15 = arith.constant dense<0.000000e+00> : vector<16x256xf32>
    %18 = tpu.matmul %16, %17, %cst_15 {dimension_numbers = #tpu.dot_dimension_numbers<[1], [0], [0], [1], [0, 0, 1, 1], [], []>} : vector<16x512xbf16>, vector<512x256xbf16>, vector<16x256xf32> -> vector<16x256xf32>
    %c0_16 = arith.constant 0 : index
    %c0_17 = arith.constant 0 : index
    %19 = vector.load %arg12[%c0_16, %c0_17] : memref<8x128xf32, #tpu.memory_space<vmem>>, vector<1x16xf32>
    %c1 = arith.constant 1 : index
    %c0_18 = arith.constant 0 : index
    %20 = vector.load %arg12[%c1, %c0_18] : memref<8x128xf32, #tpu.memory_space<vmem>>, vector<1x16xf32>
    %21 = vector.extract_strided_slice %18 {offsets = [0, 0], sizes = [2, 256], strides = [1, 1]} : vector<16x256xf32> to vector<2x256xf32>
    %cst_19 = arith.constant dense<0.000000e+00> : vector<256xf32>
    %22 = vector.multi_reduction <add>, %21, %cst_19 [0] : vector<2x256xf32> to vector<256xf32>
    %23 = vector.shape_cast %22 : vector<256xf32> to vector<1x256xf32>
    %24 = arith.mulf %21, %21 : vector<2x256xf32>
    %cst_20 = arith.constant dense<0.000000e+00> : vector<256xf32>
    %25 = vector.multi_reduction <add>, %24, %cst_20 [0] : vector<2x256xf32> to vector<256xf32>
    %26 = vector.shape_cast %25 : vector<256xf32> to vector<1x256xf32>
    %27 = tpu.concatenate %23, %26 in 0 : vector<1x256xf32>, vector<1x256xf32> -> vector<2x256xf32>
    %28 = arith.truncf %27 : vector<2x256xf32> to vector<2x256xbf16>
    %cst_21 = arith.constant dense<0.000000e+00> : vector<2x16xf32>
    %29 = tpu.matmul %28, %4, %cst_21 {dimension_numbers = #tpu.dot_dimension_numbers<[1], [0], [0], [1], [0, 0, 1, 1], [], []>} : vector<2x256xbf16>, vector<256x16xbf16>, vector<2x16xf32> -> vector<2x16xf32>
    %cst_22 = arith.constant 3.125000e-02 : f32
    %30 = vector.broadcast %cst_22 : f32 to vector<2x16xf32>
    %31 = arith.mulf %29, %30 : vector<2x16xf32>
    %32 = vector.extract_strided_slice %31 {offsets = [0, 0], sizes = [1, 16], strides = [1, 1]} : vector<2x16xf32> to vector<1x16xf32>
    %33 = vector.extract_strided_slice %31 {offsets = [1, 0], sizes = [1, 16], strides = [1, 1]} : vector<2x16xf32> to vector<1x16xf32>
    %34 = arith.mulf %32, %32 : vector<1x16xf32>
    %35 = arith.subf %33, %34 : vector<1x16xf32>
    %cst_23 = arith.constant 0.000000e+00 : f32
    %36 = vector.broadcast %cst_23 : f32 to vector<1x16xf32>
    %37 = arith.maximumf %35, %36 : vector<1x16xf32>
    %cst_24 = arith.constant 9.99999974E-6 : f32
    %38 = vector.broadcast %cst_24 : f32 to vector<1x16xf32>
    %39 = arith.addf %37, %38 : vector<1x16xf32>
    %40 = math.rsqrt %39 : vector<1x16xf32>
    %41 = arith.mulf %19, %40 : vector<1x16xf32>
    %42 = arith.mulf %32, %41 : vector<1x16xf32>
    %43 = arith.subf %20, %42 : vector<1x16xf32>
    %44 = tpu.concatenate %41, %43 in 0 : vector<1x16xf32>, vector<1x16xf32> -> vector<2x16xf32>
    %45 = arith.truncf %44 : vector<2x16xf32> to vector<2x16xbf16>
    %cst_25 = arith.constant dense<0.000000e+00> : vector<2x256xf32>
    %46 = tpu.matmul %45, %5, %cst_25 {dimension_numbers = #tpu.dot_dimension_numbers<[1], [0], [0], [1], [0, 0, 1, 1], [], []>} : vector<2x16xbf16>, vector<16x256xbf16>, vector<2x256xf32> -> vector<2x256xf32>
    %47 = vector.extract_strided_slice %46 {offsets = [0, 0], sizes = [1, 256], strides = [1, 1]} : vector<2x256xf32> to vector<1x256xf32>
    %48 = vector.broadcast %47 : vector<1x256xf32> to vector<16x256xf32>
    %49 = arith.mulf %18, %48 : vector<16x256xf32>
    %50 = vector.extract_strided_slice %46 {offsets = [1, 0], sizes = [1, 256], strides = [1, 1]} : vector<2x256xf32> to vector<1x256xf32>
    %51 = vector.broadcast %50 : vector<1x256xf32> to vector<16x256xf32>
    %52 = arith.addf %49, %51 : vector<16x256xf32>
    %cst_26 = arith.constant 0.000000e+00 : f32
    %53 = vector.broadcast %cst_26 : f32 to vector<16x256xf32>
    %54 = arith.cmpf oge, %52, %53 : vector<16x256xf32>
    %cst_27 = arith.constant 2.000000e-01 : f32
    %55 = vector.broadcast %cst_27 : f32 to vector<16x256xf32>
    %56 = arith.mulf %55, %52 : vector<16x256xf32>
    %57 = arith.select %54, %52, %56 : vector<16x256xi1>, vector<16x256xf32>
    %58 = arith.truncf %57 : vector<16x256xf32> to vector<16x256xbf16>
    %c0_28 = arith.constant 0 : index
    %c0_29 = arith.constant 0 : index
    %59 = vector.load %arg4[%c0_28, %c0_29] : memref<256x128xbf16, #tpu.memory_space<vmem>>, vector<256x128xbf16>
    %cst_30 = arith.constant dense<0.000000e+00> : vector<16x128xf32>
    %60 = tpu.matmul %58, %59, %cst_30 {dimension_numbers = #tpu.dot_dimension_numbers<[1], [0], [0], [1], [0, 0, 1, 1], [], []>} : vector<16x256xbf16>, vector<256x128xbf16>, vector<16x128xf32> -> vector<16x128xf32>
    %c2 = arith.constant 2 : index
    %c0_31 = arith.constant 0 : index
    %61 = vector.load %arg12[%c2, %c0_31] : memref<8x128xf32, #tpu.memory_space<vmem>>, vector<1x128xf32>
    %62 = vector.broadcast %61 : vector<1x128xf32> to vector<16x128xf32>
    %63 = arith.addf %60, %62 : vector<16x128xf32>
    %c0_32 = arith.constant 0 : index
    %c0_33 = arith.constant 0 : index
    %64 = vector.load %arg14[%c0_32, %c0_33] : memref<16x128xf32, #tpu.memory_space<vmem>>, vector<16x128xf32>
    tpu.vector_store %arg14[%c0_32, %c0_33], %63 {strides = array<i32>} : memref<16x128xf32, #tpu.memory_space<vmem>>, vector<16x128xf32>,
    %65 = vector.extract_strided_slice %63 {offsets = [0, 0], sizes = [16, 16], strides = [1, 1]} : vector<16x128xf32> to vector<16x16xf32>
    %66 = vector.extract_strided_slice %63 {offsets = [0, 16], sizes = [16, 16], strides = [1, 1]} : vector<16x128xf32> to vector<16x16xf32>
    %c0_34 = arith.constant 0 : index
    %c0_35 = arith.constant 0 : index
    %67 = vector.load %arg1[%c0_34, %c0_35] : memref<16x16xf32, #tpu.memory_space<vmem>>, vector<16x16xf32>
    %cst_36 = arith.constant 5.000000e-01 : f32
    %68 = vector.broadcast %cst_36 : f32 to vector<16x16xf32>
    %69 = arith.mulf %68, %66 : vector<16x16xf32>
    %70 = math.exp %69 : vector<16x16xf32>
    %71 = arith.mulf %67, %70 : vector<16x16xf32>
    %72 = arith.addf %65, %71 : vector<16x16xf32>
    %73 = arith.truncf %72 : vector<16x16xf32> to vector<16x16xbf16>
    %c0_37 = arith.constant 0 : index
    %c0_38 = arith.constant 0 : index
    %74 = vector.load %arg5[%c0_37, %c0_38] : memref<16x256xbf16, #tpu.memory_space<vmem>>, vector<16x256xbf16>
    %cst_39 = arith.constant dense<0.000000e+00> : vector<16x256xf32>
    %75 = tpu.matmul %73, %74, %cst_39 {dimension_numbers = #tpu.dot_dimension_numbers<[1], [0], [0], [1], [0, 0, 1, 1], [], []>} : vector<16x16xbf16>, vector<16x256xbf16>, vector<16x256xf32> -> vector<16x256xf32>
    %c3 = arith.constant 3 : index
    %c0_40 = arith.constant 0 : index
    %76 = vector.load %arg12[%c3, %c0_40] : memref<8x128xf32, #tpu.memory_space<vmem>>, vector<1x16xf32>
    %c4 = arith.constant 4 : index
    %c0_41 = arith.constant 0 : index
    %77 = vector.load %arg12[%c4, %c0_41] : memref<8x128xf32, #tpu.memory_space<vmem>>, vector<1x16xf32>
    %78 = vector.extract_strided_slice %75 {offsets = [0, 0], sizes = [2, 256], strides = [1, 1]} : vector<16x256xf32> to vector<2x256xf32>
    %cst_42 = arith.constant dense<0.000000e+00> : vector<256xf32>
    %79 = vector.multi_reduction <add>, %78, %cst_42 [0] : vector<2x256xf32> to vector<256xf32>
    %80 = vector.shape_cast %79 : vector<256xf32> to vector<1x256xf32>
    %81 = arith.mulf %78, %78 : vector<2x256xf32>
    %cst_43 = arith.constant dense<0.000000e+00> : vector<256xf32>
    %82 = vector.multi_reduction <add>, %81, %cst_43 [0] : vector<2x256xf32> to vector<256xf32>
    %83 = vector.shape_cast %82 : vector<256xf32> to vector<1x256xf32>
    %84 = tpu.concatenate %80, %83 in 0 : vector<1x256xf32>, vector<1x256xf32> -> vector<2x256xf32>
    %85 = arith.truncf %84 : vector<2x256xf32> to vector<2x256xbf16>
    %cst_44 = arith.constant dense<0.000000e+00> : vector<2x16xf32>
    %86 = tpu.matmul %85, %4, %cst_44 {dimension_numbers = #tpu.dot_dimension_numbers<[1], [0], [0], [1], [0, 0, 1, 1], [], []>} : vector<2x256xbf16>, vector<256x16xbf16>, vector<2x16xf32> -> vector<2x16xf32>
    %cst_45 = arith.constant 3.125000e-02 : f32
    %87 = vector.broadcast %cst_45 : f32 to vector<2x16xf32>
    %88 = arith.mulf %86, %87 : vector<2x16xf32>
    %89 = vector.extract_strided_slice %88 {offsets = [0, 0], sizes = [1, 16], strides = [1, 1]} : vector<2x16xf32> to vector<1x16xf32>
    %90 = vector.extract_strided_slice %88 {offsets = [1, 0], sizes = [1, 16], strides = [1, 1]} : vector<2x16xf32> to vector<1x16xf32>
    %91 = arith.mulf %89, %89 : vector<1x16xf32>
    %92 = arith.subf %90, %91 : vector<1x16xf32>
    %cst_46 = arith.constant 0.000000e+00 : f32
    %93 = vector.broadcast %cst_46 : f32 to vector<1x16xf32>
    %94 = arith.maximumf %92, %93 : vector<1x16xf32>
    %cst_47 = arith.constant 9.99999974E-6 : f32
    %95 = vector.broadcast %cst_47 : f32 to vector<1x16xf32>
    %96 = arith.addf %94, %95 : vector<1x16xf32>
    %97 = math.rsqrt %96 : vector<1x16xf32>
    %98 = arith.mulf %76, %97 : vector<1x16xf32>
    %99 = arith.mulf %89, %98 : vector<1x16xf32>
    %100 = arith.subf %77, %99 : vector<1x16xf32>
    %101 = tpu.concatenate %98, %100 in 0 : vector<1x16xf32>, vector<1x16xf32> -> vector<2x16xf32>
    %102 = arith.truncf %101 : vector<2x16xf32> to vector<2x16xbf16>
    %cst_48 = arith.constant dense<0.000000e+00> : vector<2x256xf32>
    %103 = tpu.matmul %102, %5, %cst_48 {dimension_numbers = #tpu.dot_dimension_numbers<[1], [0], [0], [1], [0, 0, 1, 1], [], []>} : vector<2x16xbf16>, vector<16x256xbf16>, vector<2x256xf32> -> vector<2x256xf32>
    %104 = vector.extract_strided_slice %103 {offsets = [0, 0], sizes = [1, 256], strides = [1, 1]} : vector<2x256xf32> to vector<1x256xf32>
    %105 = vector.broadcast %104 : vector<1x256xf32> to vector<16x256xf32>
    %106 = arith.mulf %75, %105 : vector<16x256xf32>
    %107 = vector.extract_strided_slice %103 {offsets = [1, 0], sizes = [1, 256], strides = [1, 1]} : vector<2x256xf32> to vector<1x256xf32>
    %108 = vector.broadcast %107 : vector<1x256xf32> to vector<16x256xf32>
    %109 = arith.addf %106, %108 : vector<16x256xf32>
    %cst_49 = arith.constant 0.000000e+00 : f32
    %110 = vector.broadcast %cst_49 : f32 to vector<16x256xf32>
    %111 = arith.cmpf oge, %109, %110 : vector<16x256xf32>
    %cst_50 = arith.constant 2.000000e-01 : f32
    %112 = vector.broadcast %cst_50 : f32 to vector<16x256xf32>
    %113 = arith.mulf %112, %109 : vector<16x256xf32>
    %114 = arith.select %111, %109, %113 : vector<16x256xi1>, vector<16x256xf32>
    %c0_i32_51 = arith.constant 0 : i32
    %115 = tpu.memref_slice %arg17[%c0_i32_51] : memref<2x!tpu.dma_semaphore, #tpu.memory_space<semaphore_mem>> -> memref<1x!tpu.dma_semaphore, #tpu.memory_space<semaphore_mem>>
    %116 = tpu.memref_squeeze %115 : memref<1x!tpu.dma_semaphore, #tpu.memory_space<semaphore_mem>> -> memref<!tpu.dma_semaphore, #tpu.memory_space<semaphore_mem>>
    tpu.wait_dma2 semaphore(%116 : memref<!tpu.dma_semaphore, #tpu.memory_space<semaphore_mem>>) src(%arg6 : memref<256x512xbf16, #tpu.memory_space<any>>) dst(%arg15 : memref<256x512xbf16, #tpu.memory_space<vmem>>)
    %117 = arith.truncf %114 : vector<16x256xf32> to vector<16x256xbf16>
    %c0_52 = arith.constant 0 : index
    %c0_53 = arith.constant 0 : index
    %118 = vector.load %arg15[%c0_52, %c0_53] : memref<256x512xbf16, #tpu.memory_space<vmem>>, vector<256x512xbf16>
    %cst_54 = arith.constant dense<0.000000e+00> : vector<16x512xf32>
    %119 = tpu.matmul %117, %118, %cst_54 {dimension_numbers = #tpu.dot_dimension_numbers<[1], [0], [0], [1], [0, 0, 1, 1], [], []>} : vector<16x256xbf16>, vector<256x512xbf16>, vector<16x512xf32> -> vector<16x512xf32>
    %c5 = arith.constant 5 : index
    %c0_55 = arith.constant 0 : index
    %120 = vector.load %arg12[%c5, %c0_55] : memref<8x128xf32, #tpu.memory_space<vmem>>, vector<1x8xf32>
    %c6 = arith.constant 6 : index
    %c0_56 = arith.constant 0 : index
    %121 = vector.load %arg12[%c6, %c0_56] : memref<8x128xf32, #tpu.memory_space<vmem>>, vector<1x8xf32>
    %122 = vector.extract_strided_slice %119 {offsets = [0, 0], sizes = [2, 512], strides = [1, 1]} : vector<16x512xf32> to vector<2x512xf32>
    %cst_57 = arith.constant dense<0.000000e+00> : vector<512xf32>
    %123 = vector.multi_reduction <add>, %122, %cst_57 [0] : vector<2x512xf32> to vector<512xf32>
    %124 = vector.shape_cast %123 : vector<512xf32> to vector<1x512xf32>
    %125 = arith.mulf %122, %122 : vector<2x512xf32>
    %cst_58 = arith.constant dense<0.000000e+00> : vector<512xf32>
    %126 = vector.multi_reduction <add>, %125, %cst_58 [0] : vector<2x512xf32> to vector<512xf32>
    %127 = vector.shape_cast %126 : vector<512xf32> to vector<1x512xf32>
    %128 = tpu.concatenate %124, %127 in 0 : vector<1x512xf32>, vector<1x512xf32> -> vector<2x512xf32>
    %129 = arith.truncf %128 : vector<2x512xf32> to vector<2x512xbf16>
    %cst_59 = arith.constant dense<0.000000e+00> : vector<2x8xf32>
    %130 = tpu.matmul %129, %6, %cst_59 {dimension_numbers = #tpu.dot_dimension_numbers<[1], [0], [0], [1], [0, 0, 1, 1], [], []>} : vector<2x512xbf16>, vector<512x8xbf16>, vector<2x8xf32> -> vector<2x8xf32>
    %cst_60 = arith.constant 7.812500e-03 : f32
    %131 = vector.broadcast %cst_60 : f32 to vector<2x8xf32>
    %132 = arith.mulf %130, %131 : vector<2x8xf32>
    %133 = vector.extract_strided_slice %132 {offsets = [0, 0], sizes = [1, 8], strides = [1, 1]} : vector<2x8xf32> to vector<1x8xf32>
    %134 = vector.extract_strided_slice %132 {offsets = [1, 0], sizes = [1, 8], strides = [1, 1]} : vector<2x8xf32> to vector<1x8xf32>
    %135 = arith.mulf %133, %133 : vector<1x8xf32>
    %136 = arith.subf %134, %135 : vector<1x8xf32>
    %cst_61 = arith.constant 0.000000e+00 : f32
    %137 = vector.broadcast %cst_61 : f32 to vector<1x8xf32>
    %138 = arith.maximumf %136, %137 : vector<1x8xf32>
    %cst_62 = arith.constant 9.99999974E-6 : f32
    %139 = vector.broadcast %cst_62 : f32 to vector<1x8xf32>
    %140 = arith.addf %138, %139 : vector<1x8xf32>
    %141 = math.rsqrt %140 : vector<1x8xf32>
    %142 = arith.mulf %120, %141 : vector<1x8xf32>
    %143 = arith.mulf %133, %142 : vector<1x8xf32>
    %144 = arith.subf %121, %143 : vector<1x8xf32>
    %145 = tpu.concatenate %142, %144 in 0 : vector<1x8xf32>, vector<1x8xf32> -> vector<2x8xf32>
    %146 = arith.truncf %145 : vector<2x8xf32> to vector<2x8xbf16>
    %cst_63 = arith.constant dense<0.000000e+00> : vector<2x512xf32>
    %147 = tpu.matmul %146, %7, %cst_63 {dimension_numbers = #tpu.dot_dimension_numbers<[1], [0], [0], [1], [0, 0, 1, 1], [], []>} : vector<2x8xbf16>, vector<8x512xbf16>, vector<2x512xf32> -> vector<2x512xf32>
    %148 = vector.extract_strided_slice %147 {offsets = [0, 0], sizes = [1, 512], strides = [1, 1]} : vector<2x512xf32> to vector<1x512xf32>
    %149 = vector.broadcast %148 : vector<1x512xf32> to vector<16x512xf32>
    %150 = arith.mulf %119, %149 : vector<16x512xf32>
    %151 = vector.extract_strided_slice %147 {offsets = [1, 0], sizes = [1, 512], strides = [1, 1]} : vector<2x512xf32> to vector<1x512xf32>
    %152 = vector.broadcast %151 : vector<1x512xf32> to vector<16x512xf32>
    %153 = arith.addf %150, %152 : vector<16x512xf32>
    %cst_64 = arith.constant 0.000000e+00 : f32
    %154 = vector.broadcast %cst_64 : f32 to vector<16x512xf32>
    %155 = arith.cmpf oge, %153, %154 : vector<16x512xf32>
    %cst_65 = arith.constant 2.000000e-01 : f32
    %156 = vector.broadcast %cst_65 : f32 to vector<16x512xf32>
    %157 = arith.mulf %156, %153 : vector<16x512xf32>
    %158 = arith.select %155, %153, %157 : vector<16x512xi1>, vector<16x512xf32>
    %c1_i32_66 = arith.constant 1 : i32
    %159 = tpu.memref_slice %arg17[%c1_i32_66] : memref<2x!tpu.dma_semaphore, #tpu.memory_space<semaphore_mem>> -> memref<1x!tpu.dma_semaphore, #tpu.memory_space<semaphore_mem>>
    %160 = tpu.memref_squeeze %159 : memref<1x!tpu.dma_semaphore, #tpu.memory_space<semaphore_mem>> -> memref<!tpu.dma_semaphore, #tpu.memory_space<semaphore_mem>>
    tpu.wait_dma2 semaphore(%160 : memref<!tpu.dma_semaphore, #tpu.memory_space<semaphore_mem>>) src(%arg7 : memref<512x256xbf16, #tpu.memory_space<any>>) dst(%arg16 : memref<512x256xbf16, #tpu.memory_space<vmem>>)
    %161 = arith.truncf %158 : vector<16x512xf32> to vector<16x512xbf16>
    %c0_67 = arith.constant 0 : index
    %c0_68 = arith.constant 0 : index
    %162 = vector.load %arg16[%c0_67, %c0_68] : memref<512x256xbf16, #tpu.memory_space<vmem>>, vector<512x256xbf16>
    %cst_69 = arith.constant dense<0.000000e+00> : vector<16x256xf32>
    %163 = tpu.matmul %161, %162, %cst_69 {dimension_numbers = #tpu.dot_dimension_numbers<[1], [0], [0], [1], [0, 0, 1, 1], [], []>} : vector<16x512xbf16>, vector<512x256xbf16>, vector<16x256xf32> -> vector<16x256xf32>
    %164 = math.tanh %163 : vector<16x256xf32>
    %c0_70 = arith.constant 0 : index
    %c0_71 = arith.constant 0 : index
    %165 = vector.load %arg13[%c0_70, %c0_71] : memref<16x256xf32, #tpu.memory_space<vmem>>, vector<16x256xf32>
    tpu.vector_store %arg13[%c0_70, %c0_71], %164 {strides = array<i32>} : memref<16x256xf32, #tpu.memory_space<vmem>>, vector<16x256xf32>,
    return
  }
}

</mosaic_0001>

<llo_original>
// kernel: netg_forward.1
$region0: #{netg_forward.1}
  #allocation0 [shape = 'u32[]', space=smem, size = 0x4, offset = 0x4, fixed_abs, tag = 'smem constant byte address 0x4 - core index']
  #allocation1 [shape = 'u32[144,128]{1,0:T(1,128)}', space=vmem, size = 0x12000, scoped, tag = 'internal scratch']
  #allocation2 [shape = 'bf16[256,512]{1,0:T(8,128)(2,1)}', space=vmem, size = 0x40000, scoped, tag = 'scratch operand']
  #allocation3 [shape = 'bf16[512,256]{1,0:T(8,128)(2,1)}', space=vmem, size = 0x40000, scoped, tag = 'scratch operand']
  #allocation4 [shape = 's32[2]{0}', space=sflag, size = 0x8, scoped, tag = 'scratch operand']
  #allocation13 [shape = 's32[]', space=sflag, size = 0x4, offset = 0, fixed_abs, tag = 'sflag constant byte address 0x0 - dummy sync flag']
  #allocation14 [shape = 's32[]', space=sflag, size = 0x4, offset = 0, fixed_abs, tag = 'sflag constant byte address 0x0 - dummy sync flag']
  #allocation15 [shape = 'u32[]', space=smem, size = 0x4, offset = 0x44, fixed_abs, tag = 'smem constant byte address 0x44 - assertion arg 0']
  #allocation16 [shape = 'u32[]', space=smem, size = 0x4, offset = 0x48, fixed_abs, tag = 'smem constant byte address 0x48 - assertion arg 1']
  #allocation17 [shape = 's32[]', space=sflag, size = 0x4, offset = 0, fixed_abs, tag = 'sflag constant byte address 0x0 - dummy sync flag']
  #allocation18 [shape = 's32[]', space=sflag, size = 0x4, offset = 0, fixed_abs, tag = 'sflag constant byte address 0x0 - dummy sync flag']
  %s0 = inlined_call_operand.vmem [shape: bf16[16,256], index: 0, kind: input, shape index: {}]
  %s1 = inlined_call_operand.vmem [shape: f32[16,16], index: 1, kind: input, shape index: {}]
  %s2 = inlined_call_operand.vmem [shape: bf16[256,512], index: 2, kind: input, shape index: {}]
  %s3 = inlined_call_operand.hbm [shape: bf16[512,256], index: 3, kind: input, shape index: {}]
  %s4 = inlined_call_operand.hbm [shape: bf16[256,128], index: 4, kind: input, shape index: {}]
  %s5 = inlined_call_operand.vmem [shape: bf16[16,256], index: 5, kind: input, shape index: {}]
  %s6 = inlined_call_operand.hbm [shape: bf16[256,512], index: 6, kind: input, shape index: {}]
  %s7 = inlined_call_operand.hbm [shape: bf16[512,256], index: 7, kind: input, shape index: {}]
  %s8 = inlined_call_operand.vmem [shape: bf16[256,16], index: 8, kind: input, shape index: {}]
  %s9 = inlined_call_operand.hbm [shape: bf16[16,256], index: 9, kind: input, shape index: {}]
  %s10 = inlined_call_operand.vmem [shape: bf16[512,8], index: 10, kind: input, shape index: {}]
  %s11 = inlined_call_operand.hbm [shape: bf16[8,512], index: 11, kind: input, shape index: {}]
  %s12 = inlined_call_operand.hbm [shape: f32[8,128], index: 12, kind: input, shape index: {}]
  %s13 = inlined_call_operand.vmem [shape: f32[16,256], index: 13, kind: output, shape index: {0}]
  %s14 = inlined_call_operand.vmem [shape: f32[16,128], index: 14, kind: output, shape index: {1}]
  %15 = xla_tuple %s13, %s14
  %s16 = sld [smem:[#allocation0]]
  $region90: #{netg_forward.1} parent=0
    _
  %s18 = ssub.s32 1, %s16
  %s19 = scalar_select 0, %s18, %s16
  $region1: #{netg_forward.1} parent=0
    #allocation5 [shape = 'u8[262144]{0}', space=vmem, size = 0x40000, scoped, tag = 'input window, operand 3, single buffered']
    #allocation6 [shape = 's32[1]{0}', space=sflag, size = 0x4, scoped, tag = 'scoped memory for netg_forward.1']
    #allocation7 [shape = 'u8[65536]{0}', space=vmem, size = 0x10000, scoped, tag = 'input window, operand 4, single buffered']
    #allocation8 [shape = 's32[1]{0}', space=sflag, size = 0x4, scoped, tag = 'scoped memory for netg_forward.1']
    #allocation9 [shape = 'u8[8192]{0}', space=vmem, size = 0x2000, scoped, tag = 'input window, operand 9, single buffered']
    #allocation10 [shape = 'u8[8192]{0}', space=vmem, size = 0x2000, scoped, tag = 'input window, operand 11, single buffered']
    #allocation11 [shape = 's32[1]{0}', space=sflag, size = 0x4, scoped, tag = 'scoped memory for netg_forward.1']
    #allocation12 [shape = 'u8[4096]{0}', space=vmem, size = 0x1000, scoped, tag = 'input window, operand 12, single buffered']
    %20 = vsyncpa [#allocation6], 0
    %21 = vsyncpa [#allocation8], 0
    %22 = vsyncpa [#allocation11], 0
    // Predicated region
    $region2: #{netg_forward.1} parent=1 // pred_check
      _
    $region3: #{netg_forward.1} parent=1 // pred_check_branch
      %24 = sbr.rel (0) target = $region5
    $region4: #{netg_forward.1} parent=1 // pred_region
      _
    $region5: #{netg_forward.1} parent=1 // pred_fallthru
      _
    // Predicated region
    $region6: #{netg_forward.1} parent=1 // pred_check
      _
    $region7: #{netg_forward.1} parent=1 // pred_check_branch
      %26 = sbr.rel (0) target = $region9
    $region8: #{netg_forward.1} parent=1 // pred_region
      _
    $region9: #{netg_forward.1} parent=1 // pred_fallthru
      _
    // Predicated region
    $region10: #{netg_forward.1} parent=1 // pred_check
      _
    $region11: #{netg_forward.1} parent=1 // pred_check_branch
      %28 = sbr.rel (0) target = $region13
    $region12: #{netg_forward.1} parent=1 // pred_region
      _
    $region13: #{netg_forward.1} parent=1 // pred_fallthru
      _
    // Predicated region
    $region14: #{netg_forward.1} parent=1 // pred_check
      _
    $region15: #{netg_forward.1} parent=1 // pred_check_branch
      %30 = sbr.rel (0) target = $region17
    $region16: #{netg_forward.1} parent=1 // pred_region
      %s32 = ssub.s32 8192, 8192
      %33 = vsyncadd [#allocation6], %s32
      %s34 = sshll.u32 [#allocation5], 4
      %s35 = int_to_ptr.vmem [resolvable:$true] %s34
      %40 = dma.hbm_to_vmem [thread:$0]  %s3, 8192, %s35, [#allocation6], 128, 128, 8
    $region17: #{netg_forward.1} parent=1 // pred_fallthru
      _
    // Predicated region
    $region18: #{netg_forward.1} parent=1 // pred_check
      _
    $region19: #{netg_forward.1} parent=1 // pred_check_branch
      %42 = sbr.rel (0) target = $region21
    $region20: #{netg_forward.1} parent=1 // pred_region
      %s44 = ssub.s32 2048, 2048
      %45 = vsyncadd [#allocation8], %s44
      %s46 = sshll.u32 [#allocation7], 4
      %s47 = int_to_ptr.vmem [resolvable:$true] %s46
      %52 = dma.hbm_to_vmem [thread:$0]  %s4, 2048, %s47, [#allocation8], 64, 64, 4
    $region21: #{netg_forward.1} parent=1 // pred_fallthru
      _
    // Predicated region
    $region22: #{netg_forward.1} parent=1 // pred_check
      _
    $region23: #{netg_forward.1} parent=1 // pred_check_branch
      %54 = sbr.rel (0) target = $region25
    $region24: #{netg_forward.1} parent=1 // pred_region
      _
    $region25: #{netg_forward.1} parent=1 // pred_fallthru
      _
    // Predicated region
    $region26: #{netg_forward.1} parent=1 // pred_check
      _
    $region27: #{netg_forward.1} parent=1 // pred_check_branch
      %56 = sbr.rel (0) target = $region29
    $region28: #{netg_forward.1} parent=1 // pred_region
      _
    $region29: #{netg_forward.1} parent=1 // pred_fallthru
      _
    // Predicated region
    $region30: #{netg_forward.1} parent=1 // pred_check
      _
    $region31: #{netg_forward.1} parent=1 // pred_check_branch
      %58 = sbr.rel (0) target = $region33
    $region32: #{netg_forward.1} parent=1 // pred_region
      %s60 = ssub.s32 256, 256
      %61 = vsyncadd [#allocation8], %s60
      %s62 = sshll.u32 [#allocation9], 4
      %s63 = int_to_ptr.vmem [resolvable:$true] %s62
      %68 = dma.hbm_to_vmem [thread:$0]  %s9, 256, %s63, [#allocation8], 128, 128, 8
    $region33: #{netg_forward.1} parent=1 // pred_fallthru
      _
    // Predicated region
    $region34: #{netg_forward.1} parent=1 // pred_check
      _
    $region35: #{netg_forward.1} parent=1 // pred_check_branch
      %70 = sbr.rel (0) target = $region37
    $region36: #{netg_forward.1} parent=1 // pred_region
      _
    $region37: #{netg_forward.1} parent=1 // pred_fallthru
      _
    // Predicated region
    $region38: #{netg_forward.1} parent=1 // pred_check
      _
    $region39: #{netg_forward.1} parent=1 // pred_check_branch
      %72 = sbr.rel (0) target = $region41
    $region40: #{netg_forward.1} parent=1 // pred_region
      %s74 = ssub.s32 256, 256
      %75 = vsyncadd [#allocation11], %s74
      %s77 = sshll.u32 [#allocation10], 4
      %s78 = int_to_ptr.vmem [resolvable:$true] %s77
      %80 = dma.hbm_to_vmem [thread:$0]  %s11, 256, %s78, [#allocation11]
    $region41: #{netg_forward.1} parent=1 // pred_fallthru
      _
    // Predicated region
    $region42: #{netg_forward.1} parent=1 // pred_check
      _
    $region43: #{netg_forward.1} parent=1 // pred_check_branch
      %82 = sbr.rel (0) target = $region45
    $region44: #{netg_forward.1} parent=1 // pred_region
      %s84 = ssub.s32 128, 128
      %85 = vsyncadd [#allocation11], %s84
      %s87 = sshll.u32 [#allocation12], 4
      %s88 = int_to_ptr.vmem [resolvable:$true] %s87
      %90 = dma.hbm_to_vmem [thread:$0]  %s12, 128, %s88, [#allocation11]
    $region45: #{netg_forward.1} parent=1 // pred_fallthru
      _
    // Predicated region
    $region46: #{netg_forward.1} parent=1 // pred_check
      _
    $region47: #{netg_forward.1} parent=1 // pred_check_branch
      %92 = sbr.rel (0) target = $region49
    $region48: #{netg_forward.1} parent=1 // pred_region
      %93 = dma.done [#allocation6], 8192
    $region49: #{netg_forward.1} parent=1 // pred_fallthru
      _
    // Predicated region
    $region50: #{netg_forward.1} parent=1 // pred_check
      _
    $region51: #{netg_forward.1} parent=1 // pred_check_branch
      %95 = sbr.rel (0) target = $region53
    $region52: #{netg_forward.1} parent=1 // pred_region
      %96 = dma.done [#allocation8], 2048
    $region53: #{netg_forward.1} parent=1 // pred_fallthru
      _
    // Predicated region
    $region54: #{netg_forward.1} parent=1 // pred_check
      _
    $region55: #{netg_forward.1} parent=1 // pred_check_branch
      %98 = sbr.rel (0) target = $region57
    $region56: #{netg_forward.1} parent=1 // pred_region
      %99 = dma.done [#allocation8], 256
    $region57: #{netg_forward.1} parent=1 // pred_fallthru
      _
    // Predicated region
    $region58: #{netg_forward.1} parent=1 // pred_check
      _
    $region59: #{netg_forward.1} parent=1 // pred_check_branch
      %101 = sbr.rel (0) target = $region61
    $region60: #{netg_forward.1} parent=1 // pred_region
      %102 = dma.done [#allocation11], 256
    $region61: #{netg_forward.1} parent=1 // pred_fallthru
      _
    // Predicated region
    $region62: #{netg_forward.1} parent=1 // pred_check
      _
    $region63: #{netg_forward.1} parent=1 // pred_check_branch
      %104 = sbr.rel (0) target = $region65
    $region64: #{netg_forward.1} parent=1 // pred_region
      %105 = dma.done [#allocation11], 128
    $region65: #{netg_forward.1} parent=1 // pred_fallthru
      _
    // Predicated region
    $region66: #{netg_forward.1} parent=1 // pred_check
      _
    $region67: #{netg_forward.1} parent=1 // pred_check_branch
      %108 = sbr.rel target = $region69
    $region68: #{netg_forward.1} parent=1 // pred_region
      %109 = sst [smem:[#allocation15]] [#allocation14]
      %110 = sst [smem:[#allocation16]] [#allocation13]
    $region69: #{netg_forward.1} parent=1 // pred_fallthru
      _
    %112 = shalt.err (0)
    %s114 = sshll.u32 [#allocation2], 4
    %s115 = int_to_ptr.vmem [resolvable:$true] %s114
    %117 = dma.hbm_to_vmem [thread:$0]  %s6, 8192, %s115, [#allocation4]
    %s118 = scalar_lea.sflag [#allocation4], 1
    // Predicated region
    $region70: #{netg_forward.1} parent=1 // pred_check
      _
    $region71: #{netg_forward.1} parent=1 // pred_check_branch
      %120 = sbr.rel target = $region73
    $region72: #{netg_forward.1} parent=1 // pred_region
      %121 = sst [smem:[#allocation15]] [#allocation18]
      %122 = sst [smem:[#allocation16]] [#allocation17]
    $region73: #{netg_forward.1} parent=1 // pred_fallthru
      _
    %124 = shalt.err (0)
    %s126 = sshll.u32 [#allocation3], 4
    %s127 = int_to_ptr.vmem [resolvable:$true] %s126
    %129 = dma.hbm_to_vmem [thread:$0]  %s7, 8192, %s127, %s118
    %v130 = vld [vmem:[%s8] sm:$0xf]
    %v131 = vld [vmem:[%s8 + $0x4] sm:$0xf]
    %v132 = vld [vmem:[%s8 + $0x8] sm:$0xf]
    %v133 = vld [vmem:[%s8 + $0xc] sm:$0xf]
    %v134 = vld [vmem:[%s8 + $0x10] sm:$0xf]
    %v135 = vld [vmem:[%s8 + $0x14] sm:$0xf]
    %v136 = vld [vmem:[%s8 + $0x18] sm:$0xf]
    %v137 = vld [vmem:[%s8 + $0x1c] sm:$0xf]
    %v138 = vld [vmem:[%s8 + $0x20] sm:$0xf]
    %v139 = vld [vmem:[%s8 + $0x24] sm:$0xf]
    %v140 = vld [vmem:[%s8 + $0x28] sm:$0xf]
    %v141 = vld [vmem:[%s8 + $0x2c] sm:$0xf]
    %v142 = vld [vmem:[%s8 + $0x30] sm:$0xf]
    %v143 = vld [vmem:[%s8 + $0x34] sm:$0xf]
    %v144 = vld [vmem:[%s8 + $0x38] sm:$0xf]
    %v145 = vld [vmem:[%s8 + $0x3c] sm:$0xf]
    %v146 = vld [vmem:[%s8 + $0x40] sm:$0xf]
    %v147 = vld [vmem:[%s8 + $0x44] sm:$0xf]
    %v148 = vld [vmem:[%s8 + $0x48] sm:$0xf]
    %v149 = vld [vmem:[%s8 + $0x4c] sm:$0xf]
    %v150 = vld [vmem:[%s8 + $0x50] sm:$0xf]
    %v151 = vld [vmem:[%s8 + $0x54] sm:$0xf]
    %v152 = vld [vmem:[%s8 + $0x58] sm:$0xf]
    %v153 = vld [vmem:[%s8 + $0x5c] sm:$0xf]
    %v154 = vld [vmem:[%s8 + $0x60] sm:$0xf]
    %v155 = vld [vmem:[%s8 + $0x64] sm:$0xf]
    %v156 = vld [vmem:[%s8 + $0x68] sm:$0xf]
    %v157 = vld [vmem:[%s8 + $0x6c] sm:$0xf]
    %v158 = vld [vmem:[%s8 + $0x70] sm:$0xf]
    %v159 = vld [vmem:[%s8 + $0x74] sm:$0xf]
    %v160 = vld [vmem:[%s8 + $0x78] sm:$0xf]
    %v161 = vld [vmem:[%s8 + $0x7c] sm:$0xf]
    %v162 = vld [vmem:[#allocation9] sm:$0xff]
    %v163 = vld [vmem:[#allocation9 + $0x8] sm:$0xff]
    %v164 = vld [vmem:[%s10] sm:$0xf]
    %v165 = vld [vmem:[%s10 + $0x4] sm:$0xf]
    %v166 = vld [vmem:[%s10 + $0x8] sm:$0xf]
    %v167 = vld [vmem:[%s10 + $0xc] sm:$0xf]
    %v168 = vld [vmem:[%s10 + $0x10] sm:$0xf]
    %v169 = vld [vmem:[%s10 + $0x14] sm:$0xf]
    %v170 = vld [vmem:[%s10 + $0x18] sm:$0xf]
    %v171 = vld [vmem:[%s10 + $0x1c] sm:$0xf]
    %v172 = vld [vmem:[%s10 + $0x20] sm:$0xf]
    %v173 = vld [vmem:[%s10 + $0x24] sm:$0xf]
    %v174 = vld [vmem:[%s10 + $0x28] sm:$0xf]
    %v175 = vld [vmem:[%s10 + $0x2c] sm:$0xf]
    %v176 = vld [vmem:[%s10 + $0x30] sm:$0xf]
    %v177 = vld [vmem:[%s10 + $0x34] sm:$0xf]
    %v178 = vld [vmem:[%s10 + $0x38] sm:$0xf]
    %v179 = vld [vmem:[%s10 + $0x3c] sm:$0xf]
    %v180 = vld [vmem:[%s10 + $0x40] sm:$0xf]
    %v181 = vld [vmem:[%s10 + $0x44] sm:$0xf]
    %v182 = vld [vmem:[%s10 + $0x48] sm:$0xf]
    %v183 = vld [vmem:[%s10 + $0x4c] sm:$0xf]
    %v184 = vld [vmem:[%s10 + $0x50] sm:$0xf]
    %v185 = vld [vmem:[%s10 + $0x54] sm:$0xf]
    %v186 = vld [vmem:[%s10 + $0x58] sm:$0xf]
    %v187 = vld [vmem:[%s10 + $0x5c] sm:$0xf]
    %v188 = vld [vmem:[%s10 + $0x60] sm:$0xf]
    %v189 = vld [vmem:[%s10 + $0x64] sm:$0xf]
    %v190 = vld [vmem:[%s10 + $0x68] sm:$0xf]
    %v191 = vld [vmem:[%s10 + $0x6c] sm:$0xf]
    %v192 = vld [vmem:[%s10 + $0x70] sm:$0xf]
    %v193 = vld [vmem:[%s10 + $0x74] sm:$0xf]
    %v194 = vld [vmem:[%s10 + $0x78] sm:$0xf]
    %v195 = vld [vmem:[%s10 + $0x7c] sm:$0xf]
    %v196 = vld [vmem:[%s10 + $0x80] sm:$0xf]
    %v197 = vld [vmem:[%s10 + $0x84] sm:$0xf]
    %v198 = vld [vmem:[%s10 + $0x88] sm:$0xf]
    %v199 = vld [vmem:[%s10 + $0x8c] sm:$0xf]
    %v200 = vld [vmem:[%s10 + $0x90] sm:$0xf]
    %v201 = vld [vmem:[%s10 + $0x94] sm:$0xf]
    %v202 = vld [vmem:[%s10 + $0x98] sm:$0xf]
    %v203 = vld [vmem:[%s10 + $0x9c] sm:$0xf]
    %v204 = vld [vmem:[%s10 + $0xa0] sm:$0xf]
    %v205 = vld [vmem:[%s10 + $0xa4] sm:$0xf]
    %v206 = vld [vmem:[%s10 + $0xa8] sm:$0xf]
    %v207 = vld [vmem:[%s10 + $0xac] sm:$0xf]
    %v208 = vld [vmem:[%s10 + $0xb0] sm:$0xf]
    %v209 = vld [vmem:[%s10 + $0xb4] sm:$0xf]
    %v210 = vld [vmem:[%s10 + $0xb8] sm:$0xf]
    %v211 = vld [vmem:[%s10 + $0xbc] sm:$0xf]
    %v212 = vld [vmem:[%s10 + $0xc0] sm:$0xf]
    %v213 = vld [vmem:[%s10 + $0xc4] sm:$0xf]
    %v214 = vld [vmem:[%s10 + $0xc8] sm:$0xf]
    %v215 = vld [vmem:[%s10 + $0xcc] sm:$0xf]
    %v216 = vld [vmem:[%s10 + $0xd0] sm:$0xf]
    %v217 = vld [vmem:[%s10 + $0xd4] sm:$0xf]
    %v218 = vld [vmem:[%s10 + $0xd8] sm:$0xf]
    %v219 = vld [vmem:[%s10 + $0xdc] sm:$0xf]
    %v220 = vld [vmem:[%s10 + $0xe0] sm:$0xf]
    %v221 = vld [vmem:[%s10 + $0xe4] sm:$0xf]
    %v222 = vld [vmem:[%s10 + $0xe8] sm:$0xf]
    %v223 = vld [vmem:[%s10 + $0xec] sm:$0xf]
    %v224 = vld [vmem:[%s10 + $0xf0] sm:$0xf]
    %v225 = vld [vmem:[%s10 + $0xf4] sm:$0xf]
    %v226 = vld [vmem:[%s10 + $0xf8] sm:$0xf]
    %v227 = vld [vmem:[%s10 + $0xfc] sm:$0xf]
    %v228 = vld [vmem:[#allocation10] sm:$0xff]
    %v229 = vld [vmem:[#allocation10 + $0x8] sm:$0xff]
    %v230 = vld [vmem:[%s0] sm:$0xff]
    %v231 = vld [vmem:[%s0 + $0x8] sm:$0xff]
    %v232 = vld [vmem:[%s2] sm:$0xff]
    %v233 = vld [vmem:[%s2 + $0x8] sm:$0xff]
    %v234 = vld [vmem:[%s2 + $0x10] sm:$0xff]
    %v235 = vld [vmem:[%s2 + $0x18] sm:$0xff]
    %v236 = vld [vmem:[%s2 + $0x20] sm:$0xff]
    %v237 = vld [vmem:[%s2 + $0x28] sm:$0xff]
    %v238 = vld [vmem:[%s2 + $0x30] sm:$0xff]
    %v239 = vld [vmem:[%s2 + $0x38] sm:$0xff]
    %v240 = vld [vmem:[%s2 + $0x40] sm:$0xff]
    %v241 = vld [vmem:[%s2 + $0x48] sm:$0xff]
    %v242 = vld [vmem:[%s2 + $0x50] sm:$0xff]
    %v243 = vld [vmem:[%s2 + $0x58] sm:$0xff]
    %v244 = vld [vmem:[%s2 + $0x60] sm:$0xff]
    %v245 = vld [vmem:[%s2 + $0x68] sm:$0xff]
    %v246 = vld [vmem:[%s2 + $0x70] sm:$0xff]
    %v247 = vld [vmem:[%s2 + $0x78] sm:$0xff]
    %v248 = vld [vmem:[%s2 + $0x80] sm:$0xff]
    %v249 = vld [vmem:[%s2 + $0x88] sm:$0xff]
    %v250 = vld [vmem:[%s2 + $0x90] sm:$0xff]
    %v251 = vld [vmem:[%s2 + $0x98] sm:$0xff]
    %v252 = vld [vmem:[%s2 + $0xa0] sm:$0xff]
    %v253 = vld [vmem:[%s2 + $0xa8] sm:$0xff]
    %v254 = vld [vmem:[%s2 + $0xb0] sm:$0xff]
    %v255 = vld [vmem:[%s2 + $0xb8] sm:$0xff]
    %v256 = vld [vmem:[%s2 + $0xc0] sm:$0xff]
    %v257 = vld [vmem:[%s2 + $0xc8] sm:$0xff]
    %v258 = vld [vmem:[%s2 + $0xd0] sm:$0xff]
    %v259 = vld [vmem:[%s2 + $0xd8] sm:$0xff]
    %v260 = vld [vmem:[%s2 + $0xe0] sm:$0xff]
    %v261 = vld [vmem:[%s2 + $0xe8] sm:$0xff]
    %v262 = vld [vmem:[%s2 + $0xf0] sm:$0xff]
    %v263 = vld [vmem:[%s2 + $0xf8] sm:$0xff]
    %v264 = vld [vmem:[%s2 + $0x100] sm:$0xff]
    %v265 = vld [vmem:[%s2 + $0x108] sm:$0xff]
    %v266 = vld [vmem:[%s2 + $0x110] sm:$0xff]
    %v267 = vld [vmem:[%s2 + $0x118] sm:$0xff]
    %v268 = vld [vmem:[%s2 + $0x120] sm:$0xff]
    %v269 = vld [vmem:[%s2 + $0x128] sm:$0xff]
    %v270 = vld [vmem:[%s2 + $0x130] sm:$0xff]
    %v271 = vld [vmem:[%s2 + $0x138] sm:$0xff]
    %v272 = vld [vmem:[%s2 + $0x140] sm:$0xff]
    %v273 = vld [vmem:[%s2 + $0x148] sm:$0xff]
    %v274 = vld [vmem:[%s2 + $0x150] sm:$0xff]
    %v275 = vld [vmem:[%s2 + $0x158] sm:$0xff]
    %v276 = vld [vmem:[%s2 + $0x160] sm:$0xff]
    %v277 = vld [vmem:[%s2 + $0x168] sm:$0xff]
    %v278 = vld [vmem:[%s2 + $0x170] sm:$0xff]
    %v279 = vld [vmem:[%s2 + $0x178] sm:$0xff]
    %v280 = vld [vmem:[%s2 + $0x180] sm:$0xff]
    %v281 = vld [vmem:[%s2 + $0x188] sm:$0xff]
    %v282 = vld [vmem:[%s2 + $0x190] sm:$0xff]
    %v283 = vld [vmem:[%s2 + $0x198] sm:$0xff]
    %v284 = vld [vmem:[%s2 + $0x1a0] sm:$0xff]
    %v285 = vld [vmem:[%s2 + $0x1a8] sm:$0xff]
    %v286 = vld [vmem:[%s2 + $0x1b0] sm:$0xff]
    %v287 = vld [vmem:[%s2 + $0x1b8] sm:$0xff]
    %v288 = vld [vmem:[%s2 + $0x1c0] sm:$0xff]
    %v289 = vld [vmem:[%s2 + $0x1c8] sm:$0xff]
    %v290 = vld [vmem:[%s2 + $0x1d0] sm:$0xff]
    %v291 = vld [vmem:[%s2 + $0x1d8] sm:$0xff]
    %v292 = vld [vmem:[%s2 + $0x1e0] sm:$0xff]
    %v293 = vld [vmem:[%s2 + $0x1e8] sm:$0xff]
    %v294 = vld [vmem:[%s2 + $0x1f0] sm:$0xff]
    %v295 = vld [vmem:[%s2 + $0x1f8] sm:$0xff]
    %v298 = vunpack.c.l.b16 %v230
    %v299 = vunpack.c.h.b16 %v230
    %v300 = vunpack.c.l.b16 %v231
    %v301 = vunpack.c.h.b16 %v231
    %v302 = vpack.c.b16 %v300, %v298
    %v303 = vpack.c.b16 %v301, %v299
    %v370 = vunpack.c.l.b16 %v232
    %v371 = vunpack.c.h.b16 %v232
    %v372 = vunpack.c.l.b16 %v233
    %v373 = vunpack.c.h.b16 %v233
    %v374 = vunpack.c.l.b16 %v234
    %v375 = vunpack.c.h.b16 %v234
    %v376 = vunpack.c.l.b16 %v235
    %v377 = vunpack.c.h.b16 %v235
    %v378 = vunpack.c.l.b16 %v236
    %v379 = vunpack.c.h.b16 %v236
    %v380 = vunpack.c.l.b16 %v237
    %v381 = vunpack.c.h.b16 %v237
    %v382 = vunpack.c.l.b16 %v238
    %v383 = vunpack.c.h.b16 %v238
    %v384 = vunpack.c.l.b16 %v239
    %v385 = vunpack.c.h.b16 %v239
    %v386 = vunpack.c.l.b16 %v240
    %v387 = vunpack.c.h.b16 %v240
    %v388 = vunpack.c.l.b16 %v241
    %v389 = vunpack.c.h.b16 %v241
    %v390 = vunpack.c.l.b16 %v242
    %v391 = vunpack.c.h.b16 %v242
    %v392 = vunpack.c.l.b16 %v243
    %v393 = vunpack.c.h.b16 %v243
    %v394 = vunpack.c.l.b16 %v244
    %v395 = vunpack.c.h.b16 %v244
    %v396 = vunpack.c.l.b16 %v245
    %v397 = vunpack.c.h.b16 %v245
    %v398 = vunpack.c.l.b16 %v246
    %v399 = vunpack.c.h.b16 %v246
    %v400 = vunpack.c.l.b16 %v247
    %v401 = vunpack.c.h.b16 %v247
    %v402 = vunpack.c.l.b16 %v248
    %v403 = vunpack.c.h.b16 %v248
    %v404 = vunpack.c.l.b16 %v249
    %v405 = vunpack.c.h.b16 %v249
    %v406 = vunpack.c.l.b16 %v250
    %v407 = vunpack.c.h.b16 %v250
    %v408 = vunpack.c.l.b16 %v251
    %v409 = vunpack.c.h.b16 %v251
    %v410 = vunpack.c.l.b16 %v252
    %v411 = vunpack.c.h.b16 %v252
    %v412 = vunpack.c.l.b16 %v253
    %v413 = vunpack.c.h.b16 %v253
    %v414 = vunpack.c.l.b16 %v254
    %v415 = vunpack.c.h.b16 %v254
    %v416 = vunpack.c.l.b16 %v255
    %v417 = vunpack.c.h.b16 %v255
    %v418 = vunpack.c.l.b16 %v256
    %v419 = vunpack.c.h.b16 %v256
    %v420 = vunpack.c.l.b16 %v257
    %v421 = vunpack.c.h.b16 %v257
    %v422 = vunpack.c.l.b16 %v258
    %v423 = vunpack.c.h.b16 %v258
    %v424 = vunpack.c.l.b16 %v259
    %v425 = vunpack.c.h.b16 %v259
    %v426 = vunpack.c.l.b16 %v260
    %v427 = vunpack.c.h.b16 %v260
    %v428 = vunpack.c.l.b16 %v261
    %v429 = vunpack.c.h.b16 %v261
    %v430 = vunpack.c.l.b16 %v262
    %v431 = vunpack.c.h.b16 %v262
    %v432 = vunpack.c.l.b16 %v263
    %v433 = vunpack.c.h.b16 %v263
    %v434 = vunpack.c.l.b16 %v264
    %v435 = vunpack.c.h.b16 %v264
    %v436 = vunpack.c.l.b16 %v265
    %v437 = vunpack.c.h.b16 %v265
    %v438 = vunpack.c.l.b16 %v266
    %v439 = vunpack.c.h.b16 %v266
    %v440 = vunpack.c.l.b16 %v267
    %v441 = vunpack.c.h.b16 %v267
    %v442 = vunpack.c.l.b16 %v268
    %v443 = vunpack.c.h.b16 %v268
    %v444 = vunpack.c.l.b16 %v269
    %v445 = vunpack.c.h.b16 %v269
    %v446 = vunpack.c.l.b16 %v270
    %v447 = vunpack.c.h.b16 %v270
    %v448 = vunpack.c.l.b16 %v271
    %v449 = vunpack.c.h.b16 %v271
    %v450 = vunpack.c.l.b16 %v272
    %v451 = vunpack.c.h.b16 %v272
    %v452 = vunpack.c.l.b16 %v273
    %v453 = vunpack.c.h.b16 %v273
    %v454 = vunpack.c.l.b16 %v274
    %v455 = vunpack.c.h.b16 %v274
    %v456 = vunpack.c.l.b16 %v275
    %v457 = vunpack.c.h.b16 %v275
    %v458 = vunpack.c.l.b16 %v276
    %v459 = vunpack.c.h.b16 %v276
    %v460 = vunpack.c.l.b16 %v277
    %v461 = vunpack.c.h.b16 %v277
    %v462 = vunpack.c.l.b16 %v278
    %v463 = vunpack.c.h.b16 %v278
    %v464 = vunpack.c.l.b16 %v279
    %v465 = vunpack.c.h.b16 %v279
    %v466 = vunpack.c.l.b16 %v280
    %v467 = vunpack.c.h.b16 %v280
    %v468 = vunpack.c.l.b16 %v281
    %v469 = vunpack.c.h.b16 %v281
    %v470 = vunpack.c.l.b16 %v282
    %v471 = vunpack.c.h.b16 %v282
    %v472 = vunpack.c.l.b16 %v283
    %v473 = vunpack.c.h.b16 %v283
    %v474 = vunpack.c.l.b16 %v284
    %v475 = vunpack.c.h.b16 %v284
    %v476 = vunpack.c.l.b16 %v285
    %v477 = vunpack.c.h.b16 %v285
    %v478 = vunpack.c.l.b16 %v286
    %v479 = vunpack.c.h.b16 %v286
    %v480 = vunpack.c.l.b16 %v287
    %v481 = vunpack.c.h.b16 %v287
    %v482 = vunpack.c.l.b16 %v288
    %v483 = vunpack.c.h.b16 %v288
    %v484 = vunpack.c.l.b16 %v289
    %v485 = vunpack.c.h.b16 %v289
    %v486 = vunpack.c.l.b16 %v290
    %v487 = vunpack.c.h.b16 %v290
    %v488 = vunpack.c.l.b16 %v291
    %v489 = vunpack.c.h.b16 %v291
    %v490 = vunpack.c.l.b16 %v292
    %v491 = vunpack.c.h.b16 %v292
    %v492 = vunpack.c.l.b16 %v293
    %v493 = vunpack.c.h.b16 %v293
    %v494 = vunpack.c.l.b16 %v294
    %v495 = vunpack.c.h.b16 %v294
    %v496 = vunpack.c.l.b16 %v295
    %v497 = vunpack.c.h.b16 %v295
    %v498 = vpack.c.b16 %v374, %v370
    %v499 = vpack.c.b16 %v375, %v371
    %v500 = vpack.c.b16 %v376, %v372
    %v501 = vpack.c.b16 %v377, %v373
    %v502 = vpack.c.b16 %v382, %v378
    %v503 = vpack.c.b16 %v383, %v379
    %v504 = vpack.c.b16 %v384, %v380
    %v505 = vpack.c.b16 %v385, %v381
    %v506 = vpack.c.b16 %v390, %v386
    %v507 = vpack.c.b16 %v391, %v387
    %v508 = vpack.c.b16 %v392, %v388
    %v509 = vpack.c.b16 %v393, %v389
    %v510 = vpack.c.b16 %v398, %v394
    %v511 = vpack.c.b16 %v399, %v395
    %v512 = vpack.c.b16 %v400, %v396
    %v513 = vpack.c.b16 %v401, %v397
    %v514 = vpack.c.b16 %v406, %v402
    %v515 = vpack.c.b16 %v407, %v403
    %v516 = vpack.c.b16 %v408, %v404
    %v517 = vpack.c.b16 %v409, %v405
    %v518 = vpack.c.b16 %v414, %v410
    %v519 = vpack.c.b16 %v415, %v411
    %v520 = vpack.c.b16 %v416, %v412
    %v521 = vpack.c.b16 %v417, %v413
    %v522 = vpack.c.b16 %v422, %v418
    %v523 = vpack.c.b16 %v423, %v419
    %v524 = vpack.c.b16 %v424, %v420
    %v525 = vpack.c.b16 %v425, %v421
    %v526 = vpack.c.b16 %v430, %v426
    %v527 = vpack.c.b16 %v431, %v427
    %v528 = vpack.c.b16 %v432, %v428
    %v529 = vpack.c.b16 %v433, %v429
    %v530 = vpack.c.b16 %v438, %v434
    %v531 = vpack.c.b16 %v439, %v435
    %v532 = vpack.c.b16 %v440, %v436
    %v533 = vpack.c.b16 %v441, %v437
    %v534 = vpack.c.b16 %v446, %v442
    %v535 = vpack.c.b16 %v447, %v443
    %v536 = vpack.c.b16 %v448, %v444
    %v537 = vpack.c.b16 %v449, %v445
    %v538 = vpack.c.b16 %v454, %v450
    %v539 = vpack.c.b16 %v455, %v451
    %v540 = vpack.c.b16 %v456, %v452
    %v541 = vpack.c.b16 %v457, %v453
    %v542 = vpack.c.b16 %v462, %v458
    %v543 = vpack.c.b16 %v463, %v459
    %v544 = vpack.c.b16 %v464, %v460
    %v545 = vpack.c.b16 %v465, %v461
    %v546 = vpack.c.b16 %v470, %v466
    %v547 = vpack.c.b16 %v471, %v467
    %v548 = vpack.c.b16 %v472, %v468
    %v549 = vpack.c.b16 %v473, %v469
    %v550 = vpack.c.b16 %v478, %v474
    %v551 = vpack.c.b16 %v479, %v475
    %v552 = vpack.c.b16 %v480, %v476
    %v553 = vpack.c.b16 %v481, %v477
    %v554 = vpack.c.b16 %v486, %v482
    %v555 = vpack.c.b16 %v487, %v483
    %v556 = vpack.c.b16 %v488, %v484
    %v557 = vpack.c.b16 %v489, %v485
    %v558 = vpack.c.b16 %v494, %v490
    %v559 = vpack.c.b16 %v495, %v491
    %v560 = vpack.c.b16 %v496, %v492
    %v561 = vpack.c.b16 %v497, %v493
    %626 = vmatprep.subr.bf16.mxu0 %v527
    %627 = vmatpush1.bf16.msra.mxu0 %v526
    %628 = vmatprep.subr.bf16.mxu0 %v523
    %629 = vmatpush1.bf16.msra.mxu0 %v522
    %630 = vmatprep.subr.bf16.mxu0 %v519
    %631 = vmatpush1.bf16.msra.mxu0 %v518
    %632 = vmatprep.subr.bf16.mxu0 %v515
    %633 = vmatpush1.bf16.msra.mxu0 %v514
    %634 = vmatprep.subr.bf16.mxu0 %v511
    %635 = vmatpush1.bf16.msra.mxu0 %v510
    %636 = vmatprep.subr.bf16.mxu0 %v507
    %637 = vmatpush1.bf16.msra.mxu0 %v506
    %638 = vmatprep.subr.bf16.mxu0 %v503
    %639 = vmatpush1.bf16.msra.mxu0 %v502
    %640 = vmatprep.subr.bf16.mxu0 %v499
    %641 = vmatpush1.bf16.msra.mxu0 %v498
    %642 = vmatprep.subr.bf16.mxu0 %v559
    %643 = vmatpush2.bf16.msra.mxu0 %v558
    %644 = vmatprep.subr.bf16.mxu0 %v555
    %645 = vmatpush2.bf16.msra.mxu0 %v554
    %646 = vmatprep.subr.bf16.mxu0 %v551
    %647 = vmatpush2.bf16.msra.mxu0 %v550
    %648 = vmatprep.subr.bf16.mxu0 %v547
    %649 = vmatpush2.bf16.msra.mxu0 %v546
    %650 = vmatprep.subr.bf16.mxu0 %v543
    %651 = vmatpush2.bf16.msra.mxu0 %v542
    %652 = vmatprep.subr.bf16.mxu0 %v539
    %653 = vmatpush2.bf16.msra.mxu0 %v538
    %654 = vmatprep.subr.bf16.mxu0 %v535
    %655 = vmatpush2.bf16.msra.mxu0 %v534
    %656 = vmatprep.subr.bf16.mxu0 %v531
    %657 = vmatpush2.bf16.msra.mxu0 %v530
    %658 = vmatprep.mubr.bf16.mxu0 %v303
    %659 = vmatmul.mubr.bf16.gmra.mxu0 %v302
    %v660 = vpop.f32.mrf.mxu0
    %v661 = vadd.f32 0.0, %v660
    %v662 = vpop.f32.mrf.mxu0
    %v663 = vadd.f32 0.0, %v662
    %v664 = vpop.f32.mrf.mxu0
    %v665 = vadd.f32 0.0, %v664
    %v666 = vpop.f32.mrf.mxu0
    %v667 = vadd.f32 0.0, %v666
    %668 = vdwg.mxu0
    %669 = vmatprep.subr.bf16.mxu0 %v529
    %670 = vmatpush1.bf16.msra.mxu0 %v528
    %671 = vmatprep.subr.bf16.mxu0 %v525
    %672 = vmatpush1.bf16.msra.mxu0 %v524
    %673 = vmatprep.subr.bf16.mxu0 %v521
    %674 = vmatpush1.bf16.msra.mxu0 %v520
    %675 = vmatprep.subr.bf16.mxu0 %v517
    %676 = vmatpush1.bf16.msra.mxu0 %v516
    %677 = vmatprep.subr.bf16.mxu0 %v513
    %678 = vmatpush1.bf16.msra.mxu0 %v512
    %679 = vmatprep.subr.bf16.mxu0 %v509
    %680 = vmatpush1.bf16.msra.mxu0 %v508
    %681 = vmatprep.subr.bf16.mxu0 %v505
    %682 = vmatpush1.bf16.msra.mxu0 %v504
    %683 = vmatprep.subr.bf16.mxu0 %v501
    %684 = vmatpush1.bf16.msra.mxu0 %v500
    %685 = vmatprep.subr.bf16.mxu0 %v561
    %686 = vmatpush2.bf16.msra.mxu0 %v560
    %687 = vmatprep.subr.bf16.mxu0 %v557
    %688 = vmatpush2.bf16.msra.mxu0 %v556
    %689 = vmatprep.subr.bf16.mxu0 %v553
    %690 = vmatpush2.bf16.msra.mxu0 %v552
    %691 = vmatprep.subr.bf16.mxu0 %v549
    %692 = vmatpush2.bf16.msra.mxu0 %v548
    %693 = vmatprep.subr.bf16.mxu0 %v545
    %694 = vmatpush2.bf16.msra.mxu0 %v544
    %695 = vmatprep.subr.bf16.mxu0 %v541
    %696 = vmatpush2.bf16.msra.mxu0 %v540
    %697 = vmatprep.subr.bf16.mxu0 %v537
    %698 = vmatpush2.bf16.msra.mxu0 %v536
    %699 = vmatprep.subr.bf16.mxu0 %v533
    %700 = vmatpush2.bf16.msra.mxu0 %v532
    %701 = vmatprep.mubr.bf16.mxu0 %v303
    %702 = vmatmul.mubr.bf16.gmra.mxu0 %v302
    %v703 = vpop.f32.mrf.mxu0
    %v704 = vadd.f32 0.0, %v703
    %v705 = vpop.f32.mrf.mxu0
    %v706 = vadd.f32 0.0, %v705
    %v707 = vpop.f32.mrf.mxu0
    %v708 = vadd.f32 0.0, %v707
    %v709 = vpop.f32.mrf.mxu0
    %v710 = vadd.f32 0.0, %v709
    %711 = vdwg.mxu0
    %vm712 = vcmp.ge.f32.partialorder %v661, 0.0
    %vm713 = vcmp.ge.f32.partialorder %v663, 0.0
    %vm714 = vcmp.ge.f32.partialorder %v704, 0.0
    %vm715 = vcmp.ge.f32.partialorder %v706, 0.0
    %vm716 = vcmp.ge.f32.partialorder %v665, 0.0
    %vm717 = vcmp.ge.f32.partialorder %v667, 0.0
    %vm718 = vcmp.ge.f32.partialorder %v708, 0.0
    %vm719 = vcmp.ge.f32.partialorder %v710, 0.0
    %v720 = vmul.f32 %v661, 0.2
    %v721 = vmul.f32 %v663, 0.2
    %v722 = vmul.f32 %v704, 0.2
    %v723 = vmul.f32 %v706, 0.2
    %v724 = vmul.f32 %v665, 0.2
    %v725 = vmul.f32 %v667, 0.2
    %v726 = vmul.f32 %v708, 0.2
    %v727 = vmul.f32 %v710, 0.2
    %v728 = vsel %vm712, %v661, %v720
    %v729 = vsel %vm713, %v663, %v721
    %v730 = vsel %vm714, %v704, %v722
    %v731 = vsel %vm715, %v706, %v723
    %v732 = vsel %vm716, %v665, %v724
    %v733 = vsel %vm717, %v667, %v725
    %v734 = vsel %vm718, %v708, %v726
    %v735 = vsel %vm719, %v710, %v727
    %v736 = vpack.c.bf16 %v732, %v728
    %v737 = vpack.c.bf16 %v733, %v729
    %v738 = vpack.c.bf16 %v734, %v730
    %v739 = vpack.c.bf16 %v735, %v731
    %v740 = vld [vmem:[#allocation5] sm:$0xff]
    %v741 = vld [vmem:[#allocation5 + $0x8] sm:$0xff]
    %v742 = vld [vmem:[#allocation5 + $0x10] sm:$0xff]
    %v743 = vld [vmem:[#allocation5 + $0x18] sm:$0xff]
    %v744 = vld [vmem:[#allocation5 + $0x20] sm:$0xff]
    %v745 = vld [vmem:[#allocation5 + $0x28] sm:$0xff]
    %v746 = vld [vmem:[#allocation5 + $0x30] sm:$0xff]
    %v747 = vld [vmem:[#allocation5 + $0x38] sm:$0xff]
    %v748 = vld [vmem:[#allocation5 + $0x40] sm:$0xff]
    %v749 = vld [vmem:[#allocation5 + $0x48] sm:$0xff]
    %v750 = vld [vmem:[#allocation5 + $0x50] sm:$0xff]
    %v751 = vld [vmem:[#allocation5 + $0x58] sm:$0xff]
    %v752 = vld [vmem:[#allocation5 + $0x60] sm:$0xff]
    %v753 = vld [vmem:[#allocation5 + $0x68] sm:$0xff]
    %v754 = vld [vmem:[#allocation5 + $0x70] sm:$0xff]
    %v755 = vld [vmem:[#allocation5 + $0x78] sm:$0xff]
    %v756 = vld [vmem:[#allocation5 + $0x80] sm:$0xff]
    %v757 = vld [vmem:[#allocation5 + $0x88] sm:$0xff]
    %v758 = vld [vmem:[#allocation5 + $0x90] sm:$0xff]
    %v759 = vld [vmem:[#allocation5 + $0x98] sm:$0xff]
    %v760 = vld [vmem:[#allocation5 + $0xa0] sm:$0xff]
    %v761 = vld [vmem:[#allocation5 + $0xa8] sm:$0xff]
    %v762 = vld [vmem:[#allocation5 + $0xb0] sm:$0xff]
    %v763 = vld [vmem:[#allocation5 + $0xb8] sm:$0xff]
    %v764 = vld [vmem:[#allocation5 + $0xc0] sm:$0xff]
    %v765 = vld [vmem:[#allocation5 + $0xc8] sm:$0xff]
    %v766 = vld [vmem:[#allocation5 + $0xd0] sm:$0xff]
    %v767 = vld [vmem:[#allocation5 + $0xd8] sm:$0xff]
    %v768 = vld [vmem:[#allocation5 + $0xe0] sm:$0xff]
    %v769 = vld [vmem:[#allocation5 + $0xe8] sm:$0xff]
    %v770 = vld [vmem:[#allocation5 + $0xf0] sm:$0xff]
    %v771 = vld [vmem:[#allocation5 + $0xf8] sm:$0xff]
    %v772 = vld [vmem:[#allocation5 + $0x100] sm:$0xff]
    %v773 = vld [vmem:[#allocation5 + $0x108] sm:$0xff]
    %v774 = vld [vmem:[#allocation5 + $0x110] sm:$0xff]
    %v775 = vld [vmem:[#allocation5 + $0x118] sm:$0xff]
    %v776 = vld [vmem:[#allocation5 + $0x120] sm:$0xff]
    %v777 = vld [vmem:[#allocation5 + $0x128] sm:$0xff]
    %v778 = vld [vmem:[#allocation5 + $0x130] sm:$0xff]
    %v779 = vld [vmem:[#allocation5 + $0x138] sm:$0xff]
    %v780 = vld [vmem:[#allocation5 + $0x140] sm:$0xff]
    %v781 = vld [vmem:[#allocation5 + $0x148] sm:$0xff]
    %v782 = vld [vmem:[#allocation5 + $0x150] sm:$0xff]
    %v783 = vld [vmem:[#allocation5 + $0x158] sm:$0xff]
    %v784 = vld [vmem:[#allocation5 + $0x160] sm:$0xff]
    %v785 = vld [vmem:[#allocation5 + $0x168] sm:$0xff]
    %v786 = vld [vmem:[#allocation5 + $0x170] sm:$0xff]
    %v787 = vld [vmem:[#allocation5 + $0x178] sm:$0xff]
    %v788 = vld [vmem:[#allocation5 + $0x180] sm:$0xff]
    %v789 = vld [vmem:[#allocation5 + $0x188] sm:$0xff]
    %v790 = vld [vmem:[#allocation5 + $0x190] sm:$0xff]
    %v791 = vld [vmem:[#allocation5 + $0x198] sm:$0xff]
    %v792 = vld [vmem:[#allocation5 + $0x1a0] sm:$0xff]
    %v793 = vld [vmem:[#allocation5 + $0x1a8] sm:$0xff]
    %v794 = vld [vmem:[#allocation5 + $0x1b0] sm:$0xff]
    %v795 = vld [vmem:[#allocation5 + $0x1b8] sm:$0xff]
    %v796 = vld [vmem:[#allocation5 + $0x1c0] sm:$0xff]
    %v797 = vld [vmem:[#allocation5 + $0x1c8] sm:$0xff]
    %v798 = vld [vmem:[#allocation5 + $0x1d0] sm:$0xff]
    %v799 = vld [vmem:[#allocation5 + $0x1d8] sm:$0xff]
    %v800 = vld [vmem:[#allocation5 + $0x1e0] sm:$0xff]
    %v801 = vld [vmem:[#allocation5 + $0x1e8] sm:$0xff]
    %v802 = vld [vmem:[#allocation5 + $0x1f0] sm:$0xff]
    %v803 = vld [vmem:[#allocation5 + $0x1f8] sm:$0xff]
    %v868 = vunpack.c.l.b16 %v740
    %v869 = vunpack.c.h.b16 %v740
    %v870 = vunpack.c.l.b16 %v741
    %v871 = vunpack.c.h.b16 %v741
    %v872 = vunpack.c.l.b16 %v742
    %v873 = vunpack.c.h.b16 %v742
    %v874 = vunpack.c.l.b16 %v743
    %v875 = vunpack.c.h.b16 %v743
    %v876 = vunpack.c.l.b16 %v744
    %v877 = vunpack.c.h.b16 %v744
    %v878 = vunpack.c.l.b16 %v745
    %v879 = vunpack.c.h.b16 %v745
    %v880 = vunpack.c.l.b16 %v746
    %v881 = vunpack.c.h.b16 %v746
    %v882 = vunpack.c.l.b16 %v747
    %v883 = vunpack.c.h.b16 %v747
    %v884 = vunpack.c.l.b16 %v748
    %v885 = vunpack.c.h.b16 %v748
    %v886 = vunpack.c.l.b16 %v749
    %v887 = vunpack.c.h.b16 %v749
    %v888 = vunpack.c.l.b16 %v750
    %v889 = vunpack.c.h.b16 %v750
    %v890 = vunpack.c.l.b16 %v751
    %v891 = vunpack.c.h.b16 %v751
    %v892 = vunpack.c.l.b16 %v752
    %v893 = vunpack.c.h.b16 %v752
    %v894 = vunpack.c.l.b16 %v753
    %v895 = vunpack.c.h.b16 %v753
    %v896 = vunpack.c.l.b16 %v754
    %v897 = vunpack.c.h.b16 %v754
    %v898 = vunpack.c.l.b16 %v755
    %v899 = vunpack.c.h.b16 %v755
    %v900 = vunpack.c.l.b16 %v756
    %v901 = vunpack.c.h.b16 %v756
    %v902 = vunpack.c.l.b16 %v757
    %v903 = vunpack.c.h.b16 %v757
    %v904 = vunpack.c.l.b16 %v758
    %v905 = vunpack.c.h.b16 %v758
    %v906 = vunpack.c.l.b16 %v759
    %v907 = vunpack.c.h.b16 %v759
    %v908 = vunpack.c.l.b16 %v760
    %v909 = vunpack.c.h.b16 %v760
    %v910 = vunpack.c.l.b16 %v761
    %v911 = vunpack.c.h.b16 %v761
    %v912 = vunpack.c.l.b16 %v762
    %v913 = vunpack.c.h.b16 %v762
    %v914 = vunpack.c.l.b16 %v763
    %v915 = vunpack.c.h.b16 %v763
    %v916 = vunpack.c.l.b16 %v764
    %v917 = vunpack.c.h.b16 %v764
    %v918 = vunpack.c.l.b16 %v765
    %v919 = vunpack.c.h.b16 %v765
    %v920 = vunpack.c.l.b16 %v766
    %v921 = vunpack.c.h.b16 %v766
    %v922 = vunpack.c.l.b16 %v767
    %v923 = vunpack.c.h.b16 %v767
    %v924 = vunpack.c.l.b16 %v768
    %v925 = vunpack.c.h.b16 %v768
    %v926 = vunpack.c.l.b16 %v769
    %v927 = vunpack.c.h.b16 %v769
    %v928 = vunpack.c.l.b16 %v770
    %v929 = vunpack.c.h.b16 %v770
    %v930 = vunpack.c.l.b16 %v771
    %v931 = vunpack.c.h.b16 %v771
    %v932 = vunpack.c.l.b16 %v772
    %v933 = vunpack.c.h.b16 %v772
    %v934 = vunpack.c.l.b16 %v773
    %v935 = vunpack.c.h.b16 %v773
    %v936 = vunpack.c.l.b16 %v774
    %v937 = vunpack.c.h.b16 %v774
    %v938 = vunpack.c.l.b16 %v775
    %v939 = vunpack.c.h.b16 %v775
    %v940 = vunpack.c.l.b16 %v776
    %v941 = vunpack.c.h.b16 %v776
    %v942 = vunpack.c.l.b16 %v777
    %v943 = vunpack.c.h.b16 %v777
    %v944 = vunpack.c.l.b16 %v778
    %v945 = vunpack.c.h.b16 %v778
    %v946 = vunpack.c.l.b16 %v779
    %v947 = vunpack.c.h.b16 %v779
    %v948 = vunpack.c.l.b16 %v780
    %v949 = vunpack.c.h.b16 %v780
    %v950 = vunpack.c.l.b16 %v781
    %v951 = vunpack.c.h.b16 %v781
    %v952 = vunpack.c.l.b16 %v782
    %v953 = vunpack.c.h.b16 %v782
    %v954 = vunpack.c.l.b16 %v783
    %v955 = vunpack.c.h.b16 %v783
    %v956 = vunpack.c.l.b16 %v784
    %v957 = vunpack.c.h.b16 %v784
    %v958 = vunpack.c.l.b16 %v785
    %v959 = vunpack.c.h.b16 %v785
    %v960 = vunpack.c.l.b16 %v786
    %v961 = vunpack.c.h.b16 %v786
    %v962 = vunpack.c.l.b16 %v787
    %v963 = vunpack.c.h.b16 %v787
    %v964 = vunpack.c.l.b16 %v788
    %v965 = vunpack.c.h.b16 %v788
    %v966 = vunpack.c.l.b16 %v789
    %v967 = vunpack.c.h.b16 %v789
    %v968 = vunpack.c.l.b16 %v790
    %v969 = vunpack.c.h.b16 %v790
    %v970 = vunpack.c.l.b16 %v791
    %v971 = vunpack.c.h.b16 %v791
    %v972 = vunpack.c.l.b16 %v792
    %v973 = vunpack.c.h.b16 %v792
    %v974 = vunpack.c.l.b16 %v793
    %v975 = vunpack.c.h.b16 %v793
    %v976 = vunpack.c.l.b16 %v794
    %v977 = vunpack.c.h.b16 %v794
    %v978 = vunpack.c.l.b16 %v795
    %v979 = vunpack.c.h.b16 %v795
    %v980 = vunpack.c.l.b16 %v796
    %v981 = vunpack.c.h.b16 %v796
    %v982 = vunpack.c.l.b16 %v797
    %v983 = vunpack.c.h.b16 %v797
    %v984 = vunpack.c.l.b16 %v798
    %v985 = vunpack.c.h.b16 %v798
    %v986 = vunpack.c.l.b16 %v799
    %v987 = vunpack.c.h.b16 %v799
    %v988 = vunpack.c.l.b16 %v800
    %v989 = vunpack.c.h.b16 %v800
    %v990 = vunpack.c.l.b16 %v801
    %v991 = vunpack.c.h.b16 %v801
    %v992 = vunpack.c.l.b16 %v802
    %v993 = vunpack.c.h.b16 %v802
    %v994 = vunpack.c.l.b16 %v803
    %v995 = vunpack.c.h.b16 %v803
    %v996 = vpack.c.b16 %v870, %v868
    %v997 = vpack.c.b16 %v871, %v869
    %v998 = vpack.c.b16 %v874, %v872
    %v999 = vpack.c.b16 %v875, %v873
    %v1000 = vpack.c.b16 %v878, %v876
    %v1001 = vpack.c.b16 %v879, %v877
    %v1002 = vpack.c.b16 %v882, %v880
    %v1003 = vpack.c.b16 %v883, %v881
    %v1004 = vpack.c.b16 %v886, %v884
    %v1005 = vpack.c.b16 %v887, %v885
    %v1006 = vpack.c.b16 %v890, %v888
    %v1007 = vpack.c.b16 %v891, %v889
    %v1008 = vpack.c.b16 %v894, %v892
    %v1009 = vpack.c.b16 %v895, %v893
    %v1010 = vpack.c.b16 %v898, %v896
    %v1011 = vpack.c.b16 %v899, %v897
    %v1012 = vpack.c.b16 %v902, %v900
    %v1013 = vpack.c.b16 %v903, %v901
    %v1014 = vpack.c.b16 %v906, %v904
    %v1015 = vpack.c.b16 %v907, %v905
    %v1016 = vpack.c.b16 %v910, %v908
    %v1017 = vpack.c.b16 %v911, %v909
    %v1018 = vpack.c.b16 %v914, %v912
    %v1019 = vpack.c.b16 %v915, %v913
    %v1020 = vpack.c.b16 %v918, %v916
    %v1021 = vpack.c.b16 %v919, %v917
    %v1022 = vpack.c.b16 %v922, %v920
    %v1023 = vpack.c.b16 %v923, %v921
    %v1024 = vpack.c.b16 %v926, %v924
    %v1025 = vpack.c.b16 %v927, %v925
    %v1026 = vpack.c.b16 %v930, %v928
    %v1027 = vpack.c.b16 %v931, %v929
    %v1028 = vpack.c.b16 %v934, %v932
    %v1029 = vpack.c.b16 %v935, %v933
    %v1030 = vpack.c.b16 %v938, %v936
    %v1031 = vpack.c.b16 %v939, %v937
    %v1032 = vpack.c.b16 %v942, %v940
    %v1033 = vpack.c.b16 %v943, %v941
    %v1034 = vpack.c.b16 %v946, %v944
    %v1035 = vpack.c.b16 %v947, %v945
    %v1036 = vpack.c.b16 %v950, %v948
    %v1037 = vpack.c.b16 %v951, %v949
    %v1038 = vpack.c.b16 %v954, %v952
    %v1039 = vpack.c.b16 %v955, %v953
    %v1040 = vpack.c.b16 %v958, %v956
    %v1041 = vpack.c.b16 %v959, %v957
    %v1042 = vpack.c.b16 %v962, %v960
    %v1043 = vpack.c.b16 %v963, %v961
    %v1044 = vpack.c.b16 %v966, %v964
    %v1045 = vpack.c.b16 %v967, %v965
    %v1046 = vpack.c.b16 %v970, %v968
    %v1047 = vpack.c.b16 %v971, %v969
    %v1048 = vpack.c.b16 %v974, %v972
    %v1049 = vpack.c.b16 %v975, %v973
    %v1050 = vpack.c.b16 %v978, %v976
    %v1051 = vpack.c.b16 %v979, %v977
    %v1052 = vpack.c.b16 %v982, %v980
    %v1053 = vpack.c.b16 %v983, %v981
    %v1054 = vpack.c.b16 %v986, %v984
    %v1055 = vpack.c.b16 %v987, %v985
    %v1056 = vpack.c.b16 %v990, %v988
    %v1057 = vpack.c.b16 %v991, %v989
    %v1058 = vpack.c.b16 %v994, %v992
    %v1059 = vpack.c.b16 %v995, %v993
    %1124 = vmatprep.subr.bf16.mxu0 %v1011
    %1125 = vmatpush1.bf16.msra.mxu0 %v1010
    %1126 = vmatprep.subr.bf16.mxu0 %v1009
    %1127 = vmatpush1.bf16.msra.mxu0 %v1008
    %1128 = vmatprep.subr.bf16.mxu0 %v1007
    %1129 = vmatpush1.bf16.msra.mxu0 %v1006
    %1130 = vmatprep.subr.bf16.mxu0 %v1005
    %1131 = vmatpush1.bf16.msra.mxu0 %v1004
    %1132 = vmatprep.subr.bf16.mxu0 %v1003
    %1133 = vmatpush1.bf16.msra.mxu0 %v1002
    %1134 = vmatprep.subr.bf16.mxu0 %v1001
    %1135 = vmatpush1.bf16.msra.mxu0 %v1000
    %1136 = vmatprep.subr.bf16.mxu0 %v999
    %1137 = vmatpush1.bf16.msra.mxu0 %v998
    %1138 = vmatprep.subr.bf16.mxu0 %v997
    %1139 = vmatpush1.bf16.msra.mxu0 %v996
    %1140 = vmatprep.subr.bf16.mxu0 %v1027
    %1141 = vmatpush2.bf16.msra.mxu0 %v1026
    %1142 = vmatprep.subr.bf16.mxu0 %v1025
    %1143 = vmatpush2.bf16.msra.mxu0 %v1024
    %1144 = vmatprep.subr.bf16.mxu0 %v1023
    %1145 = vmatpush2.bf16.msra.mxu0 %v1022
    %1146 = vmatprep.subr.bf16.mxu0 %v1021
    %1147 = vmatpush2.bf16.msra.mxu0 %v1020
    %1148 = vmatprep.subr.bf16.mxu0 %v1019
    %1149 = vmatpush2.bf16.msra.mxu0 %v1018
    %1150 = vmatprep.subr.bf16.mxu0 %v1017
    %1151 = vmatpush2.bf16.msra.mxu0 %v1016
    %1152 = vmatprep.subr.bf16.mxu0 %v1015
    %1153 = vmatpush2.bf16.msra.mxu0 %v1014
    %1154 = vmatprep.subr.bf16.mxu0 %v1013
    %1155 = vmatpush2.bf16.msra.mxu0 %v1012
    %1156 = vmatprep.mubr.bf16.mxu0 %v737
    %1157 = vmatmul.mubr.bf16.gmra.mxu0 %v736
    %v1158 = vpop.f32.mrf.mxu0
    %v1159 = vadd.f32 0.0, %v1158
    %v1160 = vpop.f32.mrf.mxu0
    %v1161 = vadd.f32 0.0, %v1160
    %v1162 = vpop.f32.mrf.mxu0
    %v1163 = vadd.f32 0.0, %v1162
    %v1164 = vpop.f32.mrf.mxu0
    %v1165 = vadd.f32 0.0, %v1164
    %1166 = vdwg.mxu0
    %1167 = vmatprep.subr.bf16.mxu0 %v1043
    %1168 = vmatpush1.bf16.msra.mxu0 %v1042
    %1169 = vmatprep.subr.bf16.mxu0 %v1041
    %1170 = vmatpush1.bf16.msra.mxu0 %v1040
    %1171 = vmatprep.subr.bf16.mxu0 %v1039
    %1172 = vmatpush1.bf16.msra.mxu0 %v1038
    %1173 = vmatprep.subr.bf16.mxu0 %v1037
    %1174 = vmatpush1.bf16.msra.mxu0 %v1036
    %1175 = vmatprep.subr.bf16.mxu0 %v1035
    %1176 = vmatpush1.bf16.msra.mxu0 %v1034
    %1177 = vmatprep.subr.bf16.mxu0 %v1033
    %1178 = vmatpush1.bf16.msra.mxu0 %v1032
    %1179 = vmatprep.subr.bf16.mxu0 %v1031
    %1180 = vmatpush1.bf16.msra.mxu0 %v1030
    %1181 = vmatprep.subr.bf16.mxu0 %v1029
    %1182 = vmatpush1.bf16.msra.mxu0 %v1028
    %1183 = vmatprep.subr.bf16.mxu0 %v1059
    %1184 = vmatpush2.bf16.msra.mxu0 %v1058
    %1185 = vmatprep.subr.bf16.mxu0 %v1057
    %1186 = vmatpush2.bf16.msra.mxu0 %v1056
    %1187 = vmatprep.subr.bf16.mxu0 %v1055
    %1188 = vmatpush2.bf16.msra.mxu0 %v1054
    %1189 = vmatprep.subr.bf16.mxu0 %v1053
    %1190 = vmatpush2.bf16.msra.mxu0 %v1052
    %1191 = vmatprep.subr.bf16.mxu0 %v1051
    %1192 = vmatpush2.bf16.msra.mxu0 %v1050
    %1193 = vmatprep.subr.bf16.mxu0 %v1049
    %1194 = vmatpush2.bf16.msra.mxu0 %v1048
    %1195 = vmatprep.subr.bf16.mxu0 %v1047
    %1196 = vmatpush2.bf16.msra.mxu0 %v1046
    %1197 = vmatprep.subr.bf16.mxu0 %v1045
    %1198 = vmatpush2.bf16.msra.mxu0 %v1044
    %1199 = vmatprep.mubr.bf16.mxu0 %v739
    %1200 = vmatmul.mubr.bf16.gmra.mxu0 %v738
    %v1201 = vpop.f32.mrf.mxu0
    %v1202 = vadd.f32 %v1159, %v1201
    %v1203 = vpop.f32.mrf.mxu0
    %v1204 = vadd.f32 %v1161, %v1203
    %v1205 = vpop.f32.mrf.mxu0
    %v1206 = vadd.f32 %v1163, %v1205
    %v1207 = vpop.f32.mrf.mxu0
    %v1208 = vadd.f32 %v1165, %v1207
    %1209 = vdwg.mxu0
    %v1210 = vld [vmem:[#allocation12] sm:$0x1]
    %v1211 = vld [vmem:[#allocation12 + $0x1] sm:$0x1]
    %vm1212 = vcmask 1041408
    %v1213 = vsel %vm1212, %v1202, 0.0
    %v1214 = vrot.slane %v1213, 4
    %v1215 = vadd.f32 %v1213, %v1214
    %v1216 = vrot.slane %v1215, 2
    %v1217 = vadd.f32 %v1215, %v1216
    %v1218 = vrot.slane %v1217, 1
    %v1219 = vadd.f32 %v1217, %v1218
    %v1220 = vsel %vm1212, %v1204, 0.0
    %v1221 = vrot.slane %v1220, 4
    %v1222 = vadd.f32 %v1220, %v1221
    %v1223 = vrot.slane %v1222, 2
    %v1224 = vadd.f32 %v1222, %v1223
    %v1225 = vrot.slane %v1224, 1
    %v1226 = vadd.f32 %v1224, %v1225
    %v1227 = vmul.f32 %v1202, %v1202
    %v1228 = vmul.f32 %v1204, %v1204
    %v1229 = vsel %vm1212, %v1227, 0.0
    %v1230 = vrot.slane %v1229, 4
    %v1231 = vadd.f32 %v1229, %v1230
    %v1232 = vrot.slane %v1231, 2
    %v1233 = vadd.f32 %v1231, %v1232
    %v1234 = vrot.slane %v1233, 1
    %v1235 = vadd.f32 %v1233, %v1234
    %v1236 = vsel %vm1212, %v1228, 0.0
    %v1237 = vrot.slane %v1236, 4
    %v1238 = vadd.f32 %v1236, %v1237
    %v1239 = vrot.slane %v1238, 2
    %v1240 = vadd.f32 %v1238, %v1239
    %v1241 = vrot.slane %v1240, 1
    %v1242 = vadd.f32 %v1240, %v1241
    %vm1243 = vcmask 1040384
    %v1244 = vsel %vm1243, %v1219, %v1235
    %v1245 = vsel %vm1243, %v1226, %v1242
    %v1246 = vpack.c.bf16 %v1244, %v1244
    %v1247 = vpack.c.bf16 %v1245, %v1245
    %v1280 = vunpack.c.l.b16 %v130
    %v1281 = vunpack.c.l.b16 %v131
    %v1282 = vunpack.c.l.b16 %v132
    %v1283 = vunpack.c.l.b16 %v133
    %v1284 = vunpack.c.l.b16 %v134
    %v1285 = vunpack.c.l.b16 %v135
    %v1286 = vunpack.c.l.b16 %v136
    %v1287 = vunpack.c.l.b16 %v137
    %v1288 = vunpack.c.l.b16 %v138
    %v1289 = vunpack.c.l.b16 %v139
    %v1290 = vunpack.c.l.b16 %v140
    %v1291 = vunpack.c.l.b16 %v141
    %v1292 = vunpack.c.l.b16 %v142
    %v1293 = vunpack.c.l.b16 %v143
    %v1294 = vunpack.c.l.b16 %v144
    %v1295 = vunpack.c.l.b16 %v145
    %v1296 = vunpack.c.l.b16 %v146
    %v1297 = vunpack.c.l.b16 %v147
    %v1298 = vunpack.c.l.b16 %v148
    %v1299 = vunpack.c.l.b16 %v149
    %v1300 = vunpack.c.l.b16 %v150
    %v1301 = vunpack.c.l.b16 %v151
    %v1302 = vunpack.c.l.b16 %v152
    %v1303 = vunpack.c.l.b16 %v153
    %v1304 = vunpack.c.l.b16 %v154
    %v1305 = vunpack.c.l.b16 %v155
    %v1306 = vunpack.c.l.b16 %v156
    %v1307 = vunpack.c.l.b16 %v157
    %v1308 = vunpack.c.l.b16 %v158
    %v1309 = vunpack.c.l.b16 %v159
    %v1310 = vunpack.c.l.b16 %v160
    %v1311 = vunpack.c.l.b16 %v161
    %v1312 = vpack.c.b16 %v1281, %v1280
    %v1313 = vpack.c.b16 %v1283, %v1282
    %v1314 = vpack.c.b16 %v1285, %v1284
    %v1315 = vpack.c.b16 %v1287, %v1286
    %v1316 = vpack.c.b16 %v1289, %v1288
    %v1317 = vpack.c.b16 %v1291, %v1290
    %v1318 = vpack.c.b16 %v1293, %v1292
    %v1319 = vpack.c.b16 %v1295, %v1294
    %v1320 = vpack.c.b16 %v1297, %v1296
    %v1321 = vpack.c.b16 %v1299, %v1298
    %v1322 = vpack.c.b16 %v1301, %v1300
    %v1323 = vpack.c.b16 %v1303, %v1302
    %v1324 = vpack.c.b16 %v1305, %v1304
    %v1325 = vpack.c.b16 %v1307, %v1306
    %v1326 = vpack.c.b16 %v1309, %v1308
    %v1327 = vpack.c.b16 %v1311, %v1310
    %1344 = vmatprep.subr.bf16.mxu0 0
    %1345 = vmatpush1.bf16.msra.mxu0 %v1319
    %1346 = vmatprep.subr.bf16.mxu0 0
    %1347 = vmatpush1.bf16.msra.mxu0 %v1318
    %1348 = vmatprep.subr.bf16.mxu0 0
    %1349 = vmatpush1.bf16.msra.mxu0 %v1317
    %1350 = vmatprep.subr.bf16.mxu0 0
    %1351 = vmatpush1.bf16.msra.mxu0 %v1316
    %1352 = vmatprep.subr.bf16.mxu0 0
    %1353 = vmatpush1.bf16.msra.mxu0 %v1315
    %1354 = vmatprep.subr.bf16.mxu0 0
    %1355 = vmatpush1.bf16.msra.mxu0 %v1314
    %1356 = vmatprep.subr.bf16.mxu0 0
    %1357 = vmatpush1.bf16.msra.mxu0 %v1313
    %1358 = vmatprep.subr.bf16.mxu0 0
    %1359 = vmatpush1.bf16.msra.mxu0 %v1312
    %1360 = vmatprep.subr.bf16.mxu0 0
    %1361 = vmatpush2.bf16.msra.mxu0 %v1327
    %1362 = vmatprep.subr.bf16.mxu0 0
    %1363 = vmatpush2.bf16.msra.mxu0 %v1326
    %1364 = vmatprep.subr.bf16.mxu0 0
    %1365 = vmatpush2.bf16.msra.mxu0 %v1325
    %1366 = vmatprep.subr.bf16.mxu0 0
    %1367 = vmatpush2.bf16.msra.mxu0 %v1324
    %1368 = vmatprep.subr.bf16.mxu0 0
    %1369 = vmatpush2.bf16.msra.mxu0 %v1323
    %1370 = vmatprep.subr.bf16.mxu0 0
    %1371 = vmatpush2.bf16.msra.mxu0 %v1322
    %1372 = vmatprep.subr.bf16.mxu0 0
    %1373 = vmatpush2.bf16.msra.mxu0 %v1321
    %1374 = vmatprep.subr.bf16.mxu0 0
    %1375 = vmatpush2.bf16.msra.mxu0 %v1320
    %1376 = vmatprep.mubr.bf16.mxu0 %v1247
    %1377 = vmatmul.mubr.bf16.gmra.mxu0 %v1246
    %v1378 = vpop.f32.mrf.mxu0
    %v1379 = vadd.f32 0.0, %v1378
    %v1380 = vpop.f32.mrf.mxu0
    %v1381 = vpop.f32.mrf.mxu0
    %v1382 = vpop.f32.mrf.mxu0
    %1383 = vdwg.mxu0
    %v1384 = vmul.f32 %v1379, 0.03125
    %v1385 = vmul.f32 %v1384, %v1384
    %v1387 = vrot.slane %v1385, 7
    %v1389 = vsub.f32 %v1384, %v1387
    %v1390 = vmax.f32 %v1389, 0.0
    %v1391 = vadd.f32 %v1390, 1e-05
    %v1392 = vrsqrt.pop %v1391
    %v1394 = vrot.slane %v1392, 1
    %v1396 = vmul.f32 %v1210, %v1394
    %v1397 = vmul.f32 %v1384, %v1396
    %v1398 = vsub.f32 %v1211, %v1397
    %v1400 = vrot.slane %v1398, 7
    %v1402 = vsel %vm1243, %v1396, %v1400
    %v1403 = vpack.c.bf16 %v1402, %v1402
    %v1406 = vunpack.c.l.b16 %v162
    %v1407 = vunpack.c.h.b16 %v162
    %v1408 = vunpack.c.l.b16 %v163
    %v1409 = vunpack.c.h.b16 %v163
    %v1410 = vpack.c.b16 %v1408, %v1406
    %v1411 = vpack.c.b16 %v1409, %v1407
    %vm1414 = vcmask 130048
    %v1416 = vsel %vm1414, %v1403, 0
    %1418 = vmatprep.subr.bf16.mxu0 0
    %1419 = vmatpush1.bf16.msra.mxu0 0
    %1420 = vmatprep.subr.bf16.mxu0 0
    %1421 = vmatpush1.bf16.msra.mxu0 0
    %1422 = vmatprep.subr.bf16.mxu0 0
    %1423 = vmatpush1.bf16.msra.mxu0 0
    %1424 = vmatprep.subr.bf16.mxu0 0
    %1425 = vmatpush1.bf16.msra.mxu0 0
    %1426 = vmatprep.subr.bf16.mxu0 0
    %1427 = vmatpush1.bf16.msra.mxu0 0
    %1428 = vmatprep.subr.bf16.mxu0 0
    %1429 = vmatpush1.bf16.msra.mxu0 0
    %1430 = vmatprep.subr.bf16.mxu0 0
    %1431 = vmatpush1.bf16.msra.mxu0 0
    %1432 = vmatprep.subr.bf16.mxu0 %v1411
    %1433 = vmatpush1.bf16.msra.mxu0 %v1410
    %1434 = vmatprep.subr.bf16.mxu0 0
    %1435 = vmatpush2.bf16.msra.mxu0 0
    %1436 = vmatprep.subr.bf16.mxu0 0
    %1437 = vmatpush2.bf16.msra.mxu0 0
    %1438 = vmatprep.subr.bf16.mxu0 0
    %1439 = vmatpush2.bf16.msra.mxu0 0
    %1440 = vmatprep.subr.bf16.mxu0 0
    %1441 = vmatpush2.bf16.msra.mxu0 0
    %1442 = vmatprep.subr.bf16.mxu0 0
    %1443 = vmatpush2.bf16.msra.mxu0 0
    %1444 = vmatprep.subr.bf16.mxu0 0
    %1445 = vmatpush2.bf16.msra.mxu0 0
    %1446 = vmatprep.subr.bf16.mxu0 0
    %1447 = vmatpush2.bf16.msra.mxu0 0
    %1448 = vmatprep.subr.bf16.mxu0 0
    %1449 = vmatpush2.bf16.msra.mxu0 0
    %1450 = vmatprep.mubr.bf16.mxu0 0
    %1451 = vmatmul.mubr.bf16.gmra.mxu0 %v1416
    %v1452 = vpop.f32.mrf.mxu0
    %v1453 = vadd.f32 0.0, %v1452
    %v1454 = vpop.f32.mrf.mxu0
    %v1455 = vadd.f32 0.0, %v1454
    %v1456 = vpop.f32.mrf.mxu0
    %v1457 = vpop.f32.mrf.mxu0
    %1458 = vdwg.mxu0
    %v1459 = vlaneseq
    %v1460 = vshrl.u32 %v1459, 7
    %v1461 = vsub.s32 0, %v1460
    %v1462 = vrot.slane %v1453, %v1461
    %v1463 = vlaneseq
    %v1464 = vshrl.u32 %v1463, 7
    %v1465 = vsub.s32 0, %v1464
    %v1466 = vrot.slane %v1455, %v1465
    %v1467 = vmul.f32 %v1202, %v1462
    %v1468 = vmul.f32 %v1204, %v1466
    %v1469 = vmul.f32 %v1206, %v1462
    %v1470 = vmul.f32 %v1208, %v1466
    %v1471 = vlaneseq
    %v1472 = vshrl.u32 %v1471, 7
    %v1473 = vsub.s32 1, %v1472
    %v1474 = vrot.slane %v1453, %v1473
    %v1475 = vlaneseq
    %v1476 = vshrl.u32 %v1475, 7
    %v1477 = vsub.s32 1, %v1476
    %v1478 = vrot.slane %v1455, %v1477
    %v1479 = vadd.f32 %v1467, %v1474
    %v1480 = vadd.f32 %v1468, %v1478
    %v1481 = vadd.f32 %v1469, %v1474
    %v1482 = vadd.f32 %v1470, %v1478
    %vm1483 = vcmp.ge.f32.partialorder %v1479, 0.0
    %vm1484 = vcmp.ge.f32.partialorder %v1480, 0.0
    %vm1485 = vcmp.ge.f32.partialorder %v1481, 0.0
    %vm1486 = vcmp.ge.f32.partialorder %v1482, 0.0
    %v1487 = vmul.f32 %v1479, 0.2
    %v1488 = vmul.f32 %v1480, 0.2
    %v1489 = vmul.f32 %v1481, 0.2
    %v1490 = vmul.f32 %v1482, 0.2
    %v1491 = vsel %vm1483, %v1479, %v1487
    %v1492 = vsel %vm1484, %v1480, %v1488
    %v1493 = vsel %vm1485, %v1481, %v1489
    %v1494 = vsel %vm1486, %v1482, %v1490
    %v1495 = vpack.c.bf16 %v1493, %v1491
    %v1496 = vpack.c.bf16 %v1494, %v1492
    %v1497 = vld [vmem:[#allocation7] sm:$0xf]
    %v1498 = vld [vmem:[#allocation7 + $0x4] sm:$0xf]
    %v1499 = vld [vmem:[#allocation7 + $0x8] sm:$0xf]
    %v1500 = vld [vmem:[#allocation7 + $0xc] sm:$0xf]
    %v1501 = vld [vmem:[#allocation7 + $0x10] sm:$0xf]
    %v1502 = vld [vmem:[#allocation7 + $0x14] sm:$0xf]
    %v1503 = vld [vmem:[#allocation7 + $0x18] sm:$0xf]
    %v1504 = vld [vmem:[#allocation7 + $0x1c] sm:$0xf]
    %v1505 = vld [vmem:[#allocation7 + $0x20] sm:$0xf]
    %v1506 = vld [vmem:[#allocation7 + $0x24] sm:$0xf]
    %v1507 = vld [vmem:[#allocation7 + $0x28] sm:$0xf]
    %v1508 = vld [vmem:[#allocation7 + $0x2c] sm:$0xf]
    %v1509 = vld [vmem:[#allocation7 + $0x30] sm:$0xf]
    %v1510 = vld [vmem:[#allocation7 + $0x34] sm:$0xf]
    %v1511 = vld [vmem:[#allocation7 + $0x38] sm:$0xf]
    %v1512 = vld [vmem:[#allocation7 + $0x3c] sm:$0xf]
    %v1513 = vld [vmem:[#allocation7 + $0x40] sm:$0xf]
    %v1514 = vld [vmem:[#allocation7 + $0x44] sm:$0xf]
    %v1515 = vld [vmem:[#allocation7 + $0x48] sm:$0xf]
    %v1516 = vld [vmem:[#allocation7 + $0x4c] sm:$0xf]
    %v1517 = vld [vmem:[#allocation7 + $0x50] sm:$0xf]
    %v1518 = vld [vmem:[#allocation7 + $0x54] sm:$0xf]
    %v1519 = vld [vmem:[#allocation7 + $0x58] sm:$0xf]
    %v1520 = vld [vmem:[#allocation7 + $0x5c] sm:$0xf]
    %v1521 = vld [vmem:[#allocation7 + $0x60] sm:$0xf]
    %v1522 = vld [vmem:[#allocation7 + $0x64] sm:$0xf]
    %v1523 = vld [vmem:[#allocation7 + $0x68] sm:$0xf]
    %v1524 = vld [vmem:[#allocation7 + $0x6c] sm:$0xf]
    %v1525 = vld [vmem:[#allocation7 + $0x70] sm:$0xf]
    %v1526 = vld [vmem:[#allocation7 + $0x74] sm:$0xf]
    %v1527 = vld [vmem:[#allocation7 + $0x78] sm:$0xf]
    %v1528 = vld [vmem:[#allocation7 + $0x7c] sm:$0xf]
    %v1529 = vld [vmem:[#allocation12 + $0x2] sm:$0x1]
    %v1530 = vlaneseq
    %v1531 = vshrl.u32 %v1530, 7
    %v1532 = vsub.s32 0, %v1531
    %v1533 = vrot.slane %v1529, %v1532
    %v1566 = vunpack.c.l.b16 %v1497
    %v1567 = vunpack.c.l.b16 %v1498
    %v1568 = vunpack.c.l.b16 %v1499
    %v1569 = vunpack.c.l.b16 %v1500
    %v1570 = vunpack.c.l.b16 %v1501
    %v1571 = vunpack.c.l.b16 %v1502
    %v1572 = vunpack.c.l.b16 %v1503
    %v1573 = vunpack.c.l.b16 %v1504
    %v1574 = vunpack.c.l.b16 %v1505
    %v1575 = vunpack.c.l.b16 %v1506
    %v1576 = vunpack.c.l.b16 %v1507
    %v1577 = vunpack.c.l.b16 %v1508
    %v1578 = vunpack.c.l.b16 %v1509
    %v1579 = vunpack.c.l.b16 %v1510
    %v1580 = vunpack.c.l.b16 %v1511
    %v1581 = vunpack.c.l.b16 %v1512
    %v1582 = vunpack.c.l.b16 %v1513
    %v1583 = vunpack.c.l.b16 %v1514
    %v1584 = vunpack.c.l.b16 %v1515
    %v1585 = vunpack.c.l.b16 %v1516
    %v1586 = vunpack.c.l.b16 %v1517
    %v1587 = vunpack.c.l.b16 %v1518
    %v1588 = vunpack.c.l.b16 %v1519
    %v1589 = vunpack.c.l.b16 %v1520
    %v1590 = vunpack.c.l.b16 %v1521
    %v1591 = vunpack.c.l.b16 %v1522
    %v1592 = vunpack.c.l.b16 %v1523
    %v1593 = vunpack.c.l.b16 %v1524
    %v1594 = vunpack.c.l.b16 %v1525
    %v1595 = vunpack.c.l.b16 %v1526
    %v1596 = vunpack.c.l.b16 %v1527
    %v1597 = vunpack.c.l.b16 %v1528
    %v1598 = vpack.c.b16 %v1567, %v1566
    %v1599 = vpack.c.b16 %v1569, %v1568
    %v1600 = vpack.c.b16 %v1571, %v1570
    %v1601 = vpack.c.b16 %v1573, %v1572
    %v1602 = vpack.c.b16 %v1575, %v1574
    %v1603 = vpack.c.b16 %v1577, %v1576
    %v1604 = vpack.c.b16 %v1579, %v1578
    %v1605 = vpack.c.b16 %v1581, %v1580
    %v1606 = vpack.c.b16 %v1583, %v1582
    %v1607 = vpack.c.b16 %v1585, %v1584
    %v1608 = vpack.c.b16 %v1587, %v1586
    %v1609 = vpack.c.b16 %v1589, %v1588
    %v1610 = vpack.c.b16 %v1591, %v1590
    %v1611 = vpack.c.b16 %v1593, %v1592
    %v1612 = vpack.c.b16 %v1595, %v1594
    %v1613 = vpack.c.b16 %v1597, %v1596
    %1630 = vmatprep.subr.bf16.mxu0 0
    %1631 = vmatpush1.bf16.msra.mxu0 %v1605
    %1632 = vmatprep.subr.bf16.mxu0 0
    %1633 = vmatpush1.bf16.msra.mxu0 %v1604
    %1634 = vmatprep.subr.bf16.mxu0 0
    %1635 = vmatpush1.bf16.msra.mxu0 %v1603
    %1636 = vmatprep.subr.bf16.mxu0 0
    %1637 = vmatpush1.bf16.msra.mxu0 %v1602
    %1638 = vmatprep.subr.bf16.mxu0 0
    %1639 = vmatpush1.bf16.msra.mxu0 %v1601
    %1640 = vmatprep.subr.bf16.mxu0 0
    %1641 = vmatpush1.bf16.msra.mxu0 %v1600
    %1642 = vmatprep.subr.bf16.mxu0 0
    %1643 = vmatpush1.bf16.msra.mxu0 %v1599
    %1644 = vmatprep.subr.bf16.mxu0 0
    %1645 = vmatpush1.bf16.msra.mxu0 %v1598
    %1646 = vmatprep.subr.bf16.mxu0 0
    %1647 = vmatpush2.bf16.msra.mxu0 %v1613
    %1648 = vmatprep.subr.bf16.mxu0 0
    %1649 = vmatpush2.bf16.msra.mxu0 %v1612
    %1650 = vmatprep.subr.bf16.mxu0 0
    %1651 = vmatpush2.bf16.msra.mxu0 %v1611
    %1652 = vmatprep.subr.bf16.mxu0 0
    %1653 = vmatpush2.bf16.msra.mxu0 %v1610
    %1654 = vmatprep.subr.bf16.mxu0 0
    %1655 = vmatpush2.bf16.msra.mxu0 %v1609
    %1656 = vmatprep.subr.bf16.mxu0 0
    %1657 = vmatpush2.bf16.msra.mxu0 %v1608
    %1658 = vmatprep.subr.bf16.mxu0 0
    %1659 = vmatpush2.bf16.msra.mxu0 %v1607
    %1660 = vmatprep.subr.bf16.mxu0 0
    %1661 = vmatpush2.bf16.msra.mxu0 %v1606
    %1662 = vmatprep.mubr.bf16.mxu0 %v1496
    %1663 = vmatmul.mubr.bf16.gmra.mxu0 %v1495
    %v1664 = vpop.f32.mrf.mxu0
    %v1665 = vadd.f32 %v1533, %v1664
    %v1666 = vpop.f32.mrf.mxu0
    %v1667 = vpop.f32.mrf.mxu0
    %v1668 = vadd.f32 %v1533, %v1667
    %v1669 = vpop.f32.mrf.mxu0
    %1670 = vdwg.mxu0
    %1671 = vst [vmem:[%s14] sm:$0xff] %v1665
    %1672 = vst [vmem:[%s14 + $0x8] sm:$0xff] %v1668
    %v1673 = vld [vmem:[%s1] sm:$0xff]
    %v1674 = vld [vmem:[%s1 + $0x8] sm:$0xff]
    %v1675 = vmul.f32 %v1665, 0.5
    %v1676 = vmul.f32 %v1668, 0.5
    %v1677 = vmul.f32 %v1675, 1.442695
    %v1678 = vpow.pop %v1677
    %v1679 = vmul.f32 %v1676, 1.442695
    %v1680 = vpow.pop %v1679
    %1683 = vrot.lane.b32.xlu0 %v1678, 112
    %v1684 = vpop.permute.xlu0 %1683
    %1685 = vrot.lane.b32.xlu0 %v1680, 112
    %v1686 = vpop.permute.xlu0 %1685
    %v1689 = vmul.f32 %v1673, %v1684
    %v1690 = vmul.f32 %v1674, %v1686
    %v1691 = vadd.f32 %v1665, %v1689
    %v1692 = vadd.f32 %v1668, %v1690
    %v1693 = vpack.c.bf16 %v1692, %v1691
    %v1694 = vld [vmem:[%s5] sm:$0xff]
    %v1695 = vld [vmem:[%s5 + $0x8] sm:$0xff]
    %v1698 = vunpack.c.l.b16 %v1694
    %v1699 = vunpack.c.h.b16 %v1694
    %v1700 = vunpack.c.l.b16 %v1695
    %v1701 = vunpack.c.h.b16 %v1695
    %v1702 = vpack.c.b16 %v1700, %v1698
    %v1703 = vpack.c.b16 %v1701, %v1699
    %v1707 = vsel %vm1414, %v1693, 0
    %1709 = vmatprep.subr.bf16.mxu0 0
    %1710 = vmatpush1.bf16.msra.mxu0 0
    %1711 = vmatprep.subr.bf16.mxu0 0
    %1712 = vmatpush1.bf16.msra.mxu0 0
    %1713 = vmatprep.subr.bf16.mxu0 0
    %1714 = vmatpush1.bf16.msra.mxu0 0
    %1715 = vmatprep.subr.bf16.mxu0 0
    %1716 = vmatpush1.bf16.msra.mxu0 0
    %1717 = vmatprep.subr.bf16.mxu0 0
    %1718 = vmatpush1.bf16.msra.mxu0 0
    %1719 = vmatprep.subr.bf16.mxu0 0
    %1720 = vmatpush1.bf16.msra.mxu0 0
    %1721 = vmatprep.subr.bf16.mxu0 0
    %1722 = vmatpush1.bf16.msra.mxu0 0
    %1723 = vmatprep.subr.bf16.mxu0 %v1703
    %1724 = vmatpush1.bf16.msra.mxu0 %v1702
    %1725 = vmatprep.subr.bf16.mxu0 0
    %1726 = vmatpush2.bf16.msra.mxu0 0
    %1727 = vmatprep.subr.bf16.mxu0 0
    %1728 = vmatpush2.bf16.msra.mxu0 0
    %1729 = vmatprep.subr.bf16.mxu0 0
    %1730 = vmatpush2.bf16.msra.mxu0 0
    %1731 = vmatprep.subr.bf16.mxu0 0
    %1732 = vmatpush2.bf16.msra.mxu0 0
    %1733 = vmatprep.subr.bf16.mxu0 0
    %1734 = vmatpush2.bf16.msra.mxu0 0
    %1735 = vmatprep.subr.bf16.mxu0 0
    %1736 = vmatpush2.bf16.msra.mxu0 0
    %1737 = vmatprep.subr.bf16.mxu0 0
    %1738 = vmatpush2.bf16.msra.mxu0 0
    %1739 = vmatprep.subr.bf16.mxu0 0
    %1740 = vmatpush2.bf16.msra.mxu0 0
    %1741 = vmatprep.mubr.bf16.mxu0 0
    %1742 = vmatmul.mubr.bf16.gmra.mxu0 %v1707
    %v1743 = vpop.f32.mrf.mxu0
    %v1744 = vadd.f32 0.0, %v1743
    %v1745 = vpop.f32.mrf.mxu0
    %v1746 = vadd.f32 0.0, %v1745
    %v1747 = vpop.f32.mrf.mxu0
    %v1748 = vadd.f32 0.0, %v1747
    %v1749 = vpop.f32.mrf.mxu0
    %v1750 = vadd.f32 0.0, %v1749
    %1751 = vdwg.mxu0
    %v1752 = vld [vmem:[#allocation12 + $0x3] sm:$0x1]
    %v1753 = vld [vmem:[#allocation12 + $0x4] sm:$0x1]
    %v1754 = vsel %vm1212, %v1744, 0.0
    %v1755 = vrot.slane %v1754, 4
    %v1756 = vadd.f32 %v1754, %v1755
    %v1757 = vrot.slane %v1756, 2
    %v1758 = vadd.f32 %v1756, %v1757
    %v1759 = vrot.slane %v1758, 1
    %v1760 = vadd.f32 %v1758, %v1759
    %v1761 = vsel %vm1212, %v1746, 0.0
    %v1762 = vrot.slane %v1761, 4
    %v1763 = vadd.f32 %v1761, %v1762
    %v1764 = vrot.slane %v1763, 2
    %v1765 = vadd.f32 %v1763, %v1764
    %v1766 = vrot.slane %v1765, 1
    %v1767 = vadd.f32 %v1765, %v1766
    %v1768 = vmul.f32 %v1744, %v1744
    %v1769 = vmul.f32 %v1746, %v1746
    %v1770 = vsel %vm1212, %v1768, 0.0
    %v1771 = vrot.slane %v1770, 4
    %v1772 = vadd.f32 %v1770, %v1771
    %v1773 = vrot.slane %v1772, 2
    %v1774 = vadd.f32 %v1772, %v1773
    %v1775 = vrot.slane %v1774, 1
    %v1776 = vadd.f32 %v1774, %v1775
    %v1777 = vsel %vm1212, %v1769, 0.0
    %v1778 = vrot.slane %v1777, 4
    %v1779 = vadd.f32 %v1777, %v1778
    %v1780 = vrot.slane %v1779, 2
    %v1781 = vadd.f32 %v1779, %v1780
    %v1782 = vrot.slane %v1781, 1
    %v1783 = vadd.f32 %v1781, %v1782
    %v1784 = vsel %vm1243, %v1760, %v1776
    %v1785 = vsel %vm1243, %v1767, %v1783
    %v1786 = vpack.c.bf16 %v1784, %v1784
    %v1787 = vpack.c.bf16 %v1785, %v1785
    %1788 = vmatprep.subr.bf16.mxu0 0
    %1789 = vmatpush1.bf16.msra.mxu0 %v1319
    %1790 = vmatprep.subr.bf16.mxu0 0
    %1791 = vmatpush1.bf16.msra.mxu0 %v1318
    %1792 = vmatprep.subr.bf16.mxu0 0
    %1793 = vmatpush1.bf16.msra.mxu0 %v1317
    %1794 = vmatprep.subr.bf16.mxu0 0
    %1795 = vmatpush1.bf16.msra.mxu0 %v1316
    %1796 = vmatprep.subr.bf16.mxu0 0
    %1797 = vmatpush1.bf16.msra.mxu0 %v1315
    %1798 = vmatprep.subr.bf16.mxu0 0
    %1799 = vmatpush1.bf16.msra.mxu0 %v1314
    %1800 = vmatprep.subr.bf16.mxu0 0
    %1801 = vmatpush1.bf16.msra.mxu0 %v1313
    %1802 = vmatprep.subr.bf16.mxu0 0
    %1803 = vmatpush1.bf16.msra.mxu0 %v1312
    %1804 = vmatprep.subr.bf16.mxu0 0
    %1805 = vmatpush2.bf16.msra.mxu0 %v1327
    %1806 = vmatprep.subr.bf16.mxu0 0
    %1807 = vmatpush2.bf16.msra.mxu0 %v1326
    %1808 = vmatprep.subr.bf16.mxu0 0
    %1809 = vmatpush2.bf16.msra.mxu0 %v1325
    %1810 = vmatprep.subr.bf16.mxu0 0
    %1811 = vmatpush2.bf16.msra.mxu0 %v1324
    %1812 = vmatprep.subr.bf16.mxu0 0
    %1813 = vmatpush2.bf16.msra.mxu0 %v1323
    %1814 = vmatprep.subr.bf16.mxu0 0
    %1815 = vmatpush2.bf16.msra.mxu0 %v1322
    %1816 = vmatprep.subr.bf16.mxu0 0
    %1817 = vmatpush2.bf16.msra.mxu0 %v1321
    %1818 = vmatprep.subr.bf16.mxu0 0
    %1819 = vmatpush2.bf16.msra.mxu0 %v1320
    %1820 = vmatprep.mubr.bf16.mxu0 %v1787
    %1821 = vmatmul.mubr.bf16.gmra.mxu0 %v1786
    %v1822 = vpop.f32.mrf.mxu0
    %v1823 = vadd.f32 0.0, %v1822
    %v1824 = vpop.f32.mrf.mxu0
    %v1825 = vpop.f32.mrf.mxu0
    %v1826 = vpop.f32.mrf.mxu0
    %1827 = vdwg.mxu0
    %v1828 = vmul.f32 %v1823, 0.03125
    %v1829 = vmul.f32 %v1828, %v1828
    %v1831 = vrot.slane %v1829, 7
    %v1833 = vsub.f32 %v1828, %v1831
    %v1834 = vmax.f32 %v1833, 0.0
    %v1835 = vadd.f32 %v1834, 1e-05
    %v1836 = vrsqrt.pop %v1835
    %v1838 = vrot.slane %v1836, 1
    %v1840 = vmul.f32 %v1752, %v1838
    %v1841 = vmul.f32 %v1828, %v1840
    %v1842 = vsub.f32 %v1753, %v1841
    %v1844 = vrot.slane %v1842, 7
    %v1846 = vsel %vm1243, %v1840, %v1844
    %v1847 = vpack.c.bf16 %v1846, %v1846
    %v1849 = vsel %vm1414, %v1847, 0
    %1851 = vmatprep.subr.bf16.mxu0 0
    %1852 = vmatpush1.bf16.msra.mxu0 0
    %1853 = vmatprep.subr.bf16.mxu0 0
    %1854 = vmatpush1.bf16.msra.mxu0 0
    %1855 = vmatprep.subr.bf16.mxu0 0
    %1856 = vmatpush1.bf16.msra.mxu0 0
    %1857 = vmatprep.subr.bf16.mxu0 0
    %1858 = vmatpush1.bf16.msra.mxu0 0
    %1859 = vmatprep.subr.bf16.mxu0 0
    %1860 = vmatpush1.bf16.msra.mxu0 0
    %1861 = vmatprep.subr.bf16.mxu0 0
    %1862 = vmatpush1.bf16.msra.mxu0 0
    %1863 = vmatprep.subr.bf16.mxu0 0
    %1864 = vmatpush1.bf16.msra.mxu0 0
    %1865 = vmatprep.subr.bf16.mxu0 %v1411
    %1866 = vmatpush1.bf16.msra.mxu0 %v1410
    %1867 = vmatprep.subr.bf16.mxu0 0
    %1868 = vmatpush2.bf16.msra.mxu0 0
    %1869 = vmatprep.subr.bf16.mxu0 0
    %1870 = vmatpush2.bf16.msra.mxu0 0
    %1871 = vmatprep.subr.bf16.mxu0 0
    %1872 = vmatpush2.bf16.msra.mxu0 0
    %1873 = vmatprep.subr.bf16.mxu0 0
    %1874 = vmatpush2.bf16.msra.mxu0 0
    %1875 = vmatprep.subr.bf16.mxu0 0
    %1876 = vmatpush2.bf16.msra.mxu0 0
    %1877 = vmatprep.subr.bf16.mxu0 0
    %1878 = vmatpush2.bf16.msra.mxu0 0
    %1879 = vmatprep.subr.bf16.mxu0 0
    %1880 = vmatpush2.bf16.msra.mxu0 0
    %1881 = vmatprep.subr.bf16.mxu0 0
    %1882 = vmatpush2.bf16.msra.mxu0 0
    %1883 = vmatprep.mubr.bf16.mxu0 0
    %1884 = vmatmul.mubr.bf16.gmra.mxu0 %v1849
    %v1885 = vpop.f32.mrf.mxu0
    %v1886 = vadd.f32 0.0, %v1885
    %v1887 = vpop.f32.mrf.mxu0
    %v1888 = vadd.f32 0.0, %v1887
    %v1889 = vpop.f32.mrf.mxu0
    %v1890 = vpop.f32.mrf.mxu0
    %1891 = vdwg.mxu0
    %v1892 = vlaneseq
    %v1893 = vshrl.u32 %v1892, 7
    %v1894 = vsub.s32 0, %v1893
    %v1895 = vrot.slane %v1886, %v1894
    %v1896 = vlaneseq
    %v1897 = vshrl.u32 %v1896, 7
    %v1898 = vsub.s32 0, %v1897
    %v1899 = vrot.slane %v1888, %v1898
    %v1900 = vmul.f32 %v1744, %v1895
    %v1901 = vmul.f32 %v1746, %v1899
    %v1902 = vmul.f32 %v1748, %v1895
    %v1903 = vmul.f32 %v1750, %v1899
    %v1904 = vlaneseq
    %v1905 = vshrl.u32 %v1904, 7
    %v1906 = vsub.s32 1, %v1905
    %v1907 = vrot.slane %v1886, %v1906
    %v1908 = vlaneseq
    %v1909 = vshrl.u32 %v1908, 7
    %v1910 = vsub.s32 1, %v1909
    %v1911 = vrot.slane %v1888, %v1910
    %v1912 = vadd.f32 %v1900, %v1907
    %v1913 = vadd.f32 %v1901, %v1911
    %v1914 = vadd.f32 %v1902, %v1907
    %v1915 = vadd.f32 %v1903, %v1911
    %vm1916 = vcmp.ge.f32.partialorder %v1912, 0.0
    %vm1917 = vcmp.ge.f32.partialorder %v1913, 0.0
    %vm1918 = vcmp.ge.f32.partialorder %v1914, 0.0
    %vm1919 = vcmp.ge.f32.partialorder %v1915, 0.0
    %v1920 = vmul.f32 %v1912, 0.2
    %v1921 = vmul.f32 %v1913, 0.2
    %v1922 = vmul.f32 %v1914, 0.2
    %v1923 = vmul.f32 %v1915, 0.2
    %v1924 = vsel %vm1916, %v1912, %v1920
    %v1925 = vsel %vm1917, %v1913, %v1921
    %v1926 = vsel %vm1918, %v1914, %v1922
    %v1927 = vsel %vm1919, %v1915, %v1923
    %s1928 = smul.u32 4, 32
    %s1929 = smul.u32 %s1928, 4
    %s1930 = sshll.u32 %s1929, 4
    %1931 = dma.done [#allocation4], %s1930
    %v1932 = vpack.c.bf16 %v1926, %v1924
    %v1933 = vpack.c.bf16 %v1927, %v1925
    %v1934 = vld [vmem:[#allocation2] sm:$0xff]
    %v1935 = vld [vmem:[#allocation2 + $0x8] sm:$0xff]
    %v1936 = vld [vmem:[#allocation2 + $0x10] sm:$0xff]
    %v1937 = vld [vmem:[#allocation2 + $0x18] sm:$0xff]
    %v1938 = vld [vmem:[#allocation2 + $0x20] sm:$0xff]
    %v1939 = vld [vmem:[#allocation2 + $0x28] sm:$0xff]
    %v1940 = vld [vmem:[#allocation2 + $0x30] sm:$0xff]
    %v1941 = vld [vmem:[#allocation2 + $0x38] sm:$0xff]
    %v1942 = vld [vmem:[#allocation2 + $0x40] sm:$0xff]
    %v1943 = vld [vmem:[#allocation2 + $0x48] sm:$0xff]
    %v1944 = vld [vmem:[#allocation2 + $0x50] sm:$0xff]
    %v1945 = vld [vmem:[#allocation2 + $0x58] sm:$0xff]
    %v1946 = vld [vmem:[#allocation2 + $0x60] sm:$0xff]
    %v1947 = vld [vmem:[#allocation2 + $0x68] sm:$0xff]
    %v1948 = vld [vmem:[#allocation2 + $0x70] sm:$0xff]
    %v1949 = vld [vmem:[#allocation2 + $0x78] sm:$0xff]
    %v1950 = vld [vmem:[#allocation2 + $0x80] sm:$0xff]
    %v1951 = vld [vmem:[#allocation2 + $0x88] sm:$0xff]
    %v1952 = vld [vmem:[#allocation2 + $0x90] sm:$0xff]
    %v1953 = vld [vmem:[#allocation2 + $0x98] sm:$0xff]
    %v1954 = vld [vmem:[#allocation2 + $0xa0] sm:$0xff]
    %v1955 = vld [vmem:[#allocation2 + $0xa8] sm:$0xff]
    %v1956 = vld [vmem:[#allocation2 + $0xb0] sm:$0xff]
    %v1957 = vld [vmem:[#allocation2 + $0xb8] sm:$0xff]
    %v1958 = vld [vmem:[#allocation2 + $0xc0] sm:$0xff]
    %v1959 = vld [vmem:[#allocation2 + $0xc8] sm:$0xff]
    %v1960 = vld [vmem:[#allocation2 + $0xd0] sm:$0xff]
    %v1961 = vld [vmem:[#allocation2 + $0xd8] sm:$0xff]
    %v1962 = vld [vmem:[#allocation2 + $0xe0] sm:$0xff]
    %v1963 = vld [vmem:[#allocation2 + $0xe8] sm:$0xff]
    %v1964 = vld [vmem:[#allocation2 + $0xf0] sm:$0xff]
    %v1965 = vld [vmem:[#allocation2 + $0xf8] sm:$0xff]
    %v1966 = vld [vmem:[#allocation2 + $0x100] sm:$0xff]
    %v1967 = vld [vmem:[#allocation2 + $0x108] sm:$0xff]
    %v1968 = vld [vmem:[#allocation2 + $0x110] sm:$0xff]
    %v1969 = vld [vmem:[#allocation2 + $0x118] sm:$0xff]
    %v1970 = vld [vmem:[#allocation2 + $0x120] sm:$0xff]
    %v1971 = vld [vmem:[#allocation2 + $0x128] sm:$0xff]
    %v1972 = vld [vmem:[#allocation2 + $0x130] sm:$0xff]
    %v1973 = vld [vmem:[#allocation2 + $0x138] sm:$0xff]
    %v1974 = vld [vmem:[#allocation2 + $0x140] sm:$0xff]
    %v1975 = vld [vmem:[#allocation2 + $0x148] sm:$0xff]
    %v1976 = vld [vmem:[#allocation2 + $0x150] sm:$0xff]
    %v1977 = vld [vmem:[#allocation2 + $0x158] sm:$0xff]
    %v1978 = vld [vmem:[#allocation2 + $0x160] sm:$0xff]
    %v1979 = vld [vmem:[#allocation2 + $0x168] sm:$0xff]
    %v1980 = vld [vmem:[#allocation2 + $0x170] sm:$0xff]
    %v1981 = vld [vmem:[#allocation2 + $0x178] sm:$0xff]
    %v1982 = vld [vmem:[#allocation2 + $0x180] sm:$0xff]
    %v1983 = vld [vmem:[#allocation2 + $0x188] sm:$0xff]
    %v1984 = vld [vmem:[#allocation2 + $0x190] sm:$0xff]
    %v1985 = vld [vmem:[#allocation2 + $0x198] sm:$0xff]
    %v1986 = vld [vmem:[#allocation2 + $0x1a0] sm:$0xff]
    %v1987 = vld [vmem:[#allocation2 + $0x1a8] sm:$0xff]
    %v1988 = vld [vmem:[#allocation2 + $0x1b0] sm:$0xff]
    %v1989 = vld [vmem:[#allocation2 + $0x1b8] sm:$0xff]
    %v1990 = vld [vmem:[#allocation2 + $0x1c0] sm:$0xff]
    %v1991 = vld [vmem:[#allocation2 + $0x1c8] sm:$0xff]
    %v1992 = vld [vmem:[#allocation2 + $0x1d0] sm:$0xff]
    %v1993 = vld [vmem:[#allocation2 + $0x1d8] sm:$0xff]
    %v1994 = vld [vmem:[#allocation2 + $0x1e0] sm:$0xff]
    %v1995 = vld [vmem:[#allocation2 + $0x1e8] sm:$0xff]
    %v1996 = vld [vmem:[#allocation2 + $0x1f0] sm:$0xff]
    %v1997 = vld [vmem:[#allocation2 + $0x1f8] sm:$0xff]
    %v2062 = vunpack.c.l.b16 %v1934
    %v2063 = vunpack.c.h.b16 %v1934
    %v2064 = vunpack.c.l.b16 %v1935
    %v2065 = vunpack.c.h.b16 %v1935
    %v2066 = vunpack.c.l.b16 %v1936
    %v2067 = vunpack.c.h.b16 %v1936
    %v2068 = vunpack.c.l.b16 %v1937
    %v2069 = vunpack.c.h.b16 %v1937
    %v2070 = vunpack.c.l.b16 %v1938
    %v2071 = vunpack.c.h.b16 %v1938
    %v2072 = vunpack.c.l.b16 %v1939
    %v2073 = vunpack.c.h.b16 %v1939
    %v2074 = vunpack.c.l.b16 %v1940
    %v2075 = vunpack.c.h.b16 %v1940
    %v2076 = vunpack.c.l.b16 %v1941
    %v2077 = vunpack.c.h.b16 %v1941
    %v2078 = vunpack.c.l.b16 %v1942
    %v2079 = vunpack.c.h.b16 %v1942
    %v2080 = vunpack.c.l.b16 %v1943
    %v2081 = vunpack.c.h.b16 %v1943
    %v2082 = vunpack.c.l.b16 %v1944
    %v2083 = vunpack.c.h.b16 %v1944
    %v2084 = vunpack.c.l.b16 %v1945
    %v2085 = vunpack.c.h.b16 %v1945
    %v2086 = vunpack.c.l.b16 %v1946
    %v2087 = vunpack.c.h.b16 %v1946
    %v2088 = vunpack.c.l.b16 %v1947
    %v2089 = vunpack.c.h.b16 %v1947
    %v2090 = vunpack.c.l.b16 %v1948
    %v2091 = vunpack.c.h.b16 %v1948
    %v2092 = vunpack.c.l.b16 %v1949
    %v2093 = vunpack.c.h.b16 %v1949
    %v2094 = vunpack.c.l.b16 %v1950
    %v2095 = vunpack.c.h.b16 %v1950
    %v2096 = vunpack.c.l.b16 %v1951
    %v2097 = vunpack.c.h.b16 %v1951
    %v2098 = vunpack.c.l.b16 %v1952
    %v2099 = vunpack.c.h.b16 %v1952
    %v2100 = vunpack.c.l.b16 %v1953
    %v2101 = vunpack.c.h.b16 %v1953
    %v2102 = vunpack.c.l.b16 %v1954
    %v2103 = vunpack.c.h.b16 %v1954
    %v2104 = vunpack.c.l.b16 %v1955
    %v2105 = vunpack.c.h.b16 %v1955
    %v2106 = vunpack.c.l.b16 %v1956
    %v2107 = vunpack.c.h.b16 %v1956
    %v2108 = vunpack.c.l.b16 %v1957
    %v2109 = vunpack.c.h.b16 %v1957
    %v2110 = vunpack.c.l.b16 %v1958
    %v2111 = vunpack.c.h.b16 %v1958
    %v2112 = vunpack.c.l.b16 %v1959
    %v2113 = vunpack.c.h.b16 %v1959
    %v2114 = vunpack.c.l.b16 %v1960
    %v2115 = vunpack.c.h.b16 %v1960
    %v2116 = vunpack.c.l.b16 %v1961
    %v2117 = vunpack.c.h.b16 %v1961
    %v2118 = vunpack.c.l.b16 %v1962
    %v2119 = vunpack.c.h.b16 %v1962
    %v2120 = vunpack.c.l.b16 %v1963
    %v2121 = vunpack.c.h.b16 %v1963
    %v2122 = vunpack.c.l.b16 %v1964
    %v2123 = vunpack.c.h.b16 %v1964
    %v2124 = vunpack.c.l.b16 %v1965
    %v2125 = vunpack.c.h.b16 %v1965
    %v2126 = vunpack.c.l.b16 %v1966
    %v2127 = vunpack.c.h.b16 %v1966
    %v2128 = vunpack.c.l.b16 %v1967
    %v2129 = vunpack.c.h.b16 %v1967
    %v2130 = vunpack.c.l.b16 %v1968
    %v2131 = vunpack.c.h.b16 %v1968
    %v2132 = vunpack.c.l.b16 %v1969
    %v2133 = vunpack.c.h.b16 %v1969
    %v2134 = vunpack.c.l.b16 %v1970
    %v2135 = vunpack.c.h.b16 %v1970
    %v2136 = vunpack.c.l.b16 %v1971
    %v2137 = vunpack.c.h.b16 %v1971
    %v2138 = vunpack.c.l.b16 %v1972
    %v2139 = vunpack.c.h.b16 %v1972
    %v2140 = vunpack.c.l.b16 %v1973
    %v2141 = vunpack.c.h.b16 %v1973
    %v2142 = vunpack.c.l.b16 %v1974
    %v2143 = vunpack.c.h.b16 %v1974
    %v2144 = vunpack.c.l.b16 %v1975
    %v2145 = vunpack.c.h.b16 %v1975
    %v2146 = vunpack.c.l.b16 %v1976
    %v2147 = vunpack.c.h.b16 %v1976
    %v2148 = vunpack.c.l.b16 %v1977
    %v2149 = vunpack.c.h.b16 %v1977
    %v2150 = vunpack.c.l.b16 %v1978
    %v2151 = vunpack.c.h.b16 %v1978
    %v2152 = vunpack.c.l.b16 %v1979
    %v2153 = vunpack.c.h.b16 %v1979
    %v2154 = vunpack.c.l.b16 %v1980
    %v2155 = vunpack.c.h.b16 %v1980
    %v2156 = vunpack.c.l.b16 %v1981
    %v2157 = vunpack.c.h.b16 %v1981
    %v2158 = vunpack.c.l.b16 %v1982
    %v2159 = vunpack.c.h.b16 %v1982
    %v2160 = vunpack.c.l.b16 %v1983
    %v2161 = vunpack.c.h.b16 %v1983
    %v2162 = vunpack.c.l.b16 %v1984
    %v2163 = vunpack.c.h.b16 %v1984
    %v2164 = vunpack.c.l.b16 %v1985
    %v2165 = vunpack.c.h.b16 %v1985
    %v2166 = vunpack.c.l.b16 %v1986
    %v2167 = vunpack.c.h.b16 %v1986
    %v2168 = vunpack.c.l.b16 %v1987
    %v2169 = vunpack.c.h.b16 %v1987
    %v2170 = vunpack.c.l.b16 %v1988
    %v2171 = vunpack.c.h.b16 %v1988
    %v2172 = vunpack.c.l.b16 %v1989
    %v2173 = vunpack.c.h.b16 %v1989
    %v2174 = vunpack.c.l.b16 %v1990
    %v2175 = vunpack.c.h.b16 %v1990
    %v2176 = vunpack.c.l.b16 %v1991
    %v2177 = vunpack.c.h.b16 %v1991
    %v2178 = vunpack.c.l.b16 %v1992
    %v2179 = vunpack.c.h.b16 %v1992
    %v2180 = vunpack.c.l.b16 %v1993
    %v2181 = vunpack.c.h.b16 %v1993
    %v2182 = vunpack.c.l.b16 %v1994
    %v2183 = vunpack.c.h.b16 %v1994
    %v2184 = vunpack.c.l.b16 %v1995
    %v2185 = vunpack.c.h.b16 %v1995
    %v2186 = vunpack.c.l.b16 %v1996
    %v2187 = vunpack.c.h.b16 %v1996
    %v2188 = vunpack.c.l.b16 %v1997
    %v2189 = vunpack.c.h.b16 %v1997
    %v2190 = vpack.c.b16 %v2066, %v2062
    %v2191 = vpack.c.b16 %v2067, %v2063
    %v2192 = vpack.c.b16 %v2068, %v2064
    %v2193 = vpack.c.b16 %v2069, %v2065
    %v2194 = vpack.c.b16 %v2074, %v2070
    %v2195 = vpack.c.b16 %v2075, %v2071
    %v2196 = vpack.c.b16 %v2076, %v2072
    %v2197 = vpack.c.b16 %v2077, %v2073
    %v2198 = vpack.c.b16 %v2082, %v2078
    %v2199 = vpack.c.b16 %v2083, %v2079
    %v2200 = vpack.c.b16 %v2084, %v2080
    %v2201 = vpack.c.b16 %v2085, %v2081
    %v2202 = vpack.c.b16 %v2090, %v2086
    %v2203 = vpack.c.b16 %v2091, %v2087
    %v2204 = vpack.c.b16 %v2092, %v2088
    %v2205 = vpack.c.b16 %v2093, %v2089
    %v2206 = vpack.c.b16 %v2098, %v2094
    %v2207 = vpack.c.b16 %v2099, %v2095
    %v2208 = vpack.c.b16 %v2100, %v2096
    %v2209 = vpack.c.b16 %v2101, %v2097
    %v2210 = vpack.c.b16 %v2106, %v2102
    %v2211 = vpack.c.b16 %v2107, %v2103
    %v2212 = vpack.c.b16 %v2108, %v2104
    %v2213 = vpack.c.b16 %v2109, %v2105
    %v2214 = vpack.c.b16 %v2114, %v2110
    %v2215 = vpack.c.b16 %v2115, %v2111
    %v2216 = vpack.c.b16 %v2116, %v2112
    %v2217 = vpack.c.b16 %v2117, %v2113
    %v2218 = vpack.c.b16 %v2122, %v2118
    %v2219 = vpack.c.b16 %v2123, %v2119
    %v2220 = vpack.c.b16 %v2124, %v2120
    %v2221 = vpack.c.b16 %v2125, %v2121
    %v2222 = vpack.c.b16 %v2130, %v2126
    %v2223 = vpack.c.b16 %v2131, %v2127
    %v2224 = vpack.c.b16 %v2132, %v2128
    %v2225 = vpack.c.b16 %v2133, %v2129
    %v2226 = vpack.c.b16 %v2138, %v2134
    %v2227 = vpack.c.b16 %v2139, %v2135
    %v2228 = vpack.c.b16 %v2140, %v2136
    %v2229 = vpack.c.b16 %v2141, %v2137
    %v2230 = vpack.c.b16 %v2146, %v2142
    %v2231 = vpack.c.b16 %v2147, %v2143
    %v2232 = vpack.c.b16 %v2148, %v2144
    %v2233 = vpack.c.b16 %v2149, %v2145
    %v2234 = vpack.c.b16 %v2154, %v2150
    %v2235 = vpack.c.b16 %v2155, %v2151
    %v2236 = vpack.c.b16 %v2156, %v2152
    %v2237 = vpack.c.b16 %v2157, %v2153
    %v2238 = vpack.c.b16 %v2162, %v2158
    %v2239 = vpack.c.b16 %v2163, %v2159
    %v2240 = vpack.c.b16 %v2164, %v2160
    %v2241 = vpack.c.b16 %v2165, %v2161
    %v2242 = vpack.c.b16 %v2170, %v2166
    %v2243 = vpack.c.b16 %v2171, %v2167
    %v2244 = vpack.c.b16 %v2172, %v2168
    %v2245 = vpack.c.b16 %v2173, %v2169
    %v2246 = vpack.c.b16 %v2178, %v2174
    %v2247 = vpack.c.b16 %v2179, %v2175
    %v2248 = vpack.c.b16 %v2180, %v2176
    %v2249 = vpack.c.b16 %v2181, %v2177
    %v2250 = vpack.c.b16 %v2186, %v2182
    %v2251 = vpack.c.b16 %v2187, %v2183
    %v2252 = vpack.c.b16 %v2188, %v2184
    %v2253 = vpack.c.b16 %v2189, %v2185
    %2318 = vmatprep.subr.bf16.mxu0 %v2219
    %2319 = vmatpush1.bf16.msra.mxu0 %v2218
    %2320 = vmatprep.subr.bf16.mxu0 %v2215
    %2321 = vmatpush1.bf16.msra.mxu0 %v2214
    %2322 = vmatprep.subr.bf16.mxu0 %v2211
    %2323 = vmatpush1.bf16.msra.mxu0 %v2210
    %2324 = vmatprep.subr.bf16.mxu0 %v2207
    %2325 = vmatpush1.bf16.msra.mxu0 %v2206
    %2326 = vmatprep.subr.bf16.mxu0 %v2203
    %2327 = vmatpush1.bf16.msra.mxu0 %v2202
    %2328 = vmatprep.subr.bf16.mxu0 %v2199
    %2329 = vmatpush1.bf16.msra.mxu0 %v2198
    %2330 = vmatprep.subr.bf16.mxu0 %v2195
    %2331 = vmatpush1.bf16.msra.mxu0 %v2194
    %2332 = vmatprep.subr.bf16.mxu0 %v2191
    %2333 = vmatpush1.bf16.msra.mxu0 %v2190
    %2334 = vmatprep.subr.bf16.mxu0 %v2251
    %2335 = vmatpush2.bf16.msra.mxu0 %v2250
    %2336 = vmatprep.subr.bf16.mxu0 %v2247
    %2337 = vmatpush2.bf16.msra.mxu0 %v2246
    %2338 = vmatprep.subr.bf16.mxu0 %v2243
    %2339 = vmatpush2.bf16.msra.mxu0 %v2242
    %2340 = vmatprep.subr.bf16.mxu0 %v2239
    %2341 = vmatpush2.bf16.msra.mxu0 %v2238
    %2342 = vmatprep.subr.bf16.mxu0 %v2235
    %2343 = vmatpush2.bf16.msra.mxu0 %v2234
    %2344 = vmatprep.subr.bf16.mxu0 %v2231
    %2345 = vmatpush2.bf16.msra.mxu0 %v2230
    %2346 = vmatprep.subr.bf16.mxu0 %v2227
    %2347 = vmatpush2.bf16.msra.mxu0 %v2226
    %2348 = vmatprep.subr.bf16.mxu0 %v2223
    %2349 = vmatpush2.bf16.msra.mxu0 %v2222
    %2350 = vmatprep.mubr.bf16.mxu0 %v1933
    %2351 = vmatmul.mubr.bf16.gmra.mxu0 %v1932
    %v2352 = vpop.f32.mrf.mxu0
    %v2353 = vadd.f32 0.0, %v2352
    %v2354 = vpop.f32.mrf.mxu0
    %v2355 = vadd.f32 0.0, %v2354
    %v2356 = vpop.f32.mrf.mxu0
    %v2357 = vadd.f32 0.0, %v2356
    %v2358 = vpop.f32.mrf.mxu0
    %v2359 = vadd.f32 0.0, %v2358
    %2360 = vdwg.mxu0
    %2361 = vmatprep.subr.bf16.mxu0 %v2221
    %2362 = vmatpush1.bf16.msra.mxu0 %v2220
    %2363 = vmatprep.subr.bf16.mxu0 %v2217
    %2364 = vmatpush1.bf16.msra.mxu0 %v2216
    %2365 = vmatprep.subr.bf16.mxu0 %v2213
    %2366 = vmatpush1.bf16.msra.mxu0 %v2212
    %2367 = vmatprep.subr.bf16.mxu0 %v2209
    %2368 = vmatpush1.bf16.msra.mxu0 %v2208
    %2369 = vmatprep.subr.bf16.mxu0 %v2205
    %2370 = vmatpush1.bf16.msra.mxu0 %v2204
    %2371 = vmatprep.subr.bf16.mxu0 %v2201
    %2372 = vmatpush1.bf16.msra.mxu0 %v2200
    %2373 = vmatprep.subr.bf16.mxu0 %v2197
    %2374 = vmatpush1.bf16.msra.mxu0 %v2196
    %2375 = vmatprep.subr.bf16.mxu0 %v2193
    %2376 = vmatpush1.bf16.msra.mxu0 %v2192
    %2377 = vmatprep.subr.bf16.mxu0 %v2253
    %2378 = vmatpush2.bf16.msra.mxu0 %v2252
    %2379 = vmatprep.subr.bf16.mxu0 %v2249
    %2380 = vmatpush2.bf16.msra.mxu0 %v2248
    %2381 = vmatprep.subr.bf16.mxu0 %v2245
    %2382 = vmatpush2.bf16.msra.mxu0 %v2244
    %2383 = vmatprep.subr.bf16.mxu0 %v2241
    %2384 = vmatpush2.bf16.msra.mxu0 %v2240
    %2385 = vmatprep.subr.bf16.mxu0 %v2237
    %2386 = vmatpush2.bf16.msra.mxu0 %v2236
    %2387 = vmatprep.subr.bf16.mxu0 %v2233
    %2388 = vmatpush2.bf16.msra.mxu0 %v2232
    %2389 = vmatprep.subr.bf16.mxu0 %v2229
    %2390 = vmatpush2.bf16.msra.mxu0 %v2228
    %2391 = vmatprep.subr.bf16.mxu0 %v2225
    %2392 = vmatpush2.bf16.msra.mxu0 %v2224
    %2393 = vmatprep.mubr.bf16.mxu0 %v1933
    %2394 = vmatmul.mubr.bf16.gmra.mxu0 %v1932
    %v2395 = vpop.f32.mrf.mxu0
    %v2396 = vadd.f32 0.0, %v2395
    %v2397 = vpop.f32.mrf.mxu0
    %v2398 = vadd.f32 0.0, %v2397
    %v2399 = vpop.f32.mrf.mxu0
    %v2400 = vadd.f32 0.0, %v2399
    %v2401 = vpop.f32.mrf.mxu0
    %v2402 = vadd.f32 0.0, %v2401
    %2403 = vdwg.mxu0
    %v2404 = vld [vmem:[#allocation12 + $0x5] sm:$0x1]
    %v2405 = vld [vmem:[#allocation12 + $0x6] sm:$0x1]
    %v2406 = vsel %vm1212, %v2353, 0.0
    %v2407 = vrot.slane %v2406, 4
    %v2408 = vadd.f32 %v2406, %v2407
    %v2409 = vrot.slane %v2408, 2
    %v2410 = vadd.f32 %v2408, %v2409
    %v2411 = vrot.slane %v2410, 1
    %v2412 = vadd.f32 %v2410, %v2411
    %v2413 = vsel %vm1212, %v2355, 0.0
    %v2414 = vrot.slane %v2413, 4
    %v2415 = vadd.f32 %v2413, %v2414
    %v2416 = vrot.slane %v2415, 2
    %v2417 = vadd.f32 %v2415, %v2416
    %v2418 = vrot.slane %v2417, 1
    %v2419 = vadd.f32 %v2417, %v2418
    %v2420 = vsel %vm1212, %v2396, 0.0
    %v2421 = vrot.slane %v2420, 4
    %v2422 = vadd.f32 %v2420, %v2421
    %v2423 = vrot.slane %v2422, 2
    %v2424 = vadd.f32 %v2422, %v2423
    %v2425 = vrot.slane %v2424, 1
    %v2426 = vadd.f32 %v2424, %v2425
    %v2427 = vsel %vm1212, %v2398, 0.0
    %v2428 = vrot.slane %v2427, 4
    %v2429 = vadd.f32 %v2427, %v2428
    %v2430 = vrot.slane %v2429, 2
    %v2431 = vadd.f32 %v2429, %v2430
    %v2432 = vrot.slane %v2431, 1
    %v2433 = vadd.f32 %v2431, %v2432
    %v2434 = vmul.f32 %v2353, %v2353
    %v2435 = vmul.f32 %v2355, %v2355
    %v2436 = vmul.f32 %v2396, %v2396
    %v2437 = vmul.f32 %v2398, %v2398
    %v2438 = vsel %vm1212, %v2434, 0.0
    %v2439 = vrot.slane %v2438, 4
    %v2440 = vadd.f32 %v2438, %v2439
    %v2441 = vrot.slane %v2440, 2
    %v2442 = vadd.f32 %v2440, %v2441
    %v2443 = vrot.slane %v2442, 1
    %v2444 = vadd.f32 %v2442, %v2443
    %v2445 = vsel %vm1212, %v2435, 0.0
    %v2446 = vrot.slane %v2445, 4
    %v2447 = vadd.f32 %v2445, %v2446
    %v2448 = vrot.slane %v2447, 2
    %v2449 = vadd.f32 %v2447, %v2448
    %v2450 = vrot.slane %v2449, 1
    %v2451 = vadd.f32 %v2449, %v2450
    %v2452 = vsel %vm1212, %v2436, 0.0
    %v2453 = vrot.slane %v2452, 4
    %v2454 = vadd.f32 %v2452, %v2453
    %v2455 = vrot.slane %v2454, 2
    %v2456 = vadd.f32 %v2454, %v2455
    %v2457 = vrot.slane %v2456, 1
    %v2458 = vadd.f32 %v2456, %v2457
    %v2459 = vsel %vm1212, %v2437, 0.0
    %v2460 = vrot.slane %v2459, 4
    %v2461 = vadd.f32 %v2459, %v2460
    %v2462 = vrot.slane %v2461, 2
    %v2463 = vadd.f32 %v2461, %v2462
    %v2464 = vrot.slane %v2463, 1
    %v2465 = vadd.f32 %v2463, %v2464
    %v2466 = vsel %vm1243, %v2412, %v2444
    %v2467 = vsel %vm1243, %v2419, %v2451
    %v2468 = vsel %vm1243, %v2426, %v2458
    %v2469 = vsel %vm1243, %v2433, %v2465
    %v2470 = vpack.c.bf16 %v2466, %v2466
    %v2471 = vpack.c.bf16 %v2467, %v2467
    %v2472 = vpack.c.bf16 %v2468, %v2468
    %v2473 = vpack.c.bf16 %v2469, %v2469
    %v2538 = vunpack.c.l.b16 %v164
    %v2539 = vunpack.c.l.b16 %v165
    %v2540 = vunpack.c.l.b16 %v166
    %v2541 = vunpack.c.l.b16 %v167
    %v2542 = vunpack.c.l.b16 %v168
    %v2543 = vunpack.c.l.b16 %v169
    %v2544 = vunpack.c.l.b16 %v170
    %v2545 = vunpack.c.l.b16 %v171
    %v2546 = vunpack.c.l.b16 %v172
    %v2547 = vunpack.c.l.b16 %v173
    %v2548 = vunpack.c.l.b16 %v174
    %v2549 = vunpack.c.l.b16 %v175
    %v2550 = vunpack.c.l.b16 %v176
    %v2551 = vunpack.c.l.b16 %v177
    %v2552 = vunpack.c.l.b16 %v178
    %v2553 = vunpack.c.l.b16 %v179
    %v2554 = vunpack.c.l.b16 %v180
    %v2555 = vunpack.c.l.b16 %v181
    %v2556 = vunpack.c.l.b16 %v182
    %v2557 = vunpack.c.l.b16 %v183
    %v2558 = vunpack.c.l.b16 %v184
    %v2559 = vunpack.c.l.b16 %v185
    %v2560 = vunpack.c.l.b16 %v186
    %v2561 = vunpack.c.l.b16 %v187
    %v2562 = vunpack.c.l.b16 %v188
    %v2563 = vunpack.c.l.b16 %v189
    %v2564 = vunpack.c.l.b16 %v190
    %v2565 = vunpack.c.l.b16 %v191
    %v2566 = vunpack.c.l.b16 %v192
    %v2567 = vunpack.c.l.b16 %v193
    %v2568 = vunpack.c.l.b16 %v194
    %v2569 = vunpack.c.l.b16 %v195
    %v2570 = vunpack.c.l.b16 %v196
    %v2571 = vunpack.c.l.b16 %v197
    %v2572 = vunpack.c.l.b16 %v198
    %v2573 = vunpack.c.l.b16 %v199
    %v2574 = vunpack.c.l.b16 %v200
    %v2575 = vunpack.c.l.b16 %v201
    %v2576 = vunpack.c.l.b16 %v202
    %v2577 = vunpack.c.l.b16 %v203
    %v2578 = vunpack.c.l.b16 %v204
    %v2579 = vunpack.c.l.b16 %v205
    %v2580 = vunpack.c.l.b16 %v206
    %v2581 = vunpack.c.l.b16 %v207
    %v2582 = vunpack.c.l.b16 %v208
    %v2583 = vunpack.c.l.b16 %v209
    %v2584 = vunpack.c.l.b16 %v210
    %v2585 = vunpack.c.l.b16 %v211
    %v2586 = vunpack.c.l.b16 %v212
    %v2587 = vunpack.c.l.b16 %v213
    %v2588 = vunpack.c.l.b16 %v214
    %v2589 = vunpack.c.l.b16 %v215
    %v2590 = vunpack.c.l.b16 %v216
    %v2591 = vunpack.c.l.b16 %v217
    %v2592 = vunpack.c.l.b16 %v218
    %v2593 = vunpack.c.l.b16 %v219
    %v2594 = vunpack.c.l.b16 %v220
    %v2595 = vunpack.c.l.b16 %v221
    %v2596 = vunpack.c.l.b16 %v222
    %v2597 = vunpack.c.l.b16 %v223
    %v2598 = vunpack.c.l.b16 %v224
    %v2599 = vunpack.c.l.b16 %v225
    %v2600 = vunpack.c.l.b16 %v226
    %v2601 = vunpack.c.l.b16 %v227
    %v2602 = vpack.c.b16 %v2539, %v2538
    %v2603 = vpack.c.b16 %v2541, %v2540
    %v2604 = vpack.c.b16 %v2543, %v2542
    %v2605 = vpack.c.b16 %v2545, %v2544
    %v2606 = vpack.c.b16 %v2547, %v2546
    %v2607 = vpack.c.b16 %v2549, %v2548
    %v2608 = vpack.c.b16 %v2551, %v2550
    %v2609 = vpack.c.b16 %v2553, %v2552
    %v2610 = vpack.c.b16 %v2555, %v2554
    %v2611 = vpack.c.b16 %v2557, %v2556
    %v2612 = vpack.c.b16 %v2559, %v2558
    %v2613 = vpack.c.b16 %v2561, %v2560
    %v2614 = vpack.c.b16 %v2563, %v2562
    %v2615 = vpack.c.b16 %v2565, %v2564
    %v2616 = vpack.c.b16 %v2567, %v2566
    %v2617 = vpack.c.b16 %v2569, %v2568
    %v2618 = vpack.c.b16 %v2571, %v2570
    %v2619 = vpack.c.b16 %v2573, %v2572
    %v2620 = vpack.c.b16 %v2575, %v2574
    %v2621 = vpack.c.b16 %v2577, %v2576
    %v2622 = vpack.c.b16 %v2579, %v2578
    %v2623 = vpack.c.b16 %v2581, %v2580
    %v2624 = vpack.c.b16 %v2583, %v2582
    %v2625 = vpack.c.b16 %v2585, %v2584
    %v2626 = vpack.c.b16 %v2587, %v2586
    %v2627 = vpack.c.b16 %v2589, %v2588
    %v2628 = vpack.c.b16 %v2591, %v2590
    %v2629 = vpack.c.b16 %v2593, %v2592
    %v2630 = vpack.c.b16 %v2595, %v2594
    %v2631 = vpack.c.b16 %v2597, %v2596
    %v2632 = vpack.c.b16 %v2599, %v2598
    %v2633 = vpack.c.b16 %v2601, %v2600
    %2666 = vmatprep.subr.bf16.mxu0 0
    %2667 = vmatpush1.bf16.msra.mxu0 %v2609
    %2668 = vmatprep.subr.bf16.mxu0 0
    %2669 = vmatpush1.bf16.msra.mxu0 %v2608
    %2670 = vmatprep.subr.bf16.mxu0 0
    %2671 = vmatpush1.bf16.msra.mxu0 %v2607
    %2672 = vmatprep.subr.bf16.mxu0 0
    %2673 = vmatpush1.bf16.msra.mxu0 %v2606
    %2674 = vmatprep.subr.bf16.mxu0 0
    %2675 = vmatpush1.bf16.msra.mxu0 %v2605
    %2676 = vmatprep.subr.bf16.mxu0 0
    %2677 = vmatpush1.bf16.msra.mxu0 %v2604
    %2678 = vmatprep.subr.bf16.mxu0 0
    %2679 = vmatpush1.bf16.msra.mxu0 %v2603
    %2680 = vmatprep.subr.bf16.mxu0 0
    %2681 = vmatpush1.bf16.msra.mxu0 %v2602
    %2682 = vmatprep.subr.bf16.mxu0 0
    %2683 = vmatpush2.bf16.msra.mxu0 %v2617
    %2684 = vmatprep.subr.bf16.mxu0 0
    %2685 = vmatpush2.bf16.msra.mxu0 %v2616
    %2686 = vmatprep.subr.bf16.mxu0 0
    %2687 = vmatpush2.bf16.msra.mxu0 %v2615
    %2688 = vmatprep.subr.bf16.mxu0 0
    %2689 = vmatpush2.bf16.msra.mxu0 %v2614
    %2690 = vmatprep.subr.bf16.mxu0 0
    %2691 = vmatpush2.bf16.msra.mxu0 %v2613
    %2692 = vmatprep.subr.bf16.mxu0 0
    %2693 = vmatpush2.bf16.msra.mxu0 %v2612
    %2694 = vmatprep.subr.bf16.mxu0 0
    %2695 = vmatpush2.bf16.msra.mxu0 %v2611
    %2696 = vmatprep.subr.bf16.mxu0 0
    %2697 = vmatpush2.bf16.msra.mxu0 %v2610
    %2698 = vmatprep.mubr.bf16.mxu0 %v2471
    %2699 = vmatmul.mubr.bf16.gmra.mxu0 %v2470
    %v2700 = vpop.f32.mrf.mxu0
    %v2701 = vadd.f32 0.0, %v2700
    %v2702 = vpop.f32.mrf.mxu0
    %v2703 = vpop.f32.mrf.mxu0
    %v2704 = vpop.f32.mrf.mxu0
    %2705 = vdwg.mxu0
    %2706 = vmatprep.subr.bf16.mxu0 0
    %2707 = vmatpush1.bf16.msra.mxu0 %v2625
    %2708 = vmatprep.subr.bf16.mxu0 0
    %2709 = vmatpush1.bf16.msra.mxu0 %v2624
    %2710 = vmatprep.subr.bf16.mxu0 0
    %2711 = vmatpush1.bf16.msra.mxu0 %v2623
    %2712 = vmatprep.subr.bf16.mxu0 0
    %2713 = vmatpush1.bf16.msra.mxu0 %v2622
    %2714 = vmatprep.subr.bf16.mxu0 0
    %2715 = vmatpush1.bf16.msra.mxu0 %v2621
    %2716 = vmatprep.subr.bf16.mxu0 0
    %2717 = vmatpush1.bf16.msra.mxu0 %v2620
    %2718 = vmatprep.subr.bf16.mxu0 0
    %2719 = vmatpush1.bf16.msra.mxu0 %v2619
    %2720 = vmatprep.subr.bf16.mxu0 0
    %2721 = vmatpush1.bf16.msra.mxu0 %v2618
    %2722 = vmatprep.subr.bf16.mxu0 0
    %2723 = vmatpush2.bf16.msra.mxu0 %v2633
    %2724 = vmatprep.subr.bf16.mxu0 0
    %2725 = vmatpush2.bf16.msra.mxu0 %v2632
    %2726 = vmatprep.subr.bf16.mxu0 0
    %2727 = vmatpush2.bf16.msra.mxu0 %v2631
    %2728 = vmatprep.subr.bf16.mxu0 0
    %2729 = vmatpush2.bf16.msra.mxu0 %v2630
    %2730 = vmatprep.subr.bf16.mxu0 0
    %2731 = vmatpush2.bf16.msra.mxu0 %v2629
    %2732 = vmatprep.subr.bf16.mxu0 0
    %2733 = vmatpush2.bf16.msra.mxu0 %v2628
    %2734 = vmatprep.subr.bf16.mxu0 0
    %2735 = vmatpush2.bf16.msra.mxu0 %v2627
    %2736 = vmatprep.subr.bf16.mxu0 0
    %2737 = vmatpush2.bf16.msra.mxu0 %v2626
    %2738 = vmatprep.mubr.bf16.mxu0 %v2473
    %2739 = vmatmul.mubr.bf16.gmra.mxu0 %v2472
    %v2740 = vpop.f32.mrf.mxu0
    %v2741 = vadd.f32 %v2701, %v2740
    %v2742 = vpop.f32.mrf.mxu0
    %v2743 = vpop.f32.mrf.mxu0
    %v2744 = vpop.f32.mrf.mxu0
    %2745 = vdwg.mxu0
    %v2746 = vmul.f32 %v2741, 0.0078125
    %v2747 = vmul.f32 %v2746, %v2746
    %v2749 = vrot.slane %v2747, 7
    %v2751 = vsub.f32 %v2746, %v2749
    %v2752 = vmax.f32 %v2751, 0.0
    %v2753 = vadd.f32 %v2752, 1e-05
    %v2754 = vrsqrt.pop %v2753
    %v2756 = vrot.slane %v2754, 1
    %v2758 = vmul.f32 %v2404, %v2756
    %v2759 = vmul.f32 %v2746, %v2758
    %v2760 = vsub.f32 %v2405, %v2759
    %v2762 = vrot.slane %v2760, 7
    %v2764 = vsel %vm1243, %v2758, %v2762
    %v2765 = vpack.c.bf16 %v2764, %v2764
    %v2768 = vunpack.c.l.b16 %v228
    %v2769 = vunpack.c.h.b16 %v228
    %v2770 = vunpack.c.l.b16 %v229
    %v2771 = vunpack.c.h.b16 %v229
    %v2772 = vpack.c.b16 %v2768, %v2768
    %v2773 = vpack.c.b16 %v2769, %v2769
    %v2774 = vpack.c.b16 %v2770, %v2770
    %v2775 = vpack.c.b16 %v2771, %v2771
    %vm2776 = vcmask 64512
    %v2778 = vsel %vm2776, %v2765, 0
    %vm2780 = vcmask 1043456
    %v2782 = vsel %vm2780, %v2772, 0
    %v2785 = vsel %vm2780, %v2773, 0
    %v2788 = vsel %vm2780, %v2774, 0
    %v2791 = vsel %vm2780, %v2775, 0
    %2793 = vmatprep.subr.bf16.mxu0 0
    %2794 = vmatpush1.bf16.msra.mxu0 0
    %2795 = vmatprep.subr.bf16.mxu0 0
    %2796 = vmatpush1.bf16.msra.mxu0 0
    %2797 = vmatprep.subr.bf16.mxu0 0
    %2798 = vmatpush1.bf16.msra.mxu0 0
    %2799 = vmatprep.subr.bf16.mxu0 0
    %2800 = vmatpush1.bf16.msra.mxu0 0
    %2801 = vmatprep.subr.bf16.mxu0 0
    %2802 = vmatpush1.bf16.msra.mxu0 0
    %2803 = vmatprep.subr.bf16.mxu0 0
    %2804 = vmatpush1.bf16.msra.mxu0 0
    %2805 = vmatprep.subr.bf16.mxu0 0
    %2806 = vmatpush1.bf16.msra.mxu0 0
    %2807 = vmatprep.subr.bf16.mxu0 %v2785
    %2808 = vmatpush1.bf16.msra.mxu0 %v2782
    %2809 = vmatprep.subr.bf16.mxu0 0
    %2810 = vmatpush2.bf16.msra.mxu0 0
    %2811 = vmatprep.subr.bf16.mxu0 0
    %2812 = vmatpush2.bf16.msra.mxu0 0
    %2813 = vmatprep.subr.bf16.mxu0 0
    %2814 = vmatpush2.bf16.msra.mxu0 0
    %2815 = vmatprep.subr.bf16.mxu0 0
    %2816 = vmatpush2.bf16.msra.mxu0 0
    %2817 = vmatprep.subr.bf16.mxu0 0
    %2818 = vmatpush2.bf16.msra.mxu0 0
    %2819 = vmatprep.subr.bf16.mxu0 0
    %2820 = vmatpush2.bf16.msra.mxu0 0
    %2821 = vmatprep.subr.bf16.mxu0 0
    %2822 = vmatpush2.bf16.msra.mxu0 0
    %2823 = vmatprep.subr.bf16.mxu0 0
    %2824 = vmatpush2.bf16.msra.mxu0 0
    %2825 = vmatprep.mubr.bf16.mxu0 0
    %2826 = vmatmul.mubr.bf16.gmra.mxu0 %v2778
    %v2827 = vpop.f32.mrf.mxu0
    %v2828 = vadd.f32 0.0, %v2827
    %v2829 = vpop.f32.mrf.mxu0
    %v2830 = vadd.f32 0.0, %v2829
    %v2831 = vpop.f32.mrf.mxu0
    %v2832 = vpop.f32.mrf.mxu0
    %2833 = vdwg.mxu0
    %2834 = vmatprep.subr.bf16.mxu0 0
    %2835 = vmatpush1.bf16.msra.mxu0 0
    %2836 = vmatprep.subr.bf16.mxu0 0
    %2837 = vmatpush1.bf16.msra.mxu0 0
    %2838 = vmatprep.subr.bf16.mxu0 0
    %2839 = vmatpush1.bf16.msra.mxu0 0
    %2840 = vmatprep.subr.bf16.mxu0 0
    %2841 = vmatpush1.bf16.msra.mxu0 0
    %2842 = vmatprep.subr.bf16.mxu0 0
    %2843 = vmatpush1.bf16.msra.mxu0 0
    %2844 = vmatprep.subr.bf16.mxu0 0
    %2845 = vmatpush1.bf16.msra.mxu0 0
    %2846 = vmatprep.subr.bf16.mxu0 0
    %2847 = vmatpush1.bf16.msra.mxu0 0
    %2848 = vmatprep.subr.bf16.mxu0 %v2791
    %2849 = vmatpush1.bf16.msra.mxu0 %v2788
    %2850 = vmatprep.subr.bf16.mxu0 0
    %2851 = vmatpush2.bf16.msra.mxu0 0
    %2852 = vmatprep.subr.bf16.mxu0 0
    %2853 = vmatpush2.bf16.msra.mxu0 0
    %2854 = vmatprep.subr.bf16.mxu0 0
    %2855 = vmatpush2.bf16.msra.mxu0 0
    %2856 = vmatprep.subr.bf16.mxu0 0
    %2857 = vmatpush2.bf16.msra.mxu0 0
    %2858 = vmatprep.subr.bf16.mxu0 0
    %2859 = vmatpush2.bf16.msra.mxu0 0
    %2860 = vmatprep.subr.bf16.mxu0 0
    %2861 = vmatpush2.bf16.msra.mxu0 0
    %2862 = vmatprep.subr.bf16.mxu0 0
    %2863 = vmatpush2.bf16.msra.mxu0 0
    %2864 = vmatprep.subr.bf16.mxu0 0
    %2865 = vmatpush2.bf16.msra.mxu0 0
    %2866 = vmatprep.mubr.bf16.mxu0 0
    %2867 = vmatmul.mubr.bf16.gmra.mxu0 %v2778
    %v2868 = vpop.f32.mrf.mxu0
    %v2869 = vadd.f32 0.0, %v2868
    %v2870 = vpop.f32.mrf.mxu0
    %v2871 = vadd.f32 0.0, %v2870
    %v2872 = vpop.f32.mrf.mxu0
    %v2873 = vpop.f32.mrf.mxu0
    %2874 = vdwg.mxu0
    %v2875 = vlaneseq
    %v2876 = vshrl.u32 %v2875, 7
    %v2877 = vsub.s32 0, %v2876
    %v2878 = vrot.slane %v2828, %v2877
    %v2879 = vlaneseq
    %v2880 = vshrl.u32 %v2879, 7
    %v2881 = vsub.s32 0, %v2880
    %v2882 = vrot.slane %v2830, %v2881
    %v2883 = vlaneseq
    %v2884 = vshrl.u32 %v2883, 7
    %v2885 = vsub.s32 0, %v2884
    %v2886 = vrot.slane %v2869, %v2885
    %v2887 = vlaneseq
    %v2888 = vshrl.u32 %v2887, 7
    %v2889 = vsub.s32 0, %v2888
    %v2890 = vrot.slane %v2871, %v2889
    %v2891 = vmul.f32 %v2353, %v2878
    %v2892 = vmul.f32 %v2355, %v2882
    %v2893 = vmul.f32 %v2396, %v2886
    %v2894 = vmul.f32 %v2398, %v2890
    %v2895 = vmul.f32 %v2357, %v2878
    %v2896 = vmul.f32 %v2359, %v2882
    %v2897 = vmul.f32 %v2400, %v2886
    %v2898 = vmul.f32 %v2402, %v2890
    %v2899 = vlaneseq
    %v2900 = vshrl.u32 %v2899, 7
    %v2901 = vsub.s32 1, %v2900
    %v2902 = vrot.slane %v2828, %v2901
    %v2903 = vlaneseq
    %v2904 = vshrl.u32 %v2903, 7
    %v2905 = vsub.s32 1, %v2904
    %v2906 = vrot.slane %v2830, %v2905
    %v2907 = vlaneseq
    %v2908 = vshrl.u32 %v2907, 7
    %v2909 = vsub.s32 1, %v2908
    %v2910 = vrot.slane %v2869, %v2909
    %v2911 = vlaneseq
    %v2912 = vshrl.u32 %v2911, 7
    %v2913 = vsub.s32 1, %v2912
    %v2914 = vrot.slane %v2871, %v2913
    %v2915 = vadd.f32 %v2891, %v2902
    %v2916 = vadd.f32 %v2892, %v2906
    %v2917 = vadd.f32 %v2893, %v2910
    %v2918 = vadd.f32 %v2894, %v2914
    %v2919 = vadd.f32 %v2895, %v2902
    %v2920 = vadd.f32 %v2896, %v2906
    %v2921 = vadd.f32 %v2897, %v2910
    %v2922 = vadd.f32 %v2898, %v2914
    %vm2923 = vcmp.ge.f32.partialorder %v2915, 0.0
    %vm2924 = vcmp.ge.f32.partialorder %v2916, 0.0
    %vm2925 = vcmp.ge.f32.partialorder %v2917, 0.0
    %vm2926 = vcmp.ge.f32.partialorder %v2918, 0.0
    %vm2927 = vcmp.ge.f32.partialorder %v2919, 0.0
    %vm2928 = vcmp.ge.f32.partialorder %v2920, 0.0
    %vm2929 = vcmp.ge.f32.partialorder %v2921, 0.0
    %vm2930 = vcmp.ge.f32.partialorder %v2922, 0.0
    %v2931 = vmul.f32 %v2915, 0.2
    %v2932 = vmul.f32 %v2916, 0.2
    %v2933 = vmul.f32 %v2917, 0.2
    %v2934 = vmul.f32 %v2918, 0.2
    %v2935 = vmul.f32 %v2919, 0.2
    %v2936 = vmul.f32 %v2920, 0.2
    %v2937 = vmul.f32 %v2921, 0.2
    %v2938 = vmul.f32 %v2922, 0.2
    %v2939 = vsel %vm2923, %v2915, %v2931
    %v2940 = vsel %vm2924, %v2916, %v2932
    %v2941 = vsel %vm2925, %v2917, %v2933
    %v2942 = vsel %vm2926, %v2918, %v2934
    %v2943 = vsel %vm2927, %v2919, %v2935
    %v2944 = vsel %vm2928, %v2920, %v2936
    %v2945 = vsel %vm2929, %v2921, %v2937
    %v2946 = vsel %vm2930, %v2922, %v2938
    %s2947 = smul.u32 4, 64
    %s2948 = smul.u32 %s2947, 2
    %s2949 = sshll.u32 %s2948, 4
    %2950 = dma.done %s118, %s2949
    %v2951 = vpack.c.bf16 %v2943, %v2939
    %v2952 = vpack.c.bf16 %v2944, %v2940
    %v2953 = vpack.c.bf16 %v2945, %v2941
    %v2954 = vpack.c.bf16 %v2946, %v2942
    %v2955 = vld [vmem:[#allocation3] sm:$0xff]
    %v2956 = vld [vmem:[#allocation3 + $0x8] sm:$0xff]
    %v2957 = vld [vmem:[#allocation3 + $0x10] sm:$0xff]
    %v2958 = vld [vmem:[#allocation3 + $0x18] sm:$0xff]
    %v2959 = vld [vmem:[#allocation3 + $0x20] sm:$0xff]
    %v2960 = vld [vmem:[#allocation3 + $0x28] sm:$0xff]
    %v2961 = vld [vmem:[#allocation3 + $0x30] sm:$0xff]
    %v2962 = vld [vmem:[#allocation3 + $0x38] sm:$0xff]
    %v2963 = vld [vmem:[#allocation3 + $0x40] sm:$0xff]
    %v2964 = vld [vmem:[#allocation3 + $0x48] sm:$0xff]
    %v2965 = vld [vmem:[#allocation3 + $0x50] sm:$0xff]
    %v2966 = vld [vmem:[#allocation3 + $0x58] sm:$0xff]
    %v2967 = vld [vmem:[#allocation3 + $0x60] sm:$0xff]
    %v2968 = vld [vmem:[#allocation3 + $0x68] sm:$0xff]
    %v2969 = vld [vmem:[#allocation3 + $0x70] sm:$0xff]
    %v2970 = vld [vmem:[#allocation3 + $0x78] sm:$0xff]
    %v2971 = vld [vmem:[#allocation3 + $0x80] sm:$0xff]
    %v2972 = vld [vmem:[#allocation3 + $0x88] sm:$0xff]
    %v2973 = vld [vmem:[#allocation3 + $0x90] sm:$0xff]
    %v2974 = vld [vmem:[#allocation3 + $0x98] sm:$0xff]
    %v2975 = vld [vmem:[#allocation3 + $0xa0] sm:$0xff]
    %v2976 = vld [vmem:[#allocation3 + $0xa8] sm:$0xff]
    %v2977 = vld [vmem:[#allocation3 + $0xb0] sm:$0xff]
    %v2978 = vld [vmem:[#allocation3 + $0xb8] sm:$0xff]
    %v2979 = vld [vmem:[#allocation3 + $0xc0] sm:$0xff]
    %v2980 = vld [vmem:[#allocation3 + $0xc8] sm:$0xff]
    %v2981 = vld [vmem:[#allocation3 + $0xd0] sm:$0xff]
    %v2982 = vld [vmem:[#allocation3 + $0xd8] sm:$0xff]
    %v2983 = vld [vmem:[#allocation3 + $0xe0] sm:$0xff]
    %v2984 = vld [vmem:[#allocation3 + $0xe8] sm:$0xff]
    %v2985 = vld [vmem:[#allocation3 + $0xf0] sm:$0xff]
    %v2986 = vld [vmem:[#allocation3 + $0xf8] sm:$0xff]
    %v2987 = vld [vmem:[#allocation3 + $0x100] sm:$0xff]
    %v2988 = vld [vmem:[#allocation3 + $0x108] sm:$0xff]
    %v2989 = vld [vmem:[#allocation3 + $0x110] sm:$0xff]
    %v2990 = vld [vmem:[#allocation3 + $0x118] sm:$0xff]
    %v2991 = vld [vmem:[#allocation3 + $0x120] sm:$0xff]
    %v2992 = vld [vmem:[#allocation3 + $0x128] sm:$0xff]
    %v2993 = vld [vmem:[#allocation3 + $0x130] sm:$0xff]
    %v2994 = vld [vmem:[#allocation3 + $0x138] sm:$0xff]
    %v2995 = vld [vmem:[#allocation3 + $0x140] sm:$0xff]
    %v2996 = vld [vmem:[#allocation3 + $0x148] sm:$0xff]
    %v2997 = vld [vmem:[#allocation3 + $0x150] sm:$0xff]
    %v2998 = vld [vmem:[#allocation3 + $0x158] sm:$0xff]
    %v2999 = vld [vmem:[#allocation3 + $0x160] sm:$0xff]
    %v3000 = vld [vmem:[#allocation3 + $0x168] sm:$0xff]
    %v3001 = vld [vmem:[#allocation3 + $0x170] sm:$0xff]
    %v3002 = vld [vmem:[#allocation3 + $0x178] sm:$0xff]
    %v3003 = vld [vmem:[#allocation3 + $0x180] sm:$0xff]
    %v3004 = vld [vmem:[#allocation3 + $0x188] sm:$0xff]
    %v3005 = vld [vmem:[#allocation3 + $0x190] sm:$0xff]
    %v3006 = vld [vmem:[#allocation3 + $0x198] sm:$0xff]
    %v3007 = vld [vmem:[#allocation3 + $0x1a0] sm:$0xff]
    %v3008 = vld [vmem:[#allocation3 + $0x1a8] sm:$0xff]
    %v3009 = vld [vmem:[#allocation3 + $0x1b0] sm:$0xff]
    %v3010 = vld [vmem:[#allocation3 + $0x1b8] sm:$0xff]
    %v3011 = vld [vmem:[#allocation3 + $0x1c0] sm:$0xff]
    %v3012 = vld [vmem:[#allocation3 + $0x1c8] sm:$0xff]
    %v3013 = vld [vmem:[#allocation3 + $0x1d0] sm:$0xff]
    %v3014 = vld [vmem:[#allocation3 + $0x1d8] sm:$0xff]
    %v3015 = vld [vmem:[#allocation3 + $0x1e0] sm:$0xff]
    %v3016 = vld [vmem:[#allocation3 + $0x1e8] sm:$0xff]
    %v3017 = vld [vmem:[#allocation3 + $0x1f0] sm:$0xff]
    %v3018 = vld [vmem:[#allocation3 + $0x1f8] sm:$0xff]
    %v3083 = vunpack.c.l.b16 %v2955
    %v3084 = vunpack.c.h.b16 %v2955
    %v3085 = vunpack.c.l.b16 %v2956
    %v3086 = vunpack.c.h.b16 %v2956
    %v3087 = vunpack.c.l.b16 %v2957
    %v3088 = vunpack.c.h.b16 %v2957
    %v3089 = vunpack.c.l.b16 %v2958
    %v3090 = vunpack.c.h.b16 %v2958
    %v3091 = vunpack.c.l.b16 %v2959
    %v3092 = vunpack.c.h.b16 %v2959
    %v3093 = vunpack.c.l.b16 %v2960
    %v3094 = vunpack.c.h.b16 %v2960
    %v3095 = vunpack.c.l.b16 %v2961
    %v3096 = vunpack.c.h.b16 %v2961
    %v3097 = vunpack.c.l.b16 %v2962
    %v3098 = vunpack.c.h.b16 %v2962
    %v3099 = vunpack.c.l.b16 %v2963
    %v3100 = vunpack.c.h.b16 %v2963
    %v3101 = vunpack.c.l.b16 %v2964
    %v3102 = vunpack.c.h.b16 %v2964
    %v3103 = vunpack.c.l.b16 %v2965
    %v3104 = vunpack.c.h.b16 %v2965
    %v3105 = vunpack.c.l.b16 %v2966
    %v3106 = vunpack.c.h.b16 %v2966
    %v3107 = vunpack.c.l.b16 %v2967
    %v3108 = vunpack.c.h.b16 %v2967
    %v3109 = vunpack.c.l.b16 %v2968
    %v3110 = vunpack.c.h.b16 %v2968
    %v3111 = vunpack.c.l.b16 %v2969
    %v3112 = vunpack.c.h.b16 %v2969
    %v3113 = vunpack.c.l.b16 %v2970
    %v3114 = vunpack.c.h.b16 %v2970
    %v3115 = vunpack.c.l.b16 %v2971
    %v3116 = vunpack.c.h.b16 %v2971
    %v3117 = vunpack.c.l.b16 %v2972
    %v3118 = vunpack.c.h.b16 %v2972
    %v3119 = vunpack.c.l.b16 %v2973
    %v3120 = vunpack.c.h.b16 %v2973
    %v3121 = vunpack.c.l.b16 %v2974
    %v3122 = vunpack.c.h.b16 %v2974
    %v3123 = vunpack.c.l.b16 %v2975
    %v3124 = vunpack.c.h.b16 %v2975
    %v3125 = vunpack.c.l.b16 %v2976
    %v3126 = vunpack.c.h.b16 %v2976
    %v3127 = vunpack.c.l.b16 %v2977
    %v3128 = vunpack.c.h.b16 %v2977
    %v3129 = vunpack.c.l.b16 %v2978
    %v3130 = vunpack.c.h.b16 %v2978
    %v3131 = vunpack.c.l.b16 %v2979
    %v3132 = vunpack.c.h.b16 %v2979
    %v3133 = vunpack.c.l.b16 %v2980
    %v3134 = vunpack.c.h.b16 %v2980
    %v3135 = vunpack.c.l.b16 %v2981
    %v3136 = vunpack.c.h.b16 %v2981
    %v3137 = vunpack.c.l.b16 %v2982
    %v3138 = vunpack.c.h.b16 %v2982
    %v3139 = vunpack.c.l.b16 %v2983
    %v3140 = vunpack.c.h.b16 %v2983
    %v3141 = vunpack.c.l.b16 %v2984
    %v3142 = vunpack.c.h.b16 %v2984
    %v3143 = vunpack.c.l.b16 %v2985
    %v3144 = vunpack.c.h.b16 %v2985
    %v3145 = vunpack.c.l.b16 %v2986
    %v3146 = vunpack.c.h.b16 %v2986
    %v3147 = vunpack.c.l.b16 %v2987
    %v3148 = vunpack.c.h.b16 %v2987
    %v3149 = vunpack.c.l.b16 %v2988
    %v3150 = vunpack.c.h.b16 %v2988
    %v3151 = vunpack.c.l.b16 %v2989
    %v3152 = vunpack.c.h.b16 %v2989
    %v3153 = vunpack.c.l.b16 %v2990
    %v3154 = vunpack.c.h.b16 %v2990
    %v3155 = vunpack.c.l.b16 %v2991
    %v3156 = vunpack.c.h.b16 %v2991
    %v3157 = vunpack.c.l.b16 %v2992
    %v3158 = vunpack.c.h.b16 %v2992
    %v3159 = vunpack.c.l.b16 %v2993
    %v3160 = vunpack.c.h.b16 %v2993
    %v3161 = vunpack.c.l.b16 %v2994
    %v3162 = vunpack.c.h.b16 %v2994
    %v3163 = vunpack.c.l.b16 %v2995
    %v3164 = vunpack.c.h.b16 %v2995
    %v3165 = vunpack.c.l.b16 %v2996
    %v3166 = vunpack.c.h.b16 %v2996
    %v3167 = vunpack.c.l.b16 %v2997
    %v3168 = vunpack.c.h.b16 %v2997
    %v3169 = vunpack.c.l.b16 %v2998
    %v3170 = vunpack.c.h.b16 %v2998
    %v3171 = vunpack.c.l.b16 %v2999
    %v3172 = vunpack.c.h.b16 %v2999
    %v3173 = vunpack.c.l.b16 %v3000
    %v3174 = vunpack.c.h.b16 %v3000
    %v3175 = vunpack.c.l.b16 %v3001
    %v3176 = vunpack.c.h.b16 %v3001
    %v3177 = vunpack.c.l.b16 %v3002
    %v3178 = vunpack.c.h.b16 %v3002
    %v3179 = vunpack.c.l.b16 %v3003
    %v3180 = vunpack.c.h.b16 %v3003
    %v3181 = vunpack.c.l.b16 %v3004
    %v3182 = vunpack.c.h.b16 %v3004
    %v3183 = vunpack.c.l.b16 %v3005
    %v3184 = vunpack.c.h.b16 %v3005
    %v3185 = vunpack.c.l.b16 %v3006
    %v3186 = vunpack.c.h.b16 %v3006
    %v3187 = vunpack.c.l.b16 %v3007
    %v3188 = vunpack.c.h.b16 %v3007
    %v3189 = vunpack.c.l.b16 %v3008
    %v3190 = vunpack.c.h.b16 %v3008
    %v3191 = vunpack.c.l.b16 %v3009
    %v3192 = vunpack.c.h.b16 %v3009
    %v3193 = vunpack.c.l.b16 %v3010
    %v3194 = vunpack.c.h.b16 %v3010
    %v3195 = vunpack.c.l.b16 %v3011
    %v3196 = vunpack.c.h.b16 %v3011
    %v3197 = vunpack.c.l.b16 %v3012
    %v3198 = vunpack.c.h.b16 %v3012
    %v3199 = vunpack.c.l.b16 %v3013
    %v3200 = vunpack.c.h.b16 %v3013
    %v3201 = vunpack.c.l.b16 %v3014
    %v3202 = vunpack.c.h.b16 %v3014
    %v3203 = vunpack.c.l.b16 %v3015
    %v3204 = vunpack.c.h.b16 %v3015
    %v3205 = vunpack.c.l.b16 %v3016
    %v3206 = vunpack.c.h.b16 %v3016
    %v3207 = vunpack.c.l.b16 %v3017
    %v3208 = vunpack.c.h.b16 %v3017
    %v3209 = vunpack.c.l.b16 %v3018
    %v3210 = vunpack.c.h.b16 %v3018
    %v3211 = vpack.c.b16 %v3085, %v3083
    %v3212 = vpack.c.b16 %v3086, %v3084
    %v3213 = vpack.c.b16 %v3089, %v3087
    %v3214 = vpack.c.b16 %v3090, %v3088
    %v3215 = vpack.c.b16 %v3093, %v3091
    %v3216 = vpack.c.b16 %v3094, %v3092
    %v3217 = vpack.c.b16 %v3097, %v3095
    %v3218 = vpack.c.b16 %v3098, %v3096
    %v3219 = vpack.c.b16 %v3101, %v3099
    %v3220 = vpack.c.b16 %v3102, %v3100
    %v3221 = vpack.c.b16 %v3105, %v3103
    %v3222 = vpack.c.b16 %v3106, %v3104
    %v3223 = vpack.c.b16 %v3109, %v3107
    %v3224 = vpack.c.b16 %v3110, %v3108
    %v3225 = vpack.c.b16 %v3113, %v3111
    %v3226 = vpack.c.b16 %v3114, %v3112
    %v3227 = vpack.c.b16 %v3117, %v3115
    %v3228 = vpack.c.b16 %v3118, %v3116
    %v3229 = vpack.c.b16 %v3121, %v3119
    %v3230 = vpack.c.b16 %v3122, %v3120
    %v3231 = vpack.c.b16 %v3125, %v3123
    %v3232 = vpack.c.b16 %v3126, %v3124
    %v3233 = vpack.c.b16 %v3129, %v3127
    %v3234 = vpack.c.b16 %v3130, %v3128
    %v3235 = vpack.c.b16 %v3133, %v3131
    %v3236 = vpack.c.b16 %v3134, %v3132
    %v3237 = vpack.c.b16 %v3137, %v3135
    %v3238 = vpack.c.b16 %v3138, %v3136
    %v3239 = vpack.c.b16 %v3141, %v3139
    %v3240 = vpack.c.b16 %v3142, %v3140
    %v3241 = vpack.c.b16 %v3145, %v3143
    %v3242 = vpack.c.b16 %v3146, %v3144
    %v3243 = vpack.c.b16 %v3149, %v3147
    %v3244 = vpack.c.b16 %v3150, %v3148
    %v3245 = vpack.c.b16 %v3153, %v3151
    %v3246 = vpack.c.b16 %v3154, %v3152
    %v3247 = vpack.c.b16 %v3157, %v3155
    %v3248 = vpack.c.b16 %v3158, %v3156
    %v3249 = vpack.c.b16 %v3161, %v3159
    %v3250 = vpack.c.b16 %v3162, %v3160
    %v3251 = vpack.c.b16 %v3165, %v3163
    %v3252 = vpack.c.b16 %v3166, %v3164
    %v3253 = vpack.c.b16 %v3169, %v3167
    %v3254 = vpack.c.b16 %v3170, %v3168
    %v3255 = vpack.c.b16 %v3173, %v3171
    %v3256 = vpack.c.b16 %v3174, %v3172
    %v3257 = vpack.c.b16 %v3177, %v3175
    %v3258 = vpack.c.b16 %v3178, %v3176
    %v3259 = vpack.c.b16 %v3181, %v3179
    %v3260 = vpack.c.b16 %v3182, %v3180
    %v3261 = vpack.c.b16 %v3185, %v3183
    %v3262 = vpack.c.b16 %v3186, %v3184
    %v3263 = vpack.c.b16 %v3189, %v3187
    %v3264 = vpack.c.b16 %v3190, %v3188
    %v3265 = vpack.c.b16 %v3193, %v3191
    %v3266 = vpack.c.b16 %v3194, %v3192
    %v3267 = vpack.c.b16 %v3197, %v3195
    %v3268 = vpack.c.b16 %v3198, %v3196
    %v3269 = vpack.c.b16 %v3201, %v3199
    %v3270 = vpack.c.b16 %v3202, %v3200
    %v3271 = vpack.c.b16 %v3205, %v3203
    %v3272 = vpack.c.b16 %v3206, %v3204
    %v3273 = vpack.c.b16 %v3209, %v3207
    %v3274 = vpack.c.b16 %v3210, %v3208
    %3339 = vmatprep.subr.bf16.mxu0 %v3226
    %3340 = vmatpush1.bf16.msra.mxu0 %v3225
    %3341 = vmatprep.subr.bf16.mxu0 %v3224
    %3342 = vmatpush1.bf16.msra.mxu0 %v3223
    %3343 = vmatprep.subr.bf16.mxu0 %v3222
    %3344 = vmatpush1.bf16.msra.mxu0 %v3221
    %3345 = vmatprep.subr.bf16.mxu0 %v3220
    %3346 = vmatpush1.bf16.msra.mxu0 %v3219
    %3347 = vmatprep.subr.bf16.mxu0 %v3218
    %3348 = vmatpush1.bf16.msra.mxu0 %v3217
    %3349 = vmatprep.subr.bf16.mxu0 %v3216
    %3350 = vmatpush1.bf16.msra.mxu0 %v3215
    %3351 = vmatprep.subr.bf16.mxu0 %v3214
    %3352 = vmatpush1.bf16.msra.mxu0 %v3213
    %3353 = vmatprep.subr.bf16.mxu0 %v3212
    %3354 = vmatpush1.bf16.msra.mxu0 %v3211
    %3355 = vmatprep.subr.bf16.mxu0 %v3242
    %3356 = vmatpush2.bf16.msra.mxu0 %v3241
    %3357 = vmatprep.subr.bf16.mxu0 %v3240
    %3358 = vmatpush2.bf16.msra.mxu0 %v3239
    %3359 = vmatprep.subr.bf16.mxu0 %v3238
    %3360 = vmatpush2.bf16.msra.mxu0 %v3237
    %3361 = vmatprep.subr.bf16.mxu0 %v3236
    %3362 = vmatpush2.bf16.msra.mxu0 %v3235
    %3363 = vmatprep.subr.bf16.mxu0 %v3234
    %3364 = vmatpush2.bf16.msra.mxu0 %v3233
    %3365 = vmatprep.subr.bf16.mxu0 %v3232
    %3366 = vmatpush2.bf16.msra.mxu0 %v3231
    %3367 = vmatprep.subr.bf16.mxu0 %v3230
    %3368 = vmatpush2.bf16.msra.mxu0 %v3229
    %3369 = vmatprep.subr.bf16.mxu0 %v3228
    %3370 = vmatpush2.bf16.msra.mxu0 %v3227
    %3371 = vmatprep.mubr.bf16.mxu0 %v2952
    %3372 = vmatmul.mubr.bf16.gmra.mxu0 %v2951
    %v3373 = vpop.f32.mrf.mxu0
    %v3374 = vadd.f32 0.0, %v3373
    %v3375 = vpop.f32.mrf.mxu0
    %v3376 = vadd.f32 0.0, %v3375
    %v3377 = vpop.f32.mrf.mxu0
    %v3378 = vadd.f32 0.0, %v3377
    %v3379 = vpop.f32.mrf.mxu0
    %v3380 = vadd.f32 0.0, %v3379
    %3381 = vdwg.mxu0
    %3382 = vmatprep.subr.bf16.mxu0 %v3258
    %3383 = vmatpush1.bf16.msra.mxu0 %v3257
    %3384 = vmatprep.subr.bf16.mxu0 %v3256
    %3385 = vmatpush1.bf16.msra.mxu0 %v3255
    %3386 = vmatprep.subr.bf16.mxu0 %v3254
    %3387 = vmatpush1.bf16.msra.mxu0 %v3253
    %3388 = vmatprep.subr.bf16.mxu0 %v3252
    %3389 = vmatpush1.bf16.msra.mxu0 %v3251
    %3390 = vmatprep.subr.bf16.mxu0 %v3250
    %3391 = vmatpush1.bf16.msra.mxu0 %v3249
    %3392 = vmatprep.subr.bf16.mxu0 %v3248
    %3393 = vmatpush1.bf16.msra.mxu0 %v3247
    %3394 = vmatprep.subr.bf16.mxu0 %v3246
    %3395 = vmatpush1.bf16.msra.mxu0 %v3245
    %3396 = vmatprep.subr.bf16.mxu0 %v3244
    %3397 = vmatpush1.bf16.msra.mxu0 %v3243
    %3398 = vmatprep.subr.bf16.mxu0 %v3274
    %3399 = vmatpush2.bf16.msra.mxu0 %v3273
    %3400 = vmatprep.subr.bf16.mxu0 %v3272
    %3401 = vmatpush2.bf16.msra.mxu0 %v3271
    %3402 = vmatprep.subr.bf16.mxu0 %v3270
    %3403 = vmatpush2.bf16.msra.mxu0 %v3269
    %3404 = vmatprep.subr.bf16.mxu0 %v3268
    %3405 = vmatpush2.bf16.msra.mxu0 %v3267
    %3406 = vmatprep.subr.bf16.mxu0 %v3266
    %3407 = vmatpush2.bf16.msra.mxu0 %v3265
    %3408 = vmatprep.subr.bf16.mxu0 %v3264
    %3409 = vmatpush2.bf16.msra.mxu0 %v3263
    %3410 = vmatprep.subr.bf16.mxu0 %v3262
    %3411 = vmatpush2.bf16.msra.mxu0 %v3261
    %3412 = vmatprep.subr.bf16.mxu0 %v3260
    %3413 = vmatpush2.bf16.msra.mxu0 %v3259
    %3414 = vmatprep.mubr.bf16.mxu0 %v2954
    %3415 = vmatmul.mubr.bf16.gmra.mxu0 %v2953
    %v3416 = vpop.f32.mrf.mxu0
    %v3417 = vadd.f32 %v3374, %v3416
    %v3418 = vpop.f32.mrf.mxu0
    %v3419 = vadd.f32 %v3376, %v3418
    %v3420 = vpop.f32.mrf.mxu0
    %v3421 = vadd.f32 %v3378, %v3420
    %v3422 = vpop.f32.mrf.mxu0
    %v3423 = vadd.f32 %v3380, %v3422
    %3424 = vdwg.mxu0
    %v3425 = vtanh.pop %v3417
    %v3426 = vtanh.pop %v3419
    %v3427 = vtanh.pop %v3421
    %v3428 = vtanh.pop %v3423
    %3429 = vst [vmem:[%s13] sm:$0xff] %v3425
    %3430 = vst [vmem:[%s13 + $0x8] sm:$0xff] %v3426
    %3431 = vst [vmem:[%s13 + $0x10] sm:$0xff] %v3427
    %3432 = vst [vmem:[%s13 + $0x18] sm:$0xff] %v3428
    // Predicated region
    $region74: #{netg_forward.1} parent=1 // pred_check
      _
    $region75: #{netg_forward.1} parent=1 // pred_check_branch
      %3434 = sbr.rel (0) target = $region77
    $region76: #{netg_forward.1} parent=1 // pred_region
      _
    $region77: #{netg_forward.1} parent=1 // pred_fallthru
      _
    // Predicated region
    $region78: #{netg_forward.1} parent=1 // pred_check
      _
    $region79: #{netg_forward.1} parent=1 // pred_check_branch
      %3436 = sbr.rel (0) target = $region81
    $region80: #{netg_forward.1} parent=1 // pred_region
      _
    $region81: #{netg_forward.1} parent=1 // pred_fallthru
      _
    // Predicated region
    $region82: #{netg_forward.1} parent=1 // pred_check
      _
    $region83: #{netg_forward.1} parent=1 // pred_check_branch
      %3438 = sbr.rel (0) target = $region85
    $region84: #{netg_forward.1} parent=1 // pred_region
      _
    $region85: #{netg_forward.1} parent=1 // pred_fallthru
      _
    // Predicated region
    $region86: #{netg_forward.1} parent=1 // pred_check
      _
    $region87: #{netg_forward.1} parent=1 // pred_check_branch
      %3440 = sbr.rel (0) target = $region89
    $region88: #{netg_forward.1} parent=1 // pred_region
      _
    $region89: #{netg_forward.1} parent=1 // pred_fallthru
      _
    %3441 = vsyncpa [#allocation6], 1
    %3442 = vsyncpa [#allocation8], 1
    %3443 = vsyncpa [#allocation11], 1
  %3444 = vsyncmov [#allocation4]
  %s3445 = vpop.sfrf %3444
  %p3446 = scmp.eq.s32.totalorder %s3445, 0
  %p3447 = pneg %p3446
  %3449 = shalt.err (%p3447)
  %s3450 = scalar_lea.sflag [#allocation4], 1
  %3451 = vsyncmov %s3450
  %s3452 = vpop.sfrf %3451
  %p3453 = scmp.eq.s32.totalorder %s3452, 0
  %p3454 = pneg %p3453
  %3456 = shalt.err (%p3454)

</llo_original>
